<compile_context>
chip_gen: v7x
topology: tpu7x:2x2x1
jax: 0.10.0
libtpu: 0.0.40
codegen_flags: <defaults>
</compile_context>

<pallas_src>
import jax
import jax.numpy as jnp
from jax.experimental import pallas as pl
from jax.experimental.pallas import tpu as pltpu


def _basic_block_kernel(x_ref, s1_ref, t1_ref, w1_ref,
                        s2_ref, t2_ref, w2_ref, b2_ref, out_ref):
    _, H, W, Cin = x_ref.shape
    Cout = w2_ref.shape[2]
    cdt = w1_ref.dtype                      # matmul operand dtype (bf16 default)

    def conv3x3(a, w_ref, acc):
        """3x3 / pad=1 conv as 3 accumulating matmuls (one per kernel row).

        a:     (H, W, C) activation, already in the compute dtype.
        w_ref: (3, 3*C, Cout) weights; row order inside each slice is (kw, cin).
        acc:   (H*W, Cout) f32 accumulator initial value (bias/residual folded in).
        """
        Hh, Ww, C = a.shape
        zc = jnp.zeros((Hh, 1, C), a.dtype)
        zr = jnp.zeros((1, Ww + 2, C), a.dtype)
        ap = jnp.concatenate([zc, a, zc], axis=1)        # (H,   W+2, C)
        ap = jnp.concatenate([zr, ap, zr], axis=0)       # (H+2, W+2, C)
        for ki in range(3):
            rows = ap[ki:ki + Hh]                        # (H, W+2, C)
            strip = jnp.concatenate(
                [rows[:, 0:Ww], rows[:, 1:Ww + 1], rows[:, 2:Ww + 2]],
                axis=-1)                                 # (H, W, 3*C)
            acc = acc + jnp.dot(strip.reshape(Hh * Ww, 3 * C), w_ref[ki],
                                preferred_element_type=jnp.float32)
        return acc

    # Stage 1: BN1 + ReLU in f32, cast to compute dtype BEFORE patch assembly.
    x = x_ref[0]                                                   # (H, W, Cin) f32
    a1 = jnp.maximum(x * s1_ref[...] + t1_ref[...], 0.0).astype(cdt)

    # Stage 2: conv1 (bias folded into BN2 shift) then BN2 + ReLU.
    y1 = conv3x3(a1, w1_ref, jnp.zeros((H * W, Cout), jnp.float32))
    a2 = jnp.maximum(y1 * s2_ref[...] + t2_ref[...], 0.0)
    a2 = a2.astype(cdt).reshape(H, W, Cout)

    # Stage 3: conv2 with the residual + conv2 bias folded into the accumulator
    # init (x re-read from the ref here, so it is not held live across conv1).
    acc0 = x_ref[0].reshape(H * W, Cout) + b2_ref[...]
    y2 = conv3x3(a2, w2_ref, acc0)

    out_ref[0] = y2.astype(out_ref.dtype)


def basic_block_forward(x_nchw, params, *, compute_dtype=jnp.bfloat16):
    """Fused BasicBlock forward. x_nchw: (N, C, H, W) f32, PyTorch layout."""
    eps = 1e-5
    x = jnp.transpose(x_nchw, (0, 2, 3, 1)).astype(jnp.float32)   # NCHW -> NHWC
    N, H, W, Cin = x.shape

    # Fold inference-mode BN into per-channel scale/shift; fold conv1's bias
    # into the BN2 shift (t2' = t2 + s2 * b1).
    s1 = params["g1"] / jnp.sqrt(params["v1"] + eps)
    t1 = params["be1"] - params["m1"] * s1
    s2 = params["g2"] / jnp.sqrt(params["v2"] + eps)
    t2 = params["be2"] - params["m2"] * s2 + s2 * params["b1"]

    # Conv weights: PyTorch OIHW -> HWIO -> (3, 3*Cin, Cout); per-slice row
    # order (kw, cin) matches the kernel's per-ki strip column order.
    w1 = jnp.transpose(params["w1"], (2, 3, 1, 0))
    w2 = jnp.transpose(params["w2"], (2, 3, 1, 0))
    Cout = w1.shape[3]
    assert Cout == Cin, "downsample=None requires inplanes == planes"
    w1r = w1.reshape(3, 3 * Cin, Cout).astype(compute_dtype)
    w2r = w2.reshape(3, 3 * Cout, Cout).astype(compute_dtype)

    # Explicit VMEM budget: 3/4 of physical VMEM, capped at 100 MiB
    # (~96 MiB on v5e/v6e, ~48 MiB on v7x).
    try:
        vmem_cap = pltpu.get_tpu_info().vmem_capacity_bytes
        vmem_limit = int(min(vmem_cap * 3 // 4, 100 * 1024 * 1024))
    except Exception:
        vmem_limit = 48 * 1024 * 1024

    chan3 = lambda v: v.reshape(1, 1, -1).astype(jnp.float32)
    row = lambda v: v.reshape(1, -1).astype(jnp.float32)

    out = pl.pallas_call(
        _basic_block_kernel,
        out_shape=jax.ShapeDtypeStruct((N, H * W, Cout), jnp.float32),
        grid=(N,),
        in_specs=[
            pl.BlockSpec((1, H, W, Cin), lambda n: (n, 0, 0, 0)),       # x
            pl.BlockSpec((1, 1, Cin), lambda n: (0, 0, 0)),             # bn1 scale
            pl.BlockSpec((1, 1, Cin), lambda n: (0, 0, 0)),             # bn1 shift
            pl.BlockSpec((3, 3 * Cin, Cout), lambda n: (0, 0, 0)),      # conv1 w
            pl.BlockSpec((1, Cout), lambda n: (0, 0)),                  # bn2 scale
            pl.BlockSpec((1, Cout), lambda n: (0, 0)),                  # bn2 shift (+b1)
            pl.BlockSpec((3, 3 * Cout, Cout), lambda n: (0, 0, 0)),     # conv2 w
            pl.BlockSpec((1, Cout), lambda n: (0, 0)),                  # conv2 b
        ],
        out_specs=pl.BlockSpec((1, H * W, Cout), lambda n: (n, 0, 0)),
        compiler_params=pltpu.CompilerParams(
            dimension_semantics=("parallel",),
            vmem_limit_bytes=vmem_limit),
    )(x, chan3(s1), chan3(t1), w1r, row(s2), row(t2), w2r, row(params["b2"]))

    out = out.reshape(N, H, W, Cout)
    return jnp.transpose(out, (0, 3, 1, 2))                            # back to NCHW


def basic_block_reference(x, p):
    """Pure-JAX NCHW reference mirroring the PyTorch forward (eval-mode BN)."""
    eps = 1e-5

    def bn(v, g, b, m, var):
        return ((v - m[None, :, None, None])
                / jnp.sqrt(var[None, :, None, None] + eps)
                * g[None, :, None, None] + b[None, :, None, None])

    def conv(v, w, b):
        y = jax.lax.conv_general_dilated(
            v, w, window_strides=(1, 1), padding=((1, 1), (1, 1)),
            dimension_numbers=("NCHW", "OIHW", "NCHW"))
        return y + b[None, :, None, None]

    out = jax.nn.relu(bn(x, p["g1"], p["be1"], p["m1"], p["v1"]))
    out = conv(out, p["w1"], p["b1"])
    out = jax.nn.relu(bn(out, p["g2"], p["be2"], p["m2"], p["v2"]))
    out = conv(out, p["w2"], p["b2"])
    return out + x


if __name__ == "__main__":
    # NOTE: smoke-test shape only; tuning conclusions should be drawn from real
    # ResNet stage shapes (C=64..512, spatial 56..7, batch >= 8).
    key = jax.random.PRNGKey(0)
    keys = jax.random.split(key, 13)
    N, C, H, W = 2, 4, 16, 16          # inplanes == planes == 4, stride = 1
    x = jax.random.normal(keys[0], (N, C, H, W), jnp.float32)

    params = {
        "g1": 1.0 + 0.1 * jax.random.normal(keys[1], (C,), jnp.float32),
        "be1": 0.1 * jax.random.normal(keys[2], (C,), jnp.float32),
        "m1": 0.1 * jax.random.normal(keys[3], (C,), jnp.float32),
        "v1": 0.5 + jnp.abs(jax.random.normal(keys[4], (C,), jnp.float32)),
        "w1": 0.2 * jax.random.normal(keys[5], (C, C, 3, 3), jnp.float32),
        "b1": 0.1 * jax.random.normal(keys[6], (C,), jnp.float32),
        "g2": 1.0 + 0.1 * jax.random.normal(keys[7], (C,), jnp.float32),
        "be2": 0.1 * jax.random.normal(keys[8], (C,), jnp.float32),
        "m2": 0.1 * jax.random.normal(keys[9], (C,), jnp.float32),
        "v2": 0.5 + jnp.abs(jax.random.normal(keys[10], (C,), jnp.float32)),
        "w2": 0.2 * jax.random.normal(keys[11], (C, C, 3, 3), jnp.float32),
        "b2": 0.1 * jax.random.normal(keys[12], (C,), jnp.float32),
    }

    ref = jax.block_until_ready(basic_block_reference(x, params))

    # Strict check of the algorithm with f32 matmul operands.
    out_f32 = jax.block_until_ready(
        basic_block_forward(x, params, compute_dtype=jnp.float32))
    assert out_f32.shape == x.shape and out_f32.dtype == jnp.float32
    err_f32 = float(jnp.max(jnp.abs(out_f32 - ref)))
    assert err_f32 < 2e-3, f"f32 mismatch vs reference: max abs err = {err_f32}"

    # Default (performance) path: bf16 matmul operands, f32 accumulation.
    out_bf16 = jax.block_until_ready(basic_block_forward(x, params))
    assert out_bf16.shape == x.shape and out_bf16.dtype == jnp.float32
    err_bf16 = float(jnp.max(jnp.abs(out_bf16 - ref)))
    assert err_bf16 < 0.15, f"bf16 mismatch vs reference: max abs err = {err_bf16}"

    print("KERNEL_OK")
</pallas_src>

<mosaic_0001>
module attributes {stable_mosaic.version = 11 : i64} {
  func.func @_basic_block_kernel(%arg0: i32, %arg1: memref<1x16x16x4xf32, #tpu.memory_space<vmem>>, %arg2: memref<1x1x4xf32, #tpu.memory_space<vmem>>, %arg3: memref<1x1x4xf32, #tpu.memory_space<vmem>>, %arg4: memref<3x12x4xf32, #tpu.memory_space<vmem>>, %arg5: memref<1x4xf32, #tpu.memory_space<vmem>>, %arg6: memref<1x4xf32, #tpu.memory_space<vmem>>, %arg7: memref<3x12x4xf32, #tpu.memory_space<vmem>>, %arg8: memref<1x4xf32, #tpu.memory_space<vmem>>, %arg9: memref<1x256x4xf32, #tpu.memory_space<vmem>>) attributes {dimension_semantics = [#tpu.dimension_semantics<parallel>], iteration_bounds = array<i64: 2>, scalar_prefetch = 0 : i64, scratch_operands = 0 : i64, tpu.core_type = #tpu.core_type<tc>, window_params = [{transform_indices = @transform_0, window_bounds = array<i64: 1, 16, 16, 4>}, {pipeline_mode = #tpu.pipeline_mode<synchronous>, transform_indices = @transform_1, window_bounds = array<i64: 1, 1, 4>}, {pipeline_mode = #tpu.pipeline_mode<synchronous>, transform_indices = @transform_2, window_bounds = array<i64: 1, 1, 4>}, {pipeline_mode = #tpu.pipeline_mode<synchronous>, transform_indices = @transform_3, window_bounds = array<i64: 3, 12, 4>}, {pipeline_mode = #tpu.pipeline_mode<synchronous>, transform_indices = @transform_4, window_bounds = array<i64: 1, 4>}, {pipeline_mode = #tpu.pipeline_mode<synchronous>, transform_indices = @transform_5, window_bounds = array<i64: 1, 4>}, {pipeline_mode = #tpu.pipeline_mode<synchronous>, transform_indices = @transform_6, window_bounds = array<i64: 3, 12, 4>}, {pipeline_mode = #tpu.pipeline_mode<synchronous>, transform_indices = @transform_7, window_bounds = array<i64: 1, 4>}, {transform_indices = @transform_8, window_bounds = array<i64: 1, 256, 4>}]} {
    %c0 = arith.constant 0 : index
    %c0_0 = arith.constant 0 : index
    %c0_1 = arith.constant 0 : index
    %c0_2 = arith.constant 0 : index
    %0 = vector.load %arg1[%c0, %c0_0, %c0_1, %c0_2] : memref<1x16x16x4xf32, #tpu.memory_space<vmem>>, vector<1x16x16x4xf32>
    %1 = vector.shape_cast %0 : vector<1x16x16x4xf32> to vector<16x16x4xf32>
    %c0_3 = arith.constant 0 : index
    %c0_4 = arith.constant 0 : index
    %c0_5 = arith.constant 0 : index
    %2 = vector.load %arg2[%c0_3, %c0_4, %c0_5] : memref<1x1x4xf32, #tpu.memory_space<vmem>>, vector<1x1x4xf32>
    %3 = vector.broadcast %2 : vector<1x1x4xf32> to vector<16x16x4xf32>
    %4 = arith.mulf %1, %3 : vector<16x16x4xf32>
    %c0_6 = arith.constant 0 : index
    %c0_7 = arith.constant 0 : index
    %c0_8 = arith.constant 0 : index
    %5 = vector.load %arg3[%c0_6, %c0_7, %c0_8] : memref<1x1x4xf32, #tpu.memory_space<vmem>>, vector<1x1x4xf32>
    %6 = vector.broadcast %5 : vector<1x1x4xf32> to vector<16x16x4xf32>
    %7 = arith.addf %4, %6 : vector<16x16x4xf32>
    %cst = arith.constant 0.000000e+00 : f32
    %8 = vector.broadcast %cst : f32 to vector<16x16x4xf32>
    %9 = arith.maximumf %7, %8 : vector<16x16x4xf32>
    %cst_9 = arith.constant 0.000000e+00 : f32
    %10 = vector.broadcast %cst_9 : f32 to vector<256x4xf32>
    %cst_10 = arith.constant 0.000000e+00 : f32
    %11 = vector.broadcast %cst_10 : f32 to vector<16x1x4xf32>
    %cst_11 = arith.constant 0.000000e+00 : f32
    %12 = vector.broadcast %cst_11 : f32 to vector<1x18x4xf32>
    %13 = tpu.concatenate %11, %9, %11 in 1 : vector<16x1x4xf32>, vector<16x16x4xf32>, vector<16x1x4xf32> -> vector<16x18x4xf32>
    %14 = tpu.concatenate %12, %13, %12 in 0 : vector<1x18x4xf32>, vector<16x18x4xf32>, vector<1x18x4xf32> -> vector<18x18x4xf32>
    %15 = vector.extract_strided_slice %14 {offsets = [0, 0, 0], sizes = [16, 18, 4], strides = [1, 1, 1]} : vector<18x18x4xf32> to vector<16x18x4xf32>
    %16 = vector.extract_strided_slice %15 {offsets = [0, 0, 0], sizes = [16, 16, 4], strides = [1, 1, 1]} : vector<16x18x4xf32> to vector<16x16x4xf32>
    %17 = vector.extract_strided_slice %15 {offsets = [0, 1, 0], sizes = [16, 16, 4], strides = [1, 1, 1]} : vector<16x18x4xf32> to vector<16x16x4xf32>
    %18 = vector.extract_strided_slice %15 {offsets = [0, 2, 0], sizes = [16, 16, 4], strides = [1, 1, 1]} : vector<16x18x4xf32> to vector<16x16x4xf32>
    %19 = tpu.concatenate %16, %17, %18 in 2 : vector<16x16x4xf32>, vector<16x16x4xf32>, vector<16x16x4xf32> -> vector<16x16x12xf32>
    %20 = vector.shape_cast %19 : vector<16x16x12xf32> to vector<256x12xf32>
    %c0_12 = arith.constant 0 : index
    %c0_13 = arith.constant 0 : index
    %c0_14 = arith.constant 0 : index
    %21 = vector.load %arg4[%c0_12, %c0_13, %c0_14] : memref<3x12x4xf32, #tpu.memory_space<vmem>>, vector<1x12x4xf32>
    %22 = vector.shape_cast %21 : vector<1x12x4xf32> to vector<12x4xf32>
    %cst_15 = arith.constant dense<0.000000e+00> : vector<256x4xf32>
    %23 = tpu.matmul %20, %22, %cst_15 {dimension_numbers = #tpu.dot_dimension_numbers<[1], [0], [0], [1], [0, 0, 1, 1], [], []>} : vector<256x12xf32>, vector<12x4xf32>, vector<256x4xf32> -> vector<256x4xf32>
    %24 = arith.addf %10, %23 : vector<256x4xf32>
    %25 = vector.extract_strided_slice %14 {offsets = [1, 0, 0], sizes = [16, 18, 4], strides = [1, 1, 1]} : vector<18x18x4xf32> to vector<16x18x4xf32>
    %26 = vector.extract_strided_slice %25 {offsets = [0, 0, 0], sizes = [16, 16, 4], strides = [1, 1, 1]} : vector<16x18x4xf32> to vector<16x16x4xf32>
    %27 = vector.extract_strided_slice %25 {offsets = [0, 1, 0], sizes = [16, 16, 4], strides = [1, 1, 1]} : vector<16x18x4xf32> to vector<16x16x4xf32>
    %28 = vector.extract_strided_slice %25 {offsets = [0, 2, 0], sizes = [16, 16, 4], strides = [1, 1, 1]} : vector<16x18x4xf32> to vector<16x16x4xf32>
    %29 = tpu.concatenate %26, %27, %28 in 2 : vector<16x16x4xf32>, vector<16x16x4xf32>, vector<16x16x4xf32> -> vector<16x16x12xf32>
    %30 = vector.shape_cast %29 : vector<16x16x12xf32> to vector<256x12xf32>
    %c1 = arith.constant 1 : index
    %c0_16 = arith.constant 0 : index
    %c0_17 = arith.constant 0 : index
    %31 = vector.load %arg4[%c1, %c0_16, %c0_17] : memref<3x12x4xf32, #tpu.memory_space<vmem>>, vector<1x12x4xf32>
    %32 = vector.shape_cast %31 : vector<1x12x4xf32> to vector<12x4xf32>
    %cst_18 = arith.constant dense<0.000000e+00> : vector<256x4xf32>
    %33 = tpu.matmul %30, %32, %cst_18 {dimension_numbers = #tpu.dot_dimension_numbers<[1], [0], [0], [1], [0, 0, 1, 1], [], []>} : vector<256x12xf32>, vector<12x4xf32>, vector<256x4xf32> -> vector<256x4xf32>
    %34 = arith.addf %24, %33 : vector<256x4xf32>
    %35 = vector.extract_strided_slice %14 {offsets = [2, 0, 0], sizes = [16, 18, 4], strides = [1, 1, 1]} : vector<18x18x4xf32> to vector<16x18x4xf32>
    %36 = vector.extract_strided_slice %35 {offsets = [0, 0, 0], sizes = [16, 16, 4], strides = [1, 1, 1]} : vector<16x18x4xf32> to vector<16x16x4xf32>
    %37 = vector.extract_strided_slice %35 {offsets = [0, 1, 0], sizes = [16, 16, 4], strides = [1, 1, 1]} : vector<16x18x4xf32> to vector<16x16x4xf32>
    %38 = vector.extract_strided_slice %35 {offsets = [0, 2, 0], sizes = [16, 16, 4], strides = [1, 1, 1]} : vector<16x18x4xf32> to vector<16x16x4xf32>
    %39 = tpu.concatenate %36, %37, %38 in 2 : vector<16x16x4xf32>, vector<16x16x4xf32>, vector<16x16x4xf32> -> vector<16x16x12xf32>
    %40 = vector.shape_cast %39 : vector<16x16x12xf32> to vector<256x12xf32>
    %c2 = arith.constant 2 : index
    %c0_19 = arith.constant 0 : index
    %c0_20 = arith.constant 0 : index
    %41 = vector.load %arg4[%c2, %c0_19, %c0_20] : memref<3x12x4xf32, #tpu.memory_space<vmem>>, vector<1x12x4xf32>
    %42 = vector.shape_cast %41 : vector<1x12x4xf32> to vector<12x4xf32>
    %cst_21 = arith.constant dense<0.000000e+00> : vector<256x4xf32>
    %43 = tpu.matmul %40, %42, %cst_21 {dimension_numbers = #tpu.dot_dimension_numbers<[1], [0], [0], [1], [0, 0, 1, 1], [], []>} : vector<256x12xf32>, vector<12x4xf32>, vector<256x4xf32> -> vector<256x4xf32>
    %44 = arith.addf %34, %43 : vector<256x4xf32>
    %c0_22 = arith.constant 0 : index
    %c0_23 = arith.constant 0 : index
    %45 = vector.load %arg5[%c0_22, %c0_23] : memref<1x4xf32, #tpu.memory_space<vmem>>, vector<1x4xf32>
    %46 = vector.broadcast %45 : vector<1x4xf32> to vector<256x4xf32>
    %47 = arith.mulf %44, %46 : vector<256x4xf32>
    %c0_24 = arith.constant 0 : index
    %c0_25 = arith.constant 0 : index
    %48 = vector.load %arg6[%c0_24, %c0_25] : memref<1x4xf32, #tpu.memory_space<vmem>>, vector<1x4xf32>
    %49 = vector.broadcast %48 : vector<1x4xf32> to vector<256x4xf32>
    %50 = arith.addf %47, %49 : vector<256x4xf32>
    %cst_26 = arith.constant 0.000000e+00 : f32
    %51 = vector.broadcast %cst_26 : f32 to vector<256x4xf32>
    %52 = arith.maximumf %50, %51 : vector<256x4xf32>
    %53 = vector.shape_cast %52 : vector<256x4xf32> to vector<16x16x4xf32>
    %c0_27 = arith.constant 0 : index
    %c0_28 = arith.constant 0 : index
    %c0_29 = arith.constant 0 : index
    %c0_30 = arith.constant 0 : index
    %54 = vector.load %arg1[%c0_27, %c0_28, %c0_29, %c0_30] : memref<1x16x16x4xf32, #tpu.memory_space<vmem>>, vector<1x16x16x4xf32>
    %55 = vector.shape_cast %54 : vector<1x16x16x4xf32> to vector<16x16x4xf32>
    %56 = vector.shape_cast %55 : vector<16x16x4xf32> to vector<256x4xf32>
    %c0_31 = arith.constant 0 : index
    %c0_32 = arith.constant 0 : index
    %57 = vector.load %arg8[%c0_31, %c0_32] : memref<1x4xf32, #tpu.memory_space<vmem>>, vector<1x4xf32>
    %58 = vector.broadcast %57 : vector<1x4xf32> to vector<256x4xf32>
    %59 = arith.addf %56, %58 : vector<256x4xf32>
    %cst_33 = arith.constant 0.000000e+00 : f32
    %60 = vector.broadcast %cst_33 : f32 to vector<16x1x4xf32>
    %cst_34 = arith.constant 0.000000e+00 : f32
    %61 = vector.broadcast %cst_34 : f32 to vector<1x18x4xf32>
    %62 = tpu.concatenate %60, %53, %60 in 1 : vector<16x1x4xf32>, vector<16x16x4xf32>, vector<16x1x4xf32> -> vector<16x18x4xf32>
    %63 = tpu.concatenate %61, %62, %61 in 0 : vector<1x18x4xf32>, vector<16x18x4xf32>, vector<1x18x4xf32> -> vector<18x18x4xf32>
    %64 = vector.extract_strided_slice %63 {offsets = [0, 0, 0], sizes = [16, 18, 4], strides = [1, 1, 1]} : vector<18x18x4xf32> to vector<16x18x4xf32>
    %65 = vector.extract_strided_slice %64 {offsets = [0, 0, 0], sizes = [16, 16, 4], strides = [1, 1, 1]} : vector<16x18x4xf32> to vector<16x16x4xf32>
    %66 = vector.extract_strided_slice %64 {offsets = [0, 1, 0], sizes = [16, 16, 4], strides = [1, 1, 1]} : vector<16x18x4xf32> to vector<16x16x4xf32>
    %67 = vector.extract_strided_slice %64 {offsets = [0, 2, 0], sizes = [16, 16, 4], strides = [1, 1, 1]} : vector<16x18x4xf32> to vector<16x16x4xf32>
    %68 = tpu.concatenate %65, %66, %67 in 2 : vector<16x16x4xf32>, vector<16x16x4xf32>, vector<16x16x4xf32> -> vector<16x16x12xf32>
    %69 = vector.shape_cast %68 : vector<16x16x12xf32> to vector<256x12xf32>
    %c0_35 = arith.constant 0 : index
    %c0_36 = arith.constant 0 : index
    %c0_37 = arith.constant 0 : index
    %70 = vector.load %arg7[%c0_35, %c0_36, %c0_37] : memref<3x12x4xf32, #tpu.memory_space<vmem>>, vector<1x12x4xf32>
    %71 = vector.shape_cast %70 : vector<1x12x4xf32> to vector<12x4xf32>
    %cst_38 = arith.constant dense<0.000000e+00> : vector<256x4xf32>
    %72 = tpu.matmul %69, %71, %cst_38 {dimension_numbers = #tpu.dot_dimension_numbers<[1], [0], [0], [1], [0, 0, 1, 1], [], []>} : vector<256x12xf32>, vector<12x4xf32>, vector<256x4xf32> -> vector<256x4xf32>
    %73 = arith.addf %59, %72 : vector<256x4xf32>
    %74 = vector.extract_strided_slice %63 {offsets = [1, 0, 0], sizes = [16, 18, 4], strides = [1, 1, 1]} : vector<18x18x4xf32> to vector<16x18x4xf32>
    %75 = vector.extract_strided_slice %74 {offsets = [0, 0, 0], sizes = [16, 16, 4], strides = [1, 1, 1]} : vector<16x18x4xf32> to vector<16x16x4xf32>
    %76 = vector.extract_strided_slice %74 {offsets = [0, 1, 0], sizes = [16, 16, 4], strides = [1, 1, 1]} : vector<16x18x4xf32> to vector<16x16x4xf32>
    %77 = vector.extract_strided_slice %74 {offsets = [0, 2, 0], sizes = [16, 16, 4], strides = [1, 1, 1]} : vector<16x18x4xf32> to vector<16x16x4xf32>
    %78 = tpu.concatenate %75, %76, %77 in 2 : vector<16x16x4xf32>, vector<16x16x4xf32>, vector<16x16x4xf32> -> vector<16x16x12xf32>
    %79 = vector.shape_cast %78 : vector<16x16x12xf32> to vector<256x12xf32>
    %c1_39 = arith.constant 1 : index
    %c0_40 = arith.constant 0 : index
    %c0_41 = arith.constant 0 : index
    %80 = vector.load %arg7[%c1_39, %c0_40, %c0_41] : memref<3x12x4xf32, #tpu.memory_space<vmem>>, vector<1x12x4xf32>
    %81 = vector.shape_cast %80 : vector<1x12x4xf32> to vector<12x4xf32>
    %cst_42 = arith.constant dense<0.000000e+00> : vector<256x4xf32>
    %82 = tpu.matmul %79, %81, %cst_42 {dimension_numbers = #tpu.dot_dimension_numbers<[1], [0], [0], [1], [0, 0, 1, 1], [], []>} : vector<256x12xf32>, vector<12x4xf32>, vector<256x4xf32> -> vector<256x4xf32>
    %83 = arith.addf %73, %82 : vector<256x4xf32>
    %84 = vector.extract_strided_slice %63 {offsets = [2, 0, 0], sizes = [16, 18, 4], strides = [1, 1, 1]} : vector<18x18x4xf32> to vector<16x18x4xf32>
    %85 = vector.extract_strided_slice %84 {offsets = [0, 0, 0], sizes = [16, 16, 4], strides = [1, 1, 1]} : vector<16x18x4xf32> to vector<16x16x4xf32>
    %86 = vector.extract_strided_slice %84 {offsets = [0, 1, 0], sizes = [16, 16, 4], strides = [1, 1, 1]} : vector<16x18x4xf32> to vector<16x16x4xf32>
    %87 = vector.extract_strided_slice %84 {offsets = [0, 2, 0], sizes = [16, 16, 4], strides = [1, 1, 1]} : vector<16x18x4xf32> to vector<16x16x4xf32>
    %88 = tpu.concatenate %85, %86, %87 in 2 : vector<16x16x4xf32>, vector<16x16x4xf32>, vector<16x16x4xf32> -> vector<16x16x12xf32>
    %89 = vector.shape_cast %88 : vector<16x16x12xf32> to vector<256x12xf32>
    %c2_43 = arith.constant 2 : index
    %c0_44 = arith.constant 0 : index
    %c0_45 = arith.constant 0 : index
    %90 = vector.load %arg7[%c2_43, %c0_44, %c0_45] : memref<3x12x4xf32, #tpu.memory_space<vmem>>, vector<1x12x4xf32>
    %91 = vector.shape_cast %90 : vector<1x12x4xf32> to vector<12x4xf32>
    %cst_46 = arith.constant dense<0.000000e+00> : vector<256x4xf32>
    %92 = tpu.matmul %89, %91, %cst_46 {dimension_numbers = #tpu.dot_dimension_numbers<[1], [0], [0], [1], [0, 0, 1, 1], [], []>} : vector<256x12xf32>, vector<12x4xf32>, vector<256x4xf32> -> vector<256x4xf32>
    %93 = arith.addf %83, %92 : vector<256x4xf32>
    %c0_47 = arith.constant 0 : index
    %c0_48 = arith.constant 0 : index
    %c0_49 = arith.constant 0 : index
    %94 = vector.load %arg9[%c0_47, %c0_48, %c0_49] : memref<1x256x4xf32, #tpu.memory_space<vmem>>, vector<1x256x4xf32>
    %95 = vector.shape_cast %94 : vector<1x256x4xf32> to vector<256x4xf32>
    %96 = vector.shape_cast %93 : vector<256x4xf32> to vector<1x256x4xf32>
    tpu.vector_store %arg9[%c0_47, %c0_48, %c0_49], %96 {strides = array<i32>} : memref<1x256x4xf32, #tpu.memory_space<vmem>>, vector<1x256x4xf32>,
    return
  }
  func.func @transform_0(%arg0: i32) -> (i32, i32, i32, i32) {
    %c0_i32 = arith.constant 0 : i32
    %c0_i32_0 = arith.constant 0 : i32
    %c0_i32_1 = arith.constant 0 : i32
    %c0_i32_2 = arith.constant 0 : i32
    return %arg0, %c0_i32, %c0_i32_0, %c0_i32_1 : i32, i32, i32, i32
  }
  func.func @transform_1(%arg0: i32) -> (i32, i32, i32) {
    %c0_i32 = arith.constant 0 : i32
    %c0_i32_0 = arith.constant 0 : i32
    %c0_i32_1 = arith.constant 0 : i32
    %c0_i32_2 = arith.constant 0 : i32
    return %c0_i32, %c0_i32_0, %c0_i32_1 : i32, i32, i32
  }
  func.func @transform_2(%arg0: i32) -> (i32, i32, i32) {
    %c0_i32 = arith.constant 0 : i32
    %c0_i32_0 = arith.constant 0 : i32
    %c0_i32_1 = arith.constant 0 : i32
    %c0_i32_2 = arith.constant 0 : i32
    return %c0_i32, %c0_i32_0, %c0_i32_1 : i32, i32, i32
  }
  func.func @transform_3(%arg0: i32) -> (i32, i32, i32) {
    %c0_i32 = arith.constant 0 : i32
    %c0_i32_0 = arith.constant 0 : i32
    %c0_i32_1 = arith.constant 0 : i32
    %c0_i32_2 = arith.constant 0 : i32
    return %c0_i32, %c0_i32_0, %c0_i32_1 : i32, i32, i32
  }
  func.func @transform_4(%arg0: i32) -> (i32, i32) {
    %c0_i32 = arith.constant 0 : i32
    %c0_i32_0 = arith.constant 0 : i32
    %c0_i32_1 = arith.constant 0 : i32
    return %c0_i32, %c0_i32_0 : i32, i32
  }
  func.func @transform_5(%arg0: i32) -> (i32, i32) {
    %c0_i32 = arith.constant 0 : i32
    %c0_i32_0 = arith.constant 0 : i32
    %c0_i32_1 = arith.constant 0 : i32
    return %c0_i32, %c0_i32_0 : i32, i32
  }
  func.func @transform_6(%arg0: i32) -> (i32, i32, i32) {
    %c0_i32 = arith.constant 0 : i32
    %c0_i32_0 = arith.constant 0 : i32
    %c0_i32_1 = arith.constant 0 : i32
    %c0_i32_2 = arith.constant 0 : i32
    return %c0_i32, %c0_i32_0, %c0_i32_1 : i32, i32, i32
  }
  func.func @transform_7(%arg0: i32) -> (i32, i32) {
    %c0_i32 = arith.constant 0 : i32
    %c0_i32_0 = arith.constant 0 : i32
    %c0_i32_1 = arith.constant 0 : i32
    return %c0_i32, %c0_i32_0 : i32, i32
  }
  func.func @transform_8(%arg0: i32) -> (i32, i32, i32) {
    %c0_i32 = arith.constant 0 : i32
    %c0_i32_0 = arith.constant 0 : i32
    %c0_i32_1 = arith.constant 0 : i32
    return %arg0, %c0_i32, %c0_i32_0 : i32, i32, i32
  }
}

</mosaic_0001>

<llo_original>
// kernel: tpu_custom_call.1
$region0: #{tpu_custom_call.1}
  #allocation0 [shape = 'u32[]', space=smem, size = 0x4, offset = 0x4, fixed_abs, tag = 'smem constant byte address 0x4 - core index']
  #allocation1 [shape = 'u32[144,128]{1,0:T(1,128)}', space=vmem, size = 0x12000, scoped, tag = 'internal scratch']
  %s0 = inlined_call_operand.vmem [shape: f32[2,16,16,4], index: 0, kind: input, shape index: {}]
  %s1 = inlined_call_operand.vmem [shape: f32[1,1,4], index: 1, kind: input, shape index: {}]
  %s2 = inlined_call_operand.vmem [shape: f32[1,1,4], index: 2, kind: input, shape index: {}]
  %s3 = inlined_call_operand.vmem [shape: f32[3,12,4], index: 3, kind: input, shape index: {}]
  %s4 = inlined_call_operand.vmem [shape: f32[1,4], index: 4, kind: input, shape index: {}]
  %s5 = inlined_call_operand.vmem [shape: f32[1,4], index: 5, kind: input, shape index: {}]
  %s6 = inlined_call_operand.vmem [shape: f32[3,12,4], index: 6, kind: input, shape index: {}]
  %s7 = inlined_call_operand.vmem [shape: f32[1,4], index: 7, kind: input, shape index: {}]
  %s8 = inlined_call_operand.vmem [shape: f32[2,256,4], index: 8, kind: output, shape index: {}]
  %s9 = sld [smem:[#allocation0]]
  $region65: #{tpu_custom_call.1} parent=0
    _
  %s11 = ssub.s32 1, %s9
  %s12 = scalar_select 0, %s11, %s9
  loop: start=0, step=1, limit=4
  $region2: #{tpu_custom_call.1} parent=0 // loop_pre_header
    _
  $region3: #{tpu_custom_call.1} parent=0 // loop_header
    %s14 = sphi 0, %s18
    %p15 = scmp.ge.s32.totalorder %s14, 4
    %s24 = sphi 0, %s26
    %s27 = sphi 0, %s24
    %s28 = sphi 0, %s27
    %s44 = sphi 0, %s28
    %s48 = sphi 0, %s48
    %s50 = sphi 0, %s48
    %s51 = sphi 0, %s50
    %s65 = sphi 0, %s51
    %s69 = sphi 0, %s69
    %s71 = sphi 0, %s69
    %s72 = sphi 0, %s71
    %s86 = sphi 0, %s72
    %s90 = sphi 0, %s90
    %s92 = sphi 0, %s90
    %s93 = sphi 0, %s92
    %s107 = sphi 0, %s93
    %s111 = sphi 0, %s111
    %s113 = sphi 0, %s111
    %s114 = sphi 0, %s113
    %s128 = sphi 0, %s114
    %s132 = sphi 0, %s132
    %s134 = sphi 0, %s132
    %s135 = sphi 0, %s134
    %s149 = sphi 0, %s135
    %s153 = sphi 0, %s153
    %s155 = sphi 0, %s153
    %s156 = sphi 0, %s155
    %s170 = sphi 0, %s156
    %s174 = sphi 0, %s174
    %s176 = sphi 0, %s174
    %s177 = sphi 0, %s176
    %s191 = sphi 0, %s177
    %s197 = sphi 0, %s199
    %s200 = sphi 0, %s197
    %s201 = sphi 0, %s200
    %s217 = sphi 0, %s201
  $region4: #{tpu_custom_call.1} parent=0 // loop_header_branch
    %17 = sbr.rel (%p15) target = $region8
  $region5: #{tpu_custom_call.1} parent=0 // loop_body
    %s19 = ssub.s32 %s14, 1
    %s20 = ssub.s32 %s14, 2
    %s21 = sadd.s32 %s14, 1
    %s22 = ssub.s32 %s14, %s21
    %p23 = scmp.eq.s32.totalorder %s22, 0
    %s25 = sadd.s32 %s24, 1
    %s26 = scalar_select %p23, %s24, %s25
    %p29 = pneg %p23
    %p30 = scmp.eq.s32.totalorder %s14, 1
    %p31 = por %p29, %p30
    %p32 = scmp.ne.s32.totalorder %s24, %s27
    %p33 = scmp.eq.s32.totalorder %s14, 0
    %p34 = por %p32, %p33
    %p35 = scmp.ne.s32.totalorder %s24, %s27
    %p36 = scmp.eq.s32.totalorder %s19, 1
    %p37 = por %p35, %p36
    %p38 = scmp.ne.s32.totalorder %s27, %s28
    %p39 = scmp.eq.s32.totalorder %s19, 0
    %p40 = por %p38, %p39
    %p41 = scmp.ne.s32.totalorder %s27, %s28
    %p42 = scmp.eq.s32.totalorder %s20, 1
    %p43 = por %p41, %p42
    %p45 = scmp.ne.s32.totalorder %s28, %s44
    %p46 = scmp.eq.s32.totalorder %s20, 0
    %p47 = por %p45, %p46
    %s49 = sadd.s32 %s48, 1
    %p52 = scmp.eq.s32.totalorder %s14, 1
    %p53 = scmp.ne.s32.totalorder %s48, %s50
    %p54 = scmp.eq.s32.totalorder %s14, 0
    %p55 = por %p53, %p54
    %p56 = scmp.ne.s32.totalorder %s48, %s50
    %p57 = scmp.eq.s32.totalorder %s19, 1
    %p58 = por %p56, %p57
    %p59 = scmp.ne.s32.totalorder %s50, %s51
    %p60 = scmp.eq.s32.totalorder %s19, 0
    %p61 = por %p59, %p60
    %p62 = scmp.ne.s32.totalorder %s50, %s51
    %p63 = scmp.eq.s32.totalorder %s20, 1
    %p64 = por %p62, %p63
    %p66 = scmp.ne.s32.totalorder %s51, %s65
    %p67 = scmp.eq.s32.totalorder %s20, 0
    %p68 = por %p66, %p67
    %s70 = sadd.s32 %s69, 1
    %p73 = scmp.eq.s32.totalorder %s14, 1
    %p74 = scmp.ne.s32.totalorder %s69, %s71
    %p75 = scmp.eq.s32.totalorder %s14, 0
    %p76 = por %p74, %p75
    %p77 = scmp.ne.s32.totalorder %s69, %s71
    %p78 = scmp.eq.s32.totalorder %s19, 1
    %p79 = por %p77, %p78
    %p80 = scmp.ne.s32.totalorder %s71, %s72
    %p81 = scmp.eq.s32.totalorder %s19, 0
    %p82 = por %p80, %p81
    %p83 = scmp.ne.s32.totalorder %s71, %s72
    %p84 = scmp.eq.s32.totalorder %s20, 1
    %p85 = por %p83, %p84
    %p87 = scmp.ne.s32.totalorder %s72, %s86
    %p88 = scmp.eq.s32.totalorder %s20, 0
    %p89 = por %p87, %p88
    %s91 = sadd.s32 %s90, 1
    %p94 = scmp.eq.s32.totalorder %s14, 1
    %p95 = scmp.ne.s32.totalorder %s90, %s92
    %p96 = scmp.eq.s32.totalorder %s14, 0
    %p97 = por %p95, %p96
    %p98 = scmp.ne.s32.totalorder %s90, %s92
    %p99 = scmp.eq.s32.totalorder %s19, 1
    %p100 = por %p98, %p99
    %p101 = scmp.ne.s32.totalorder %s92, %s93
    %p102 = scmp.eq.s32.totalorder %s19, 0
    %p103 = por %p101, %p102
    %p104 = scmp.ne.s32.totalorder %s92, %s93
    %p105 = scmp.eq.s32.totalorder %s20, 1
    %p106 = por %p104, %p105
    %p108 = scmp.ne.s32.totalorder %s93, %s107
    %p109 = scmp.eq.s32.totalorder %s20, 0
    %p110 = por %p108, %p109
    %s112 = sadd.s32 %s111, 1
    %p115 = scmp.eq.s32.totalorder %s14, 1
    %p116 = scmp.ne.s32.totalorder %s111, %s113
    %p117 = scmp.eq.s32.totalorder %s14, 0
    %p118 = por %p116, %p117
    %p119 = scmp.ne.s32.totalorder %s111, %s113
    %p120 = scmp.eq.s32.totalorder %s19, 1
    %p121 = por %p119, %p120
    %p122 = scmp.ne.s32.totalorder %s113, %s114
    %p123 = scmp.eq.s32.totalorder %s19, 0
    %p124 = por %p122, %p123
    %p125 = scmp.ne.s32.totalorder %s113, %s114
    %p126 = scmp.eq.s32.totalorder %s20, 1
    %p127 = por %p125, %p126
    %p129 = scmp.ne.s32.totalorder %s114, %s128
    %p130 = scmp.eq.s32.totalorder %s20, 0
    %p131 = por %p129, %p130
    %s133 = sadd.s32 %s132, 1
    %p136 = scmp.eq.s32.totalorder %s14, 1
    %p137 = scmp.ne.s32.totalorder %s132, %s134
    %p138 = scmp.eq.s32.totalorder %s14, 0
    %p139 = por %p137, %p138
    %p140 = scmp.ne.s32.totalorder %s132, %s134
    %p141 = scmp.eq.s32.totalorder %s19, 1
    %p142 = por %p140, %p141
    %p143 = scmp.ne.s32.totalorder %s134, %s135
    %p144 = scmp.eq.s32.totalorder %s19, 0
    %p145 = por %p143, %p144
    %p146 = scmp.ne.s32.totalorder %s134, %s135
    %p147 = scmp.eq.s32.totalorder %s20, 1
    %p148 = por %p146, %p147
    %p150 = scmp.ne.s32.totalorder %s135, %s149
    %p151 = scmp.eq.s32.totalorder %s20, 0
    %p152 = por %p150, %p151
    %s154 = sadd.s32 %s153, 1
    %p157 = scmp.eq.s32.totalorder %s14, 1
    %p158 = scmp.ne.s32.totalorder %s153, %s155
    %p159 = scmp.eq.s32.totalorder %s14, 0
    %p160 = por %p158, %p159
    %p161 = scmp.ne.s32.totalorder %s153, %s155
    %p162 = scmp.eq.s32.totalorder %s19, 1
    %p163 = por %p161, %p162
    %p164 = scmp.ne.s32.totalorder %s155, %s156
    %p165 = scmp.eq.s32.totalorder %s19, 0
    %p166 = por %p164, %p165
    %p167 = scmp.ne.s32.totalorder %s155, %s156
    %p168 = scmp.eq.s32.totalorder %s20, 1
    %p169 = por %p167, %p168
    %p171 = scmp.ne.s32.totalorder %s156, %s170
    %p172 = scmp.eq.s32.totalorder %s20, 0
    %p173 = por %p171, %p172
    %s175 = sadd.s32 %s174, 1
    %p178 = scmp.eq.s32.totalorder %s14, 1
    %p179 = scmp.ne.s32.totalorder %s174, %s176
    %p180 = scmp.eq.s32.totalorder %s14, 0
    %p181 = por %p179, %p180
    %p182 = scmp.ne.s32.totalorder %s174, %s176
    %p183 = scmp.eq.s32.totalorder %s19, 1
    %p184 = por %p182, %p183
    %p185 = scmp.ne.s32.totalorder %s176, %s177
    %p186 = scmp.eq.s32.totalorder %s19, 0
    %p187 = por %p185, %p186
    %p188 = scmp.ne.s32.totalorder %s176, %s177
    %p189 = scmp.eq.s32.totalorder %s20, 1
    %p190 = por %p188, %p189
    %p192 = scmp.ne.s32.totalorder %s177, %s191
    %p193 = scmp.eq.s32.totalorder %s20, 0
    %p194 = por %p192, %p193
    %s195 = ssub.s32 %s14, %s21
    %p196 = scmp.eq.s32.totalorder %s195, 0
    %s198 = sadd.s32 %s197, 1
    %s199 = scalar_select %p196, %s197, %s198
    %p202 = pneg %p196
    %p203 = scmp.eq.s32.totalorder %s14, 1
    %p204 = por %p202, %p203
    %p205 = scmp.ne.s32.totalorder %s197, %s200
    %p206 = scmp.eq.s32.totalorder %s14, 0
    %p207 = por %p205, %p206
    %p208 = scmp.ne.s32.totalorder %s197, %s200
    %p209 = scmp.eq.s32.totalorder %s19, 1
    %p210 = por %p208, %p209
    %p211 = scmp.ne.s32.totalorder %s200, %s201
    %p212 = scmp.eq.s32.totalorder %s19, 0
    %p213 = por %p211, %p212
    %p214 = scmp.ne.s32.totalorder %s200, %s201
    %p215 = scmp.eq.s32.totalorder %s20, 1
    %p216 = por %p214, %p215
    %p218 = scmp.ne.s32.totalorder %s201, %s217
    %p219 = scmp.eq.s32.totalorder %s20, 0
    %p220 = por %p218, %p219
    %p221 = scmp.le.s32.totalorder 1, %s14
    %p222 = scmp.lt.s32.totalorder %s14, 3
    %p223 = pnand %p221, %p222
    %p224 = pneg %p223
    // Predicated region
    $region9: #{tpu_custom_call.1} parent=5 // pred_check
      _
    $region10: #{tpu_custom_call.1} parent=5 // pred_check_branch
      %226 = sbr.rel (%p223) target = $region12
    $region11: #{tpu_custom_call.1} parent=5 // pred_region
      %s227 = ssub.s32 %s14, 1
      // Predicated region
      $region13: #{tpu_custom_call.1} parent=11 // pred_check
        %p228 = pneg %p61
      $region14: #{tpu_custom_call.1} parent=11 // pred_check_branch
        %230 = sbr.rel (%p228) target = $region16
      $region15: #{tpu_custom_call.1} parent=11 // pred_region
        _
      $region16: #{tpu_custom_call.1} parent=11 // pred_fallthru
        _
      // Predicated region
      $region17: #{tpu_custom_call.1} parent=11 // pred_check
        %p231 = pneg %p82
      $region18: #{tpu_custom_call.1} parent=11 // pred_check_branch
        %233 = sbr.rel (%p231) target = $region20
      $region19: #{tpu_custom_call.1} parent=11 // pred_region
        _
      $region20: #{tpu_custom_call.1} parent=11 // pred_fallthru
        _
      // Predicated region
      $region21: #{tpu_custom_call.1} parent=11 // pred_check
        %p234 = pneg %p103
      $region22: #{tpu_custom_call.1} parent=11 // pred_check_branch
        %236 = sbr.rel (%p234) target = $region24
      $region23: #{tpu_custom_call.1} parent=11 // pred_region
        _
      $region24: #{tpu_custom_call.1} parent=11 // pred_fallthru
        _
      // Predicated region
      $region25: #{tpu_custom_call.1} parent=11 // pred_check
        %p237 = pneg %p124
      $region26: #{tpu_custom_call.1} parent=11 // pred_check_branch
        %239 = sbr.rel (%p237) target = $region28
      $region27: #{tpu_custom_call.1} parent=11 // pred_region
        _
      $region28: #{tpu_custom_call.1} parent=11 // pred_fallthru
        _
      // Predicated region
      $region29: #{tpu_custom_call.1} parent=11 // pred_check
        %p240 = pneg %p145
      $region30: #{tpu_custom_call.1} parent=11 // pred_check_branch
        %242 = sbr.rel (%p240) target = $region32
      $region31: #{tpu_custom_call.1} parent=11 // pred_region
        _
      $region32: #{tpu_custom_call.1} parent=11 // pred_fallthru
        _
      // Predicated region
      $region33: #{tpu_custom_call.1} parent=11 // pred_check
        %p243 = pneg %p166
      $region34: #{tpu_custom_call.1} parent=11 // pred_check_branch
        %245 = sbr.rel (%p243) target = $region36
      $region35: #{tpu_custom_call.1} parent=11 // pred_region
        _
      $region36: #{tpu_custom_call.1} parent=11 // pred_fallthru
        _
      // Predicated region
      $region37: #{tpu_custom_call.1} parent=11 // pred_check
        %p246 = pneg %p187
      $region38: #{tpu_custom_call.1} parent=11 // pred_check_branch
        %248 = sbr.rel (%p246) target = $region40
      $region39: #{tpu_custom_call.1} parent=11 // pred_region
        _
      $region40: #{tpu_custom_call.1} parent=11 // pred_fallthru
        _
    $region12: #{tpu_custom_call.1} parent=5 // pred_fallthru
      _
    %p249 = scmp.lt.s32.totalorder %s14, 2
    // Predicated region
    $region41: #{tpu_custom_call.1} parent=5 // pred_check
      %p250 = pneg %p249
    $region42: #{tpu_custom_call.1} parent=5 // pred_check_branch
      %252 = sbr.rel (%p250) target = $region44
    $region43: #{tpu_custom_call.1} parent=5 // pred_region
      // Predicated region
      $region45: #{tpu_custom_call.1} parent=43 // pred_check
        %p253 = pneg %p34
      $region46: #{tpu_custom_call.1} parent=43 // pred_check_branch
        %255 = sbr.rel (%p253) target = $region48
      $region47: #{tpu_custom_call.1} parent=43 // pred_region
        %p256 = scmp.lt.s32.totalorder %s14, 1
        %s257 = scalar_select %p256, %s14, 1
        %s258 = smul.addr %s257, 32
        %s259 = smul.addr %s258, 8
        %s260 = scalar_lea.vmem %s0, %s259
      $region48: #{tpu_custom_call.1} parent=43 // pred_fallthru
        _
    $region44: #{tpu_custom_call.1} parent=5 // pred_fallthru
      _
    %p261 = scmp.le.s32.totalorder 1, %s14
    %p262 = scmp.lt.s32.totalorder %s14, 3
    %p263 = pnand %p261, %p262
    %p264 = pneg %p263
    // Predicated region
    $region49: #{tpu_custom_call.1} parent=5 // pred_check
      _
    $region50: #{tpu_custom_call.1} parent=5 // pred_check_branch
      %266 = sbr.rel (%p263) target = $region52
    $region51: #{tpu_custom_call.1} parent=5 // pred_region
      %s267 = ssub.s32 %s14, 1
      %p268 = scmp.lt.s32.totalorder %s19, 1
      %s269 = scalar_select %p268, %s19, 1
      %s270 = smul.addr %s269, 32
      %s271 = smul.addr %s270, 8
      %s272 = scalar_lea.vmem %s0, %s271
      %p273 = pneg %p40
      %p274 = pneg %p37
      %p275 = pneg %p61
      %p276 = pneg %p58
      %p277 = pneg %p82
      %p278 = pneg %p79
      %p279 = pneg %p103
      %p280 = pneg %p100
      %p281 = pneg %p124
      %p282 = pneg %p121
      %p283 = pneg %p145
      %p284 = pneg %p142
      %p285 = pneg %p166
      %p286 = pneg %p163
      %p287 = pneg %p187
      %p288 = pneg %p184
      %p289 = pneg %p213
      %p290 = pneg %p210
      %p291 = scmp.lt.s32.totalorder %s19, 1
      %s292 = scalar_select %p291, %s19, 1
      %s293 = smul.addr %s292, 32
      %s294 = smul.addr %s293, 8
      %s295 = scalar_lea.vmem %s8, %s294
      %p296 = scmp.lt.s32.totalorder %s19, 1
      %s297 = scalar_select %p296, %s19, 1
      %s298 = smul.addr %s297, 32
      %s299 = smul.addr %s298, 8
      %s300 = scalar_lea.vmem %s0, %s299
      %p301 = scmp.lt.s32.totalorder %s19, 1
      %s302 = scalar_select %p301, %s19, 1
      %s303 = smul.addr %s302, 32
      %s304 = smul.addr %s303, 8
      %s305 = scalar_lea.vmem %s8, %s304
      %v306 = vld [vmem:[%s300] sm:$0xff]
      %v307 = vld [vmem:[%s300 + $0x8] sm:$0xff]
      %v308 = vld [vmem:[%s300 + $0x10] sm:$0xff]
      %v309 = vld [vmem:[%s300 + $0x18] sm:$0xff]
      %v310 = vld [vmem:[%s300 + $0x20] sm:$0xff]
      %v311 = vld [vmem:[%s300 + $0x28] sm:$0xff]
      %v312 = vld [vmem:[%s300 + $0x30] sm:$0xff]
      %v313 = vld [vmem:[%s300 + $0x38] sm:$0xff]
      %v314 = vld [vmem:[%s300 + $0x40] sm:$0xff]
      %v315 = vld [vmem:[%s300 + $0x48] sm:$0xff]
      %v316 = vld [vmem:[%s300 + $0x50] sm:$0xff]
      %v317 = vld [vmem:[%s300 + $0x58] sm:$0xff]
      %v318 = vld [vmem:[%s300 + $0x60] sm:$0xff]
      %v319 = vld [vmem:[%s300 + $0x68] sm:$0xff]
      %v320 = vld [vmem:[%s300 + $0x70] sm:$0xff]
      %v321 = vld [vmem:[%s300 + $0x78] sm:$0xff]
      %v322 = vld [vmem:[%s300 + $0x80] sm:$0xff]
      %v323 = vld [vmem:[%s300 + $0x88] sm:$0xff]
      %v324 = vld [vmem:[%s300 + $0x90] sm:$0xff]
      %v325 = vld [vmem:[%s300 + $0x98] sm:$0xff]
      %v326 = vld [vmem:[%s300 + $0xa0] sm:$0xff]
      %v327 = vld [vmem:[%s300 + $0xa8] sm:$0xff]
      %v328 = vld [vmem:[%s300 + $0xb0] sm:$0xff]
      %v329 = vld [vmem:[%s300 + $0xb8] sm:$0xff]
      %v330 = vld [vmem:[%s300 + $0xc0] sm:$0xff]
      %v331 = vld [vmem:[%s300 + $0xc8] sm:$0xff]
      %v332 = vld [vmem:[%s300 + $0xd0] sm:$0xff]
      %v333 = vld [vmem:[%s300 + $0xd8] sm:$0xff]
      %v334 = vld [vmem:[%s300 + $0xe0] sm:$0xff]
      %v335 = vld [vmem:[%s300 + $0xe8] sm:$0xff]
      %v336 = vld [vmem:[%s300 + $0xf0] sm:$0xff]
      %v337 = vld [vmem:[%s300 + $0xf8] sm:$0xff]
      %v338 = vld [vmem:[%s1] sm:$0x1]
      %v340 = vlaneseq
      %v341 = vshrl.u32 %v340, 7
      %v342 = vsub.s32 0, %v341
      %v343 = vrot.slane %v338, %v342
      %v345 = vmul.f32 %v306, %v343
      %v346 = vmul.f32 %v307, %v343
      %v347 = vmul.f32 %v308, %v343
      %v348 = vmul.f32 %v309, %v343
      %v349 = vmul.f32 %v310, %v343
      %v350 = vmul.f32 %v311, %v343
      %v351 = vmul.f32 %v312, %v343
      %v352 = vmul.f32 %v313, %v343
      %v353 = vmul.f32 %v314, %v343
      %v354 = vmul.f32 %v315, %v343
      %v355 = vmul.f32 %v316, %v343
      %v356 = vmul.f32 %v317, %v343
      %v357 = vmul.f32 %v318, %v343
      %v358 = vmul.f32 %v319, %v343
      %v359 = vmul.f32 %v320, %v343
      %v360 = vmul.f32 %v321, %v343
      %v361 = vmul.f32 %v322, %v343
      %v362 = vmul.f32 %v323, %v343
      %v363 = vmul.f32 %v324, %v343
      %v364 = vmul.f32 %v325, %v343
      %v365 = vmul.f32 %v326, %v343
      %v366 = vmul.f32 %v327, %v343
      %v367 = vmul.f32 %v328, %v343
      %v368 = vmul.f32 %v329, %v343
      %v369 = vmul.f32 %v330, %v343
      %v370 = vmul.f32 %v331, %v343
      %v371 = vmul.f32 %v332, %v343
      %v372 = vmul.f32 %v333, %v343
      %v373 = vmul.f32 %v334, %v343
      %v374 = vmul.f32 %v335, %v343
      %v375 = vmul.f32 %v336, %v343
      %v376 = vmul.f32 %v337, %v343
      %v377 = vld [vmem:[%s2] sm:$0x1]
      %v379 = vlaneseq
      %v380 = vshrl.u32 %v379, 7
      %v381 = vsub.s32 0, %v380
      %v382 = vrot.slane %v377, %v381
      %v384 = vadd.f32 %v345, %v382
      %v385 = vadd.f32 %v346, %v382
      %v386 = vadd.f32 %v347, %v382
      %v387 = vadd.f32 %v348, %v382
      %v388 = vadd.f32 %v349, %v382
      %v389 = vadd.f32 %v350, %v382
      %v390 = vadd.f32 %v351, %v382
      %v391 = vadd.f32 %v352, %v382
      %v392 = vadd.f32 %v353, %v382
      %v393 = vadd.f32 %v354, %v382
      %v394 = vadd.f32 %v355, %v382
      %v395 = vadd.f32 %v356, %v382
      %v396 = vadd.f32 %v357, %v382
      %v397 = vadd.f32 %v358, %v382
      %v398 = vadd.f32 %v359, %v382
      %v399 = vadd.f32 %v360, %v382
      %v400 = vadd.f32 %v361, %v382
      %v401 = vadd.f32 %v362, %v382
      %v402 = vadd.f32 %v363, %v382
      %v403 = vadd.f32 %v364, %v382
      %v404 = vadd.f32 %v365, %v382
      %v405 = vadd.f32 %v366, %v382
      %v406 = vadd.f32 %v367, %v382
      %v407 = vadd.f32 %v368, %v382
      %v408 = vadd.f32 %v369, %v382
      %v409 = vadd.f32 %v370, %v382
      %v410 = vadd.f32 %v371, %v382
      %v411 = vadd.f32 %v372, %v382
      %v412 = vadd.f32 %v373, %v382
      %v413 = vadd.f32 %v374, %v382
      %v414 = vadd.f32 %v375, %v382
      %v415 = vadd.f32 %v376, %v382
      %v416 = vmax.f32 %v384, 0.0
      %v417 = vmax.f32 %v385, 0.0
      %v418 = vmax.f32 %v386, 0.0
      %v419 = vmax.f32 %v387, 0.0
      %v420 = vmax.f32 %v388, 0.0
      %v421 = vmax.f32 %v389, 0.0
      %v422 = vmax.f32 %v390, 0.0
      %v423 = vmax.f32 %v391, 0.0
      %v424 = vmax.f32 %v392, 0.0
      %v425 = vmax.f32 %v393, 0.0
      %v426 = vmax.f32 %v394, 0.0
      %v427 = vmax.f32 %v395, 0.0
      %v428 = vmax.f32 %v396, 0.0
      %v429 = vmax.f32 %v397, 0.0
      %v430 = vmax.f32 %v398, 0.0
      %v431 = vmax.f32 %v399, 0.0
      %v432 = vmax.f32 %v400, 0.0
      %v433 = vmax.f32 %v401, 0.0
      %v434 = vmax.f32 %v402, 0.0
      %v435 = vmax.f32 %v403, 0.0
      %v436 = vmax.f32 %v404, 0.0
      %v437 = vmax.f32 %v405, 0.0
      %v438 = vmax.f32 %v406, 0.0
      %v439 = vmax.f32 %v407, 0.0
      %v440 = vmax.f32 %v408, 0.0
      %v441 = vmax.f32 %v409, 0.0
      %v442 = vmax.f32 %v410, 0.0
      %v443 = vmax.f32 %v411, 0.0
      %v444 = vmax.f32 %v412, 0.0
      %v445 = vmax.f32 %v413, 0.0
      %v446 = vmax.f32 %v414, 0.0
      %v447 = vmax.f32 %v415, 0.0
      %vm480 = vcmask 1040384
      %v481 = vrot.slane %v416, 7
      %v482 = vrot.slane %v417, 7
      %v483 = vsel %vm480, %v481, %v482
      %v484 = vrot.slane %v418, 7
      %v485 = vrot.slane %v419, 7
      %v486 = vsel %vm480, %v484, %v485
      %v487 = vrot.slane %v420, 7
      %v488 = vrot.slane %v421, 7
      %v489 = vsel %vm480, %v487, %v488
      %v490 = vrot.slane %v422, 7
      %v491 = vrot.slane %v423, 7
      %v492 = vsel %vm480, %v490, %v491
      %v493 = vrot.slane %v424, 7
      %v494 = vrot.slane %v425, 7
      %v495 = vsel %vm480, %v493, %v494
      %v496 = vrot.slane %v426, 7
      %v497 = vrot.slane %v427, 7
      %v498 = vsel %vm480, %v496, %v497
      %v499 = vrot.slane %v428, 7
      %v500 = vrot.slane %v429, 7
      %v501 = vsel %vm480, %v499, %v500
      %v502 = vrot.slane %v430, 7
      %v503 = vrot.slane %v431, 7
      %v504 = vsel %vm480, %v502, %v503
      %v505 = vrot.slane %v432, 7
      %v506 = vrot.slane %v433, 7
      %v507 = vsel %vm480, %v505, %v506
      %v508 = vrot.slane %v434, 7
      %v509 = vrot.slane %v435, 7
      %v510 = vsel %vm480, %v508, %v509
      %v511 = vrot.slane %v436, 7
      %v512 = vrot.slane %v437, 7
      %v513 = vsel %vm480, %v511, %v512
      %v514 = vrot.slane %v438, 7
      %v515 = vrot.slane %v439, 7
      %v516 = vsel %vm480, %v514, %v515
      %v517 = vrot.slane %v440, 7
      %v518 = vrot.slane %v441, 7
      %v519 = vsel %vm480, %v517, %v518
      %v520 = vrot.slane %v442, 7
      %v521 = vrot.slane %v443, 7
      %v522 = vsel %vm480, %v520, %v521
      %v523 = vrot.slane %v444, 7
      %v524 = vrot.slane %v445, 7
      %v525 = vsel %vm480, %v523, %v524
      %v526 = vrot.slane %v446, 7
      %v527 = vrot.slane %v447, 7
      %v528 = vsel %vm480, %v526, %v527
      %v577 = vsel %vm480, 0.0, %v481
      %v578 = vsel %vm480, 0.0, %v484
      %v579 = vsel %vm480, 0.0, %v487
      %v580 = vsel %vm480, 0.0, %v490
      %v581 = vsel %vm480, 0.0, %v493
      %v582 = vsel %vm480, 0.0, %v496
      %v583 = vsel %vm480, 0.0, %v499
      %v584 = vsel %vm480, 0.0, %v502
      %v585 = vsel %vm480, 0.0, %v505
      %v586 = vsel %vm480, 0.0, %v508
      %v587 = vsel %vm480, 0.0, %v511
      %v588 = vsel %vm480, 0.0, %v514
      %v589 = vsel %vm480, 0.0, %v517
      %v590 = vsel %vm480, 0.0, %v520
      %v591 = vsel %vm480, 0.0, %v523
      %v592 = vsel %vm480, 0.0, %v526
      %v593 = vsel %vm480, %v482, 0.0
      %v594 = vsel %vm480, %v485, 0.0
      %v595 = vsel %vm480, %v488, 0.0
      %v596 = vsel %vm480, %v491, 0.0
      %v597 = vsel %vm480, %v494, 0.0
      %v598 = vsel %vm480, %v497, 0.0
      %v599 = vsel %vm480, %v500, 0.0
      %v600 = vsel %vm480, %v503, 0.0
      %v601 = vsel %vm480, %v506, 0.0
      %v602 = vsel %vm480, %v509, 0.0
      %v603 = vsel %vm480, %v512, 0.0
      %v604 = vsel %vm480, %v515, 0.0
      %v605 = vsel %vm480, %v518, 0.0
      %v606 = vsel %vm480, %v521, 0.0
      %v607 = vsel %vm480, %v524, 0.0
      %v608 = vsel %vm480, %v527, 0.0
      %vm640 = vcmask 1046528
      %v641 = vrot.slane 0.0, 1
      %v642 = vsel %vm640, %v641, %v641
      %v643 = vrot.slane %v577, 1
      %v644 = vrot.slane %v483, 1
      %v645 = vsel %vm640, %v643, %v644
      %v646 = vrot.slane %v593, 1
      %v647 = vsel %vm640, %v644, %v646
      %v648 = vrot.slane %v578, 1
      %v649 = vrot.slane %v486, 1
      %v650 = vsel %vm640, %v648, %v649
      %v651 = vrot.slane %v594, 1
      %v652 = vsel %vm640, %v649, %v651
      %v653 = vrot.slane %v579, 1
      %v654 = vrot.slane %v489, 1
      %v655 = vsel %vm640, %v653, %v654
      %v656 = vrot.slane %v595, 1
      %v657 = vsel %vm640, %v654, %v656
      %v658 = vrot.slane %v580, 1
      %v659 = vrot.slane %v492, 1
      %v660 = vsel %vm640, %v658, %v659
      %v661 = vrot.slane %v596, 1
      %v662 = vsel %vm640, %v659, %v661
      %v663 = vrot.slane %v581, 1
      %v664 = vrot.slane %v495, 1
      %v665 = vsel %vm640, %v663, %v664
      %v666 = vrot.slane %v597, 1
      %v667 = vsel %vm640, %v664, %v666
      %v668 = vrot.slane %v582, 1
      %v669 = vrot.slane %v498, 1
      %v670 = vsel %vm640, %v668, %v669
      %v671 = vrot.slane %v598, 1
      %v672 = vsel %vm640, %v669, %v671
      %v673 = vrot.slane %v583, 1
      %v674 = vrot.slane %v501, 1
      %v675 = vsel %vm640, %v673, %v674
      %v676 = vrot.slane %v599, 1
      %v677 = vsel %vm640, %v674, %v676
      %v678 = vrot.slane %v584, 1
      %v679 = vrot.slane %v504, 1
      %v680 = vsel %vm640, %v678, %v679
      %v681 = vrot.slane %v600, 1
      %v682 = vsel %vm640, %v679, %v681
      %v683 = vrot.slane %v585, 1
      %v684 = vrot.slane %v507, 1
      %v685 = vsel %vm640, %v683, %v684
      %v686 = vrot.slane %v601, 1
      %v687 = vsel %vm640, %v684, %v686
      %v688 = vrot.slane %v586, 1
      %v689 = vrot.slane %v510, 1
      %v690 = vsel %vm640, %v688, %v689
      %v691 = vrot.slane %v602, 1
      %v692 = vsel %vm640, %v689, %v691
      %v693 = vrot.slane %v587, 1
      %v694 = vrot.slane %v513, 1
      %v695 = vsel %vm640, %v693, %v694
      %v696 = vrot.slane %v603, 1
      %v697 = vsel %vm640, %v694, %v696
      %v698 = vrot.slane %v588, 1
      %v699 = vrot.slane %v516, 1
      %v700 = vsel %vm640, %v698, %v699
      %v701 = vrot.slane %v604, 1
      %v702 = vsel %vm640, %v699, %v701
      %v703 = vrot.slane %v589, 1
      %v704 = vrot.slane %v519, 1
      %v705 = vsel %vm640, %v703, %v704
      %v706 = vrot.slane %v605, 1
      %v707 = vsel %vm640, %v704, %v706
      %v708 = vrot.slane %v590, 1
      %v709 = vrot.slane %v522, 1
      %v710 = vsel %vm640, %v708, %v709
      %v711 = vrot.slane %v606, 1
      %v712 = vsel %vm640, %v709, %v711
      %v713 = vrot.slane %v591, 1
      %v714 = vrot.slane %v525, 1
      %v715 = vsel %vm640, %v713, %v714
      %v716 = vrot.slane %v607, 1
      %v717 = vsel %vm640, %v714, %v716
      %718 = vrot.lane.b32.xlu0 %v642, 4
      %v719 = vpop.permute.xlu0 %718
      %720 = vrot.lane.b32.xlu0 %v645, 4
      %v721 = vpop.permute.xlu0 %720
      %722 = vrot.lane.b32.xlu0 %v647, 4
      %v723 = vpop.permute.xlu0 %722
      %724 = vrot.lane.b32.xlu0 %v650, 4
      %v725 = vpop.permute.xlu0 %724
      %726 = vrot.lane.b32.xlu0 %v652, 4
      %v727 = vpop.permute.xlu0 %726
      %728 = vrot.lane.b32.xlu0 %v655, 4
      %v729 = vpop.permute.xlu0 %728
      %730 = vrot.lane.b32.xlu0 %v657, 4
      %v731 = vpop.permute.xlu0 %730
      %732 = vrot.lane.b32.xlu0 %v660, 4
      %v733 = vpop.permute.xlu0 %732
      %734 = vrot.lane.b32.xlu0 %v662, 4
      %v735 = vpop.permute.xlu0 %734
      %736 = vrot.lane.b32.xlu0 %v665, 4
      %v737 = vpop.permute.xlu0 %736
      %738 = vrot.lane.b32.xlu0 %v667, 4
      %v739 = vpop.permute.xlu0 %738
      %740 = vrot.lane.b32.xlu0 %v670, 4
      %v741 = vpop.permute.xlu0 %740
      %742 = vrot.lane.b32.xlu0 %v672, 4
      %v743 = vpop.permute.xlu0 %742
      %744 = vrot.lane.b32.xlu0 %v675, 4
      %v745 = vpop.permute.xlu0 %744
      %746 = vrot.lane.b32.xlu0 %v677, 4
      %v747 = vpop.permute.xlu0 %746
      %748 = vrot.lane.b32.xlu0 %v680, 4
      %v749 = vpop.permute.xlu0 %748
      %750 = vrot.lane.b32.xlu0 %v682, 4
      %v751 = vpop.permute.xlu0 %750
      %752 = vrot.lane.b32.xlu0 %v685, 4
      %v753 = vpop.permute.xlu0 %752
      %754 = vrot.lane.b32.xlu0 %v687, 4
      %v755 = vpop.permute.xlu0 %754
      %756 = vrot.lane.b32.xlu0 %v690, 4
      %v757 = vpop.permute.xlu0 %756
      %758 = vrot.lane.b32.xlu0 %v692, 4
      %v759 = vpop.permute.xlu0 %758
      %760 = vrot.lane.b32.xlu0 %v695, 4
      %v761 = vpop.permute.xlu0 %760
      %762 = vrot.lane.b32.xlu0 %v697, 4
      %v763 = vpop.permute.xlu0 %762
      %764 = vrot.lane.b32.xlu0 %v700, 4
      %v765 = vpop.permute.xlu0 %764
      %766 = vrot.lane.b32.xlu0 %v702, 4
      %v767 = vpop.permute.xlu0 %766
      %768 = vrot.lane.b32.xlu0 %v705, 4
      %v769 = vpop.permute.xlu0 %768
      %770 = vrot.lane.b32.xlu0 %v707, 4
      %v771 = vpop.permute.xlu0 %770
      %772 = vrot.lane.b32.xlu0 %v710, 4
      %v773 = vpop.permute.xlu0 %772
      %774 = vrot.lane.b32.xlu0 %v712, 4
      %v775 = vpop.permute.xlu0 %774
      %776 = vrot.lane.b32.xlu0 %v715, 4
      %v777 = vpop.permute.xlu0 %776
      %778 = vrot.lane.b32.xlu0 %v717, 4
      %v779 = vpop.permute.xlu0 %778
      %vm811 = vcmask 1045504
      %v812 = vrot.slane 0.0, 2
      %v813 = vsel %vm811, %v812, %v812
      %v814 = vrot.slane %v577, 2
      %v815 = vrot.slane %v483, 2
      %v816 = vsel %vm811, %v814, %v815
      %v817 = vrot.slane %v593, 2
      %v818 = vsel %vm811, %v815, %v817
      %v819 = vrot.slane %v578, 2
      %v820 = vrot.slane %v486, 2
      %v821 = vsel %vm811, %v819, %v820
      %v822 = vrot.slane %v594, 2
      %v823 = vsel %vm811, %v820, %v822
      %v824 = vrot.slane %v579, 2
      %v825 = vrot.slane %v489, 2
      %v826 = vsel %vm811, %v824, %v825
      %v827 = vrot.slane %v595, 2
      %v828 = vsel %vm811, %v825, %v827
      %v829 = vrot.slane %v580, 2
      %v830 = vrot.slane %v492, 2
      %v831 = vsel %vm811, %v829, %v830
      %v832 = vrot.slane %v596, 2
      %v833 = vsel %vm811, %v830, %v832
      %v834 = vrot.slane %v581, 2
      %v835 = vrot.slane %v495, 2
      %v836 = vsel %vm811, %v834, %v835
      %v837 = vrot.slane %v597, 2
      %v838 = vsel %vm811, %v835, %v837
      %v839 = vrot.slane %v582, 2
      %v840 = vrot.slane %v498, 2
      %v841 = vsel %vm811, %v839, %v840
      %v842 = vrot.slane %v598, 2
      %v843 = vsel %vm811, %v840, %v842
      %v844 = vrot.slane %v583, 2
      %v845 = vrot.slane %v501, 2
      %v846 = vsel %vm811, %v844, %v845
      %v847 = vrot.slane %v599, 2
      %v848 = vsel %vm811, %v845, %v847
      %v849 = vrot.slane %v584, 2
      %v850 = vrot.slane %v504, 2
      %v851 = vsel %vm811, %v849, %v850
      %v852 = vrot.slane %v600, 2
      %v853 = vsel %vm811, %v850, %v852
      %v854 = vrot.slane %v585, 2
      %v855 = vrot.slane %v507, 2
      %v856 = vsel %vm811, %v854, %v855
      %v857 = vrot.slane %v601, 2
      %v858 = vsel %vm811, %v855, %v857
      %v859 = vrot.slane %v586, 2
      %v860 = vrot.slane %v510, 2
      %v861 = vsel %vm811, %v859, %v860
      %v862 = vrot.slane %v602, 2
      %v863 = vsel %vm811, %v860, %v862
      %v864 = vrot.slane %v587, 2
      %v865 = vrot.slane %v513, 2
      %v866 = vsel %vm811, %v864, %v865
      %v867 = vrot.slane %v603, 2
      %v868 = vsel %vm811, %v865, %v867
      %v869 = vrot.slane %v588, 2
      %v870 = vrot.slane %v516, 2
      %v871 = vsel %vm811, %v869, %v870
      %v872 = vrot.slane %v604, 2
      %v873 = vsel %vm811, %v870, %v872
      %v874 = vrot.slane %v589, 2
      %v875 = vrot.slane %v519, 2
      %v876 = vsel %vm811, %v874, %v875
      %v877 = vrot.slane %v605, 2
      %v878 = vsel %vm811, %v875, %v877
      %v879 = vrot.slane %v590, 2
      %v880 = vrot.slane %v522, 2
      %v881 = vsel %vm811, %v879, %v880
      %v882 = vrot.slane %v606, 2
      %v883 = vsel %vm811, %v880, %v882
      %v884 = vrot.slane %v591, 2
      %v885 = vrot.slane %v525, 2
      %v886 = vsel %vm811, %v884, %v885
      %v887 = vrot.slane %v607, 2
      %v888 = vsel %vm811, %v885, %v887
      %889 = vrot.lane.b32.xlu0 %v813, 8
      %v890 = vpop.permute.xlu0 %889
      %891 = vrot.lane.b32.xlu0 %v816, 8
      %v892 = vpop.permute.xlu0 %891
      %893 = vrot.lane.b32.xlu0 %v818, 8
      %v894 = vpop.permute.xlu0 %893
      %895 = vrot.lane.b32.xlu0 %v821, 8
      %v896 = vpop.permute.xlu0 %895
      %897 = vrot.lane.b32.xlu0 %v823, 8
      %v898 = vpop.permute.xlu0 %897
      %899 = vrot.lane.b32.xlu0 %v826, 8
      %v900 = vpop.permute.xlu0 %899
      %901 = vrot.lane.b32.xlu0 %v828, 8
      %v902 = vpop.permute.xlu0 %901
      %903 = vrot.lane.b32.xlu0 %v831, 8
      %v904 = vpop.permute.xlu0 %903
      %905 = vrot.lane.b32.xlu0 %v833, 8
      %v906 = vpop.permute.xlu0 %905
      %907 = vrot.lane.b32.xlu0 %v836, 8
      %v908 = vpop.permute.xlu0 %907
      %909 = vrot.lane.b32.xlu0 %v838, 8
      %v910 = vpop.permute.xlu0 %909
      %911 = vrot.lane.b32.xlu0 %v841, 8
      %v912 = vpop.permute.xlu0 %911
      %913 = vrot.lane.b32.xlu0 %v843, 8
      %v914 = vpop.permute.xlu0 %913
      %915 = vrot.lane.b32.xlu0 %v846, 8
      %v916 = vpop.permute.xlu0 %915
      %917 = vrot.lane.b32.xlu0 %v848, 8
      %v918 = vpop.permute.xlu0 %917
      %919 = vrot.lane.b32.xlu0 %v851, 8
      %v920 = vpop.permute.xlu0 %919
      %921 = vrot.lane.b32.xlu0 %v853, 8
      %v922 = vpop.permute.xlu0 %921
      %923 = vrot.lane.b32.xlu0 %v856, 8
      %v924 = vpop.permute.xlu0 %923
      %925 = vrot.lane.b32.xlu0 %v858, 8
      %v926 = vpop.permute.xlu0 %925
      %927 = vrot.lane.b32.xlu0 %v861, 8
      %v928 = vpop.permute.xlu0 %927
      %929 = vrot.lane.b32.xlu0 %v863, 8
      %v930 = vpop.permute.xlu0 %929
      %931 = vrot.lane.b32.xlu0 %v866, 8
      %v932 = vpop.permute.xlu0 %931
      %933 = vrot.lane.b32.xlu0 %v868, 8
      %v934 = vpop.permute.xlu0 %933
      %935 = vrot.lane.b32.xlu0 %v871, 8
      %v936 = vpop.permute.xlu0 %935
      %937 = vrot.lane.b32.xlu0 %v873, 8
      %v938 = vpop.permute.xlu0 %937
      %939 = vrot.lane.b32.xlu0 %v876, 8
      %v940 = vpop.permute.xlu0 %939
      %941 = vrot.lane.b32.xlu0 %v878, 8
      %v942 = vpop.permute.xlu0 %941
      %943 = vrot.lane.b32.xlu0 %v881, 8
      %v944 = vpop.permute.xlu0 %943
      %945 = vrot.lane.b32.xlu0 %v883, 8
      %v946 = vpop.permute.xlu0 %945
      %947 = vrot.lane.b32.xlu0 %v886, 8
      %v948 = vpop.permute.xlu0 %947
      %949 = vrot.lane.b32.xlu0 %v888, 8
      %v950 = vpop.permute.xlu0 %949
      %vm982 = vcmask 31744
      %v983 = vsel %vm982, 0.0, %v719
      %v984 = vsel %vm982, %v577, %v721
      %v985 = vsel %vm982, %v483, %v723
      %v986 = vsel %vm982, %v578, %v725
      %v987 = vsel %vm982, %v486, %v727
      %v988 = vsel %vm982, %v579, %v729
      %v989 = vsel %vm982, %v489, %v731
      %v990 = vsel %vm982, %v580, %v733
      %v991 = vsel %vm982, %v492, %v735
      %v992 = vsel %vm982, %v581, %v737
      %v993 = vsel %vm982, %v495, %v739
      %v994 = vsel %vm982, %v582, %v741
      %v995 = vsel %vm982, %v498, %v743
      %v996 = vsel %vm982, %v583, %v745
      %v997 = vsel %vm982, %v501, %v747
      %v998 = vsel %vm982, %v584, %v749
      %v999 = vsel %vm982, %v504, %v751
      %v1000 = vsel %vm982, %v585, %v753
      %v1001 = vsel %vm982, %v507, %v755
      %v1002 = vsel %vm982, %v586, %v757
      %v1003 = vsel %vm982, %v510, %v759
      %v1004 = vsel %vm982, %v587, %v761
      %v1005 = vsel %vm982, %v513, %v763
      %v1006 = vsel %vm982, %v588, %v765
      %v1007 = vsel %vm982, %v516, %v767
      %v1008 = vsel %vm982, %v589, %v769
      %v1009 = vsel %vm982, %v519, %v771
      %v1010 = vsel %vm982, %v590, %v773
      %v1011 = vsel %vm982, %v522, %v775
      %v1012 = vsel %vm982, %v591, %v777
      %v1013 = vsel %vm982, %v525, %v779
      %vm1014 = vcmask 64512
      %v1015 = vsel %vm1014, %v983, %v890
      %v1016 = vsel %vm1014, %v984, %v892
      %v1017 = vsel %vm1014, %v985, %v894
      %v1018 = vsel %vm1014, %v986, %v896
      %v1019 = vsel %vm1014, %v987, %v898
      %v1020 = vsel %vm1014, %v988, %v900
      %v1021 = vsel %vm1014, %v989, %v902
      %v1022 = vsel %vm1014, %v990, %v904
      %v1023 = vsel %vm1014, %v991, %v906
      %v1024 = vsel %vm1014, %v992, %v908
      %v1025 = vsel %vm1014, %v993, %v910
      %v1026 = vsel %vm1014, %v994, %v912
      %v1027 = vsel %vm1014, %v995, %v914
      %v1028 = vsel %vm1014, %v996, %v916
      %v1029 = vsel %vm1014, %v997, %v918
      %v1030 = vsel %vm1014, %v998, %v920
      %v1031 = vsel %vm1014, %v999, %v922
      %v1032 = vsel %vm1014, %v1000, %v924
      %v1033 = vsel %vm1014, %v1001, %v926
      %v1034 = vsel %vm1014, %v1002, %v928
      %v1035 = vsel %vm1014, %v1003, %v930
      %v1036 = vsel %vm1014, %v1004, %v932
      %v1037 = vsel %vm1014, %v1005, %v934
      %v1038 = vsel %vm1014, %v1006, %v936
      %v1039 = vsel %vm1014, %v1007, %v938
      %v1040 = vsel %vm1014, %v1008, %v940
      %v1041 = vsel %vm1014, %v1009, %v942
      %v1042 = vsel %vm1014, %v1010, %v944
      %v1043 = vsel %vm1014, %v1011, %v946
      %v1044 = vsel %vm1014, %v1012, %v948
      %v1045 = vsel %vm1014, %v1013, %v950
      %v1046 = vld [vmem:[%s3] sm:$0xff]
      %v1047 = vld [vmem:[%s3 + $0x8] sm:$0xf]
      %v1050 = vrot.slane %v592, 1
      %v1051 = vrot.slane %v528, 1
      %v1052 = vsel %vm640, %v1050, %v1051
      %v1053 = vrot.slane %v608, 1
      %v1054 = vsel %vm640, %v1051, %v1053
      %1055 = vrot.lane.b32.xlu0 %v1052, 4
      %v1056 = vpop.permute.xlu0 %1055
      %1057 = vrot.lane.b32.xlu0 %v1054, 4
      %v1058 = vpop.permute.xlu0 %1057
      %v1061 = vrot.slane %v592, 2
      %v1062 = vrot.slane %v528, 2
      %v1063 = vsel %vm811, %v1061, %v1062
      %v1064 = vrot.slane %v608, 2
      %v1065 = vsel %vm811, %v1062, %v1064
      %1066 = vrot.lane.b32.xlu0 %v1063, 8
      %v1067 = vpop.permute.xlu0 %1066
      %1068 = vrot.lane.b32.xlu0 %v1065, 8
      %v1069 = vpop.permute.xlu0 %1068
      %v1072 = vsel %vm982, %v592, %v1056
      %v1073 = vsel %vm982, %v528, %v1058
      %v1074 = vsel %vm1014, %v1072, %v1067
      %v1075 = vsel %vm1014, %v1073, %v1069
      %s1076 = scalar_lea.vmem %s3, 16
      %v1077 = vld [vmem:[%s1076] sm:$0xff]
      %v1078 = vld [vmem:[%s1076 + $0x8] sm:$0xf]
      %vm1079 = vcmask 97280
      %v1081 = vsel %vm1079, %v1016, 0
      %v1084 = vsel %vm1079, %v1017, 0
      %v1087 = vsel %vm1079, %v1018, 0
      %v1090 = vsel %vm1079, %v1019, 0
      %v1093 = vsel %vm1079, %v1020, 0
      %v1096 = vsel %vm1079, %v1021, 0
      %v1099 = vsel %vm1079, %v1022, 0
      %v1102 = vsel %vm1079, %v1023, 0
      %v1105 = vsel %vm1079, %v1024, 0
      %v1108 = vsel %vm1079, %v1025, 0
      %v1111 = vsel %vm1079, %v1026, 0
      %v1114 = vsel %vm1079, %v1027, 0
      %v1117 = vsel %vm1079, %v1028, 0
      %v1120 = vsel %vm1079, %v1029, 0
      %v1123 = vsel %vm1079, %v1030, 0
      %v1126 = vsel %vm1079, %v1031, 0
      %v1129 = vsel %vm1079, %v1032, 0
      %v1132 = vsel %vm1079, %v1033, 0
      %v1135 = vsel %vm1079, %v1034, 0
      %v1138 = vsel %vm1079, %v1035, 0
      %v1141 = vsel %vm1079, %v1036, 0
      %v1144 = vsel %vm1079, %v1037, 0
      %v1147 = vsel %vm1079, %v1038, 0
      %v1150 = vsel %vm1079, %v1039, 0
      %v1153 = vsel %vm1079, %v1040, 0
      %v1156 = vsel %vm1079, %v1041, 0
      %v1159 = vsel %vm1079, %v1042, 0
      %v1162 = vsel %vm1079, %v1043, 0
      %v1165 = vsel %vm1079, %v1044, 0
      %v1168 = vsel %vm1079, %v1045, 0
      %v1171 = vsel %vm1079, %v1074, 0
      %v1174 = vsel %vm1079, %v1075, 0
      %vm1176 = vcmask 1043456
      %v1178 = vsel %vm1176, %v1078, 0
      %1180 = vmatprep.subr.mxu0 0.0
      %1181 = vmatpush1.msra.mxu0 %v1077
      %1182 = vmatprep.subr.mxu0 0.0
      %1183 = vmatpush1.msra.mxu0 %v1178
      %1184 = vmatprep.subr.mxu0 0.0
      %1185 = vmatpush1.msra.mxu0 0.0
      %1186 = vmatprep.subr.mxu0 0.0
      %1187 = vmatpush1.msra.mxu0 0.0
      %1188 = vmatprep.subr.mxu0 0.0
      %1189 = vmatpush1.msra.mxu0 0.0
      %1190 = vmatprep.subr.mxu0 0.0
      %1191 = vmatpush1.msra.mxu0 0.0
      %1192 = vmatprep.subr.mxu0 0.0
      %1193 = vmatpush1.msra.mxu0 0.0
      %1194 = vmatprep.subr.mxu0 0.0
      %1195 = vmatpush1.msra.mxu0 0.0
      %1196 = vmatprep.subr.mxu0 0.0
      %1197 = vmatpush1.msra.mxu0 0.0
      %1198 = vmatprep.subr.mxu0 0.0
      %1199 = vmatpush1.msra.mxu0 0.0
      %1200 = vmatprep.subr.mxu0 0.0
      %1201 = vmatpush1.msra.mxu0 0.0
      %1202 = vmatprep.subr.mxu0 0.0
      %1203 = vmatpush1.msra.mxu0 0.0
      %1204 = vmatprep.subr.mxu0 0.0
      %1205 = vmatpush1.msra.mxu0 0.0
      %1206 = vmatprep.subr.mxu0 0.0
      %1207 = vmatpush1.msra.mxu0 0.0
      %1208 = vmatprep.subr.mxu0 0.0
      %1209 = vmatpush1.msra.mxu0 0.0
      %1210 = vmatprep.subr.mxu0 0.0
      %1211 = vmatpush1.msra.mxu0 0.0
      %1212 = vmatprep.subr.mxu0 0.0
      %1213 = vmatpush1.msra.mxu0 0.0
      %1214 = vmatprep.subr.mxu0 0.0
      %1215 = vmatpush1.msra.mxu0 0.0
      %1216 = vmatprep.subr.mxu0 0.0
      %1217 = vmatpush1.msra.mxu0 0.0
      %1218 = vmatprep.subr.mxu0 0.0
      %1219 = vmatpush1.msra.mxu0 0.0
      %1220 = vmatprep.subr.mxu0 0.0
      %1221 = vmatpush1.msra.mxu0 0.0
      %1222 = vmatprep.subr.mxu0 0.0
      %1223 = vmatpush1.msra.mxu0 0.0
      %1224 = vmatprep.subr.mxu0 0.0
      %1225 = vmatpush1.msra.mxu0 0.0
      %1226 = vmatprep.subr.mxu0 0.0
      %1227 = vmatpush1.msra.mxu0 0.0
      %1228 = vmatprep.subr.mxu0 0.0
      %1229 = vmatpush1.msra.mxu0 0.0
      %1230 = vmatprep.subr.mxu0 0.0
      %1231 = vmatpush1.msra.mxu0 0.0
      %1232 = vmatprep.subr.mxu0 0.0
      %1233 = vmatpush1.msra.mxu0 0.0
      %1234 = vmatprep.subr.mxu0 0.0
      %1235 = vmatpush1.msra.mxu0 0.0
      %1236 = vmatprep.subr.mxu0 0.0
      %1237 = vmatpush1.msra.mxu0 0.0
      %1238 = vmatprep.subr.mxu0 0.0
      %1239 = vmatpush1.msra.mxu0 0.0
      %1240 = vmatprep.subr.mxu0 0.0
      %1241 = vmatpush1.msra.mxu0 0.0
      %1242 = vmatprep.subr.mxu0 0.0
      %1243 = vmatpush1.msra.mxu0 0.0
      %1244 = vmatprep.mubr.f32.mxu0 0.0
      %1245 = vmatmul.mubr.f32.gmra.mrb[0].mxu0 %v1081
      %v1246 = vpop.f32.mrb[0].mxu0
      %v1247 = vadd.f32 0.0, %v1246
      %v1248 = vpop.f32.mrb[0].mxu0
      %1249 = vmatprep.mubr.f32.mxu0 0.0
      %1250 = vmatmul.mubr.f32.gmra.mrb[0].mxu0 %v1084
      %v1251 = vpop.f32.mrb[0].mxu0
      %v1252 = vadd.f32 0.0, %v1251
      %v1253 = vpop.f32.mrb[0].mxu0
      %1254 = vmatprep.mubr.f32.mxu0 0.0
      %1255 = vmatmul.mubr.f32.gmra.mrb[0].mxu0 %v1087
      %v1256 = vpop.f32.mrb[0].mxu0
      %v1257 = vadd.f32 0.0, %v1256
      %v1258 = vpop.f32.mrb[0].mxu0
      %1259 = vmatprep.mubr.f32.mxu0 0.0
      %1260 = vmatmul.mubr.f32.gmra.mrb[0].mxu0 %v1090
      %v1261 = vpop.f32.mrb[0].mxu0
      %v1262 = vadd.f32 0.0, %v1261
      %v1263 = vpop.f32.mrb[0].mxu0
      %1264 = vmatprep.mubr.f32.mxu0 0.0
      %1265 = vmatmul.mubr.f32.gmra.mrb[0].mxu0 %v1093
      %v1266 = vpop.f32.mrb[0].mxu0
      %v1267 = vadd.f32 0.0, %v1266
      %v1268 = vpop.f32.mrb[0].mxu0
      %1269 = vmatprep.mubr.f32.mxu0 0.0
      %1270 = vmatmul.mubr.f32.gmra.mrb[0].mxu0 %v1096
      %v1271 = vpop.f32.mrb[0].mxu0
      %v1272 = vadd.f32 0.0, %v1271
      %v1273 = vpop.f32.mrb[0].mxu0
      %1274 = vmatprep.mubr.f32.mxu0 0.0
      %1275 = vmatmul.mubr.f32.gmra.mrb[0].mxu0 %v1099
      %v1276 = vpop.f32.mrb[0].mxu0
      %v1277 = vadd.f32 0.0, %v1276
      %v1278 = vpop.f32.mrb[0].mxu0
      %1279 = vmatprep.mubr.f32.mxu0 0.0
      %1280 = vmatmul.mubr.f32.gmra.mrb[0].mxu0 %v1102
      %v1281 = vpop.f32.mrb[0].mxu0
      %v1282 = vadd.f32 0.0, %v1281
      %v1283 = vpop.f32.mrb[0].mxu0
      %1284 = vmatprep.mubr.f32.mxu0 0.0
      %1285 = vmatmul.mubr.f32.gmra.mrb[0].mxu0 %v1105
      %v1286 = vpop.f32.mrb[0].mxu0
      %v1287 = vadd.f32 0.0, %v1286
      %v1288 = vpop.f32.mrb[0].mxu0
      %1289 = vmatprep.mubr.f32.mxu0 0.0
      %1290 = vmatmul.mubr.f32.gmra.mrb[0].mxu0 %v1108
      %v1291 = vpop.f32.mrb[0].mxu0
      %v1292 = vadd.f32 0.0, %v1291
      %v1293 = vpop.f32.mrb[0].mxu0
      %1294 = vmatprep.mubr.f32.mxu0 0.0
      %1295 = vmatmul.mubr.f32.gmra.mrb[0].mxu0 %v1111
      %v1296 = vpop.f32.mrb[0].mxu0
      %v1297 = vadd.f32 0.0, %v1296
      %v1298 = vpop.f32.mrb[0].mxu0
      %1299 = vmatprep.mubr.f32.mxu0 0.0
      %1300 = vmatmul.mubr.f32.gmra.mrb[0].mxu0 %v1114
      %v1301 = vpop.f32.mrb[0].mxu0
      %v1302 = vadd.f32 0.0, %v1301
      %v1303 = vpop.f32.mrb[0].mxu0
      %1304 = vmatprep.mubr.f32.mxu0 0.0
      %1305 = vmatmul.mubr.f32.gmra.mrb[0].mxu0 %v1117
      %v1306 = vpop.f32.mrb[0].mxu0
      %v1307 = vadd.f32 0.0, %v1306
      %v1308 = vpop.f32.mrb[0].mxu0
      %1309 = vmatprep.mubr.f32.mxu0 0.0
      %1310 = vmatmul.mubr.f32.gmra.mrb[0].mxu0 %v1120
      %v1311 = vpop.f32.mrb[0].mxu0
      %v1312 = vadd.f32 0.0, %v1311
      %v1313 = vpop.f32.mrb[0].mxu0
      %1314 = vmatprep.mubr.f32.mxu0 0.0
      %1315 = vmatmul.mubr.f32.gmra.mrb[0].mxu0 %v1123
      %v1316 = vpop.f32.mrb[0].mxu0
      %v1317 = vadd.f32 0.0, %v1316
      %v1318 = vpop.f32.mrb[0].mxu0
      %1319 = vmatprep.mubr.f32.mxu0 0.0
      %1320 = vmatmul.mubr.f32.gmra.mrb[0].mxu0 %v1126
      %v1321 = vpop.f32.mrb[0].mxu0
      %v1322 = vadd.f32 0.0, %v1321
      %v1323 = vpop.f32.mrb[0].mxu0
      %1324 = vmatprep.mubr.f32.mxu0 0.0
      %1325 = vmatmul.mubr.f32.gmra.mrb[0].mxu0 %v1129
      %v1326 = vpop.f32.mrb[0].mxu0
      %v1327 = vadd.f32 0.0, %v1326
      %v1328 = vpop.f32.mrb[0].mxu0
      %1329 = vmatprep.mubr.f32.mxu0 0.0
      %1330 = vmatmul.mubr.f32.gmra.mrb[0].mxu0 %v1132
      %v1331 = vpop.f32.mrb[0].mxu0
      %v1332 = vadd.f32 0.0, %v1331
      %v1333 = vpop.f32.mrb[0].mxu0
      %1334 = vmatprep.mubr.f32.mxu0 0.0
      %1335 = vmatmul.mubr.f32.gmra.mrb[0].mxu0 %v1135
      %v1336 = vpop.f32.mrb[0].mxu0
      %v1337 = vadd.f32 0.0, %v1336
      %v1338 = vpop.f32.mrb[0].mxu0
      %1339 = vmatprep.mubr.f32.mxu0 0.0
      %1340 = vmatmul.mubr.f32.gmra.mrb[0].mxu0 %v1138
      %v1341 = vpop.f32.mrb[0].mxu0
      %v1342 = vadd.f32 0.0, %v1341
      %v1343 = vpop.f32.mrb[0].mxu0
      %1344 = vmatprep.mubr.f32.mxu0 0.0
      %1345 = vmatmul.mubr.f32.gmra.mrb[0].mxu0 %v1141
      %v1346 = vpop.f32.mrb[0].mxu0
      %v1347 = vadd.f32 0.0, %v1346
      %v1348 = vpop.f32.mrb[0].mxu0
      %1349 = vmatprep.mubr.f32.mxu0 0.0
      %1350 = vmatmul.mubr.f32.gmra.mrb[0].mxu0 %v1144
      %v1351 = vpop.f32.mrb[0].mxu0
      %v1352 = vadd.f32 0.0, %v1351
      %v1353 = vpop.f32.mrb[0].mxu0
      %1354 = vmatprep.mubr.f32.mxu0 0.0
      %1355 = vmatmul.mubr.f32.gmra.mrb[0].mxu0 %v1147
      %v1356 = vpop.f32.mrb[0].mxu0
      %v1357 = vadd.f32 0.0, %v1356
      %v1358 = vpop.f32.mrb[0].mxu0
      %1359 = vmatprep.mubr.f32.mxu0 0.0
      %1360 = vmatmul.mubr.f32.gmra.mrb[0].mxu0 %v1150
      %v1361 = vpop.f32.mrb[0].mxu0
      %v1362 = vadd.f32 0.0, %v1361
      %v1363 = vpop.f32.mrb[0].mxu0
      %1364 = vmatprep.mubr.f32.mxu0 0.0
      %1365 = vmatmul.mubr.f32.gmra.mrb[0].mxu0 %v1153
      %v1366 = vpop.f32.mrb[0].mxu0
      %v1367 = vadd.f32 0.0, %v1366
      %v1368 = vpop.f32.mrb[0].mxu0
      %1369 = vmatprep.mubr.f32.mxu0 0.0
      %1370 = vmatmul.mubr.f32.gmra.mrb[0].mxu0 %v1156
      %v1371 = vpop.f32.mrb[0].mxu0
      %v1372 = vadd.f32 0.0, %v1371
      %v1373 = vpop.f32.mrb[0].mxu0
      %1374 = vmatprep.mubr.f32.mxu0 0.0
      %1375 = vmatmul.mubr.f32.gmra.mrb[0].mxu0 %v1159
      %v1376 = vpop.f32.mrb[0].mxu0
      %v1377 = vadd.f32 0.0, %v1376
      %v1378 = vpop.f32.mrb[0].mxu0
      %1379 = vmatprep.mubr.f32.mxu0 0.0
      %1380 = vmatmul.mubr.f32.gmra.mrb[0].mxu0 %v1162
      %v1381 = vpop.f32.mrb[0].mxu0
      %v1382 = vadd.f32 0.0, %v1381
      %v1383 = vpop.f32.mrb[0].mxu0
      %1384 = vmatprep.mubr.f32.mxu0 0.0
      %1385 = vmatmul.mubr.f32.gmra.mrb[0].mxu0 %v1165
      %v1386 = vpop.f32.mrb[0].mxu0
      %v1387 = vadd.f32 0.0, %v1386
      %v1388 = vpop.f32.mrb[0].mxu0
      %1389 = vmatprep.mubr.f32.mxu0 0.0
      %1390 = vmatmul.mubr.f32.gmra.mrb[0].mxu0 %v1168
      %v1391 = vpop.f32.mrb[0].mxu0
      %v1392 = vadd.f32 0.0, %v1391
      %v1393 = vpop.f32.mrb[0].mxu0
      %1394 = vmatprep.mubr.f32.mxu0 0.0
      %1395 = vmatmul.mubr.f32.gmra.mrb[0].mxu0 %v1171
      %v1396 = vpop.f32.mrb[0].mxu0
      %v1397 = vadd.f32 0.0, %v1396
      %v1398 = vpop.f32.mrb[0].mxu0
      %1399 = vmatprep.mubr.f32.mxu0 0.0
      %1400 = vmatmul.mubr.f32.gmra.mrb[0].mxu0 %v1174
      %v1401 = vpop.f32.mrb[0].mxu0
      %v1402 = vadd.f32 0.0, %v1401
      %v1403 = vpop.f32.mrb[0].mxu0
      %1404 = vdwg.mxu0
      %v1406 = vsel %vm1079, %v1015, 0
      %v1409 = vsel %vm1176, %v1047, 0
      %1411 = vmatprep.subr.mxu0 0.0
      %1412 = vmatpush1.msra.mxu0 %v1046
      %1413 = vmatprep.subr.mxu0 0.0
      %1414 = vmatpush1.msra.mxu0 %v1409
      %1415 = vmatprep.subr.mxu0 0.0
      %1416 = vmatpush1.msra.mxu0 0.0
      %1417 = vmatprep.subr.mxu0 0.0
      %1418 = vmatpush1.msra.mxu0 0.0
      %1419 = vmatprep.subr.mxu0 0.0
      %1420 = vmatpush1.msra.mxu0 0.0
      %1421 = vmatprep.subr.mxu0 0.0
      %1422 = vmatpush1.msra.mxu0 0.0
      %1423 = vmatprep.subr.mxu0 0.0
      %1424 = vmatpush1.msra.mxu0 0.0
      %1425 = vmatprep.subr.mxu0 0.0
      %1426 = vmatpush1.msra.mxu0 0.0
      %1427 = vmatprep.subr.mxu0 0.0
      %1428 = vmatpush1.msra.mxu0 0.0
      %1429 = vmatprep.subr.mxu0 0.0
      %1430 = vmatpush1.msra.mxu0 0.0
      %1431 = vmatprep.subr.mxu0 0.0
      %1432 = vmatpush1.msra.mxu0 0.0
      %1433 = vmatprep.subr.mxu0 0.0
      %1434 = vmatpush1.msra.mxu0 0.0
      %1435 = vmatprep.subr.mxu0 0.0
      %1436 = vmatpush1.msra.mxu0 0.0
      %1437 = vmatprep.subr.mxu0 0.0
      %1438 = vmatpush1.msra.mxu0 0.0
      %1439 = vmatprep.subr.mxu0 0.0
      %1440 = vmatpush1.msra.mxu0 0.0
      %1441 = vmatprep.subr.mxu0 0.0
      %1442 = vmatpush1.msra.mxu0 0.0
      %1443 = vmatprep.subr.mxu0 0.0
      %1444 = vmatpush1.msra.mxu0 0.0
      %1445 = vmatprep.subr.mxu0 0.0
      %1446 = vmatpush1.msra.mxu0 0.0
      %1447 = vmatprep.subr.mxu0 0.0
      %1448 = vmatpush1.msra.mxu0 0.0
      %1449 = vmatprep.subr.mxu0 0.0
      %1450 = vmatpush1.msra.mxu0 0.0
      %1451 = vmatprep.subr.mxu0 0.0
      %1452 = vmatpush1.msra.mxu0 0.0
      %1453 = vmatprep.subr.mxu0 0.0
      %1454 = vmatpush1.msra.mxu0 0.0
      %1455 = vmatprep.subr.mxu0 0.0
      %1456 = vmatpush1.msra.mxu0 0.0
      %1457 = vmatprep.subr.mxu0 0.0
      %1458 = vmatpush1.msra.mxu0 0.0
      %1459 = vmatprep.subr.mxu0 0.0
      %1460 = vmatpush1.msra.mxu0 0.0
      %1461 = vmatprep.subr.mxu0 0.0
      %1462 = vmatpush1.msra.mxu0 0.0
      %1463 = vmatprep.subr.mxu0 0.0
      %1464 = vmatpush1.msra.mxu0 0.0
      %1465 = vmatprep.subr.mxu0 0.0
      %1466 = vmatpush1.msra.mxu0 0.0
      %1467 = vmatprep.subr.mxu0 0.0
      %1468 = vmatpush1.msra.mxu0 0.0
      %1469 = vmatprep.subr.mxu0 0.0
      %1470 = vmatpush1.msra.mxu0 0.0
      %1471 = vmatprep.subr.mxu0 0.0
      %1472 = vmatpush1.msra.mxu0 0.0
      %1473 = vmatprep.subr.mxu0 0.0
      %1474 = vmatpush1.msra.mxu0 0.0
      %1475 = vmatprep.mubr.f32.mxu0 0.0
      %1476 = vmatmul.mubr.f32.gmra.mrb[0].mxu0 %v1406
      %v1477 = vpop.f32.mrb[0].mxu0
      %v1478 = vadd.f32 %v1247, %v1477
      %v1479 = vpop.f32.mrb[0].mxu0
      %1480 = vmatprep.mubr.f32.mxu0 0.0
      %1481 = vmatmul.mubr.f32.gmra.mrb[0].mxu0 %v1406
      %v1482 = vpop.f32.mrb[0].mxu0
      %v1483 = vadd.f32 %v1252, %v1482
      %v1484 = vpop.f32.mrb[0].mxu0
      %1485 = vmatprep.mubr.f32.mxu0 0.0
      %1486 = vmatmul.mubr.f32.gmra.mrb[0].mxu0 %v1081
      %v1487 = vpop.f32.mrb[0].mxu0
      %v1488 = vadd.f32 %v1257, %v1487
      %v1489 = vpop.f32.mrb[0].mxu0
      %1490 = vmatprep.mubr.f32.mxu0 0.0
      %1491 = vmatmul.mubr.f32.gmra.mrb[0].mxu0 %v1084
      %v1492 = vpop.f32.mrb[0].mxu0
      %v1493 = vadd.f32 %v1262, %v1492
      %v1494 = vpop.f32.mrb[0].mxu0
      %1495 = vmatprep.mubr.f32.mxu0 0.0
      %1496 = vmatmul.mubr.f32.gmra.mrb[0].mxu0 %v1087
      %v1497 = vpop.f32.mrb[0].mxu0
      %v1498 = vadd.f32 %v1267, %v1497
      %v1499 = vpop.f32.mrb[0].mxu0
      %1500 = vmatprep.mubr.f32.mxu0 0.0
      %1501 = vmatmul.mubr.f32.gmra.mrb[0].mxu0 %v1090
      %v1502 = vpop.f32.mrb[0].mxu0
      %v1503 = vadd.f32 %v1272, %v1502
      %v1504 = vpop.f32.mrb[0].mxu0
      %1505 = vmatprep.mubr.f32.mxu0 0.0
      %1506 = vmatmul.mubr.f32.gmra.mrb[0].mxu0 %v1093
      %v1507 = vpop.f32.mrb[0].mxu0
      %v1508 = vadd.f32 %v1277, %v1507
      %v1509 = vpop.f32.mrb[0].mxu0
      %1510 = vmatprep.mubr.f32.mxu0 0.0
      %1511 = vmatmul.mubr.f32.gmra.mrb[0].mxu0 %v1096
      %v1512 = vpop.f32.mrb[0].mxu0
      %v1513 = vadd.f32 %v1282, %v1512
      %v1514 = vpop.f32.mrb[0].mxu0
      %1515 = vmatprep.mubr.f32.mxu0 0.0
      %1516 = vmatmul.mubr.f32.gmra.mrb[0].mxu0 %v1099
      %v1517 = vpop.f32.mrb[0].mxu0
      %v1518 = vadd.f32 %v1287, %v1517
      %v1519 = vpop.f32.mrb[0].mxu0
      %1520 = vmatprep.mubr.f32.mxu0 0.0
      %1521 = vmatmul.mubr.f32.gmra.mrb[0].mxu0 %v1102
      %v1522 = vpop.f32.mrb[0].mxu0
      %v1523 = vadd.f32 %v1292, %v1522
      %v1524 = vpop.f32.mrb[0].mxu0
      %1525 = vmatprep.mubr.f32.mxu0 0.0
      %1526 = vmatmul.mubr.f32.gmra.mrb[0].mxu0 %v1105
      %v1527 = vpop.f32.mrb[0].mxu0
      %v1528 = vadd.f32 %v1297, %v1527
      %v1529 = vpop.f32.mrb[0].mxu0
      %1530 = vmatprep.mubr.f32.mxu0 0.0
      %1531 = vmatmul.mubr.f32.gmra.mrb[0].mxu0 %v1108
      %v1532 = vpop.f32.mrb[0].mxu0
      %v1533 = vadd.f32 %v1302, %v1532
      %v1534 = vpop.f32.mrb[0].mxu0
      %1535 = vmatprep.mubr.f32.mxu0 0.0
      %1536 = vmatmul.mubr.f32.gmra.mrb[0].mxu0 %v1111
      %v1537 = vpop.f32.mrb[0].mxu0
      %v1538 = vadd.f32 %v1307, %v1537
      %v1539 = vpop.f32.mrb[0].mxu0
      %1540 = vmatprep.mubr.f32.mxu0 0.0
      %1541 = vmatmul.mubr.f32.gmra.mrb[0].mxu0 %v1114
      %v1542 = vpop.f32.mrb[0].mxu0
      %v1543 = vadd.f32 %v1312, %v1542
      %v1544 = vpop.f32.mrb[0].mxu0
      %1545 = vmatprep.mubr.f32.mxu0 0.0
      %1546 = vmatmul.mubr.f32.gmra.mrb[0].mxu0 %v1117
      %v1547 = vpop.f32.mrb[0].mxu0
      %v1548 = vadd.f32 %v1317, %v1547
      %v1549 = vpop.f32.mrb[0].mxu0
      %1550 = vmatprep.mubr.f32.mxu0 0.0
      %1551 = vmatmul.mubr.f32.gmra.mrb[0].mxu0 %v1120
      %v1552 = vpop.f32.mrb[0].mxu0
      %v1553 = vadd.f32 %v1322, %v1552
      %v1554 = vpop.f32.mrb[0].mxu0
      %1555 = vmatprep.mubr.f32.mxu0 0.0
      %1556 = vmatmul.mubr.f32.gmra.mrb[0].mxu0 %v1123
      %v1557 = vpop.f32.mrb[0].mxu0
      %v1558 = vadd.f32 %v1327, %v1557
      %v1559 = vpop.f32.mrb[0].mxu0
      %1560 = vmatprep.mubr.f32.mxu0 0.0
      %1561 = vmatmul.mubr.f32.gmra.mrb[0].mxu0 %v1126
      %v1562 = vpop.f32.mrb[0].mxu0
      %v1563 = vadd.f32 %v1332, %v1562
      %v1564 = vpop.f32.mrb[0].mxu0
      %1565 = vmatprep.mubr.f32.mxu0 0.0
      %1566 = vmatmul.mubr.f32.gmra.mrb[0].mxu0 %v1129
      %v1567 = vpop.f32.mrb[0].mxu0
      %v1568 = vadd.f32 %v1337, %v1567
      %v1569 = vpop.f32.mrb[0].mxu0
      %1570 = vmatprep.mubr.f32.mxu0 0.0
      %1571 = vmatmul.mubr.f32.gmra.mrb[0].mxu0 %v1132
      %v1572 = vpop.f32.mrb[0].mxu0
      %v1573 = vadd.f32 %v1342, %v1572
      %v1574 = vpop.f32.mrb[0].mxu0
      %1575 = vmatprep.mubr.f32.mxu0 0.0
      %1576 = vmatmul.mubr.f32.gmra.mrb[0].mxu0 %v1135
      %v1577 = vpop.f32.mrb[0].mxu0
      %v1578 = vadd.f32 %v1347, %v1577
      %v1579 = vpop.f32.mrb[0].mxu0
      %1580 = vmatprep.mubr.f32.mxu0 0.0
      %1581 = vmatmul.mubr.f32.gmra.mrb[0].mxu0 %v1138
      %v1582 = vpop.f32.mrb[0].mxu0
      %v1583 = vadd.f32 %v1352, %v1582
      %v1584 = vpop.f32.mrb[0].mxu0
      %1585 = vmatprep.mubr.f32.mxu0 0.0
      %1586 = vmatmul.mubr.f32.gmra.mrb[0].mxu0 %v1141
      %v1587 = vpop.f32.mrb[0].mxu0
      %v1588 = vadd.f32 %v1357, %v1587
      %v1589 = vpop.f32.mrb[0].mxu0
      %1590 = vmatprep.mubr.f32.mxu0 0.0
      %1591 = vmatmul.mubr.f32.gmra.mrb[0].mxu0 %v1144
      %v1592 = vpop.f32.mrb[0].mxu0
      %v1593 = vadd.f32 %v1362, %v1592
      %v1594 = vpop.f32.mrb[0].mxu0
      %1595 = vmatprep.mubr.f32.mxu0 0.0
      %1596 = vmatmul.mubr.f32.gmra.mrb[0].mxu0 %v1147
      %v1597 = vpop.f32.mrb[0].mxu0
      %v1598 = vadd.f32 %v1367, %v1597
      %v1599 = vpop.f32.mrb[0].mxu0
      %1600 = vmatprep.mubr.f32.mxu0 0.0
      %1601 = vmatmul.mubr.f32.gmra.mrb[0].mxu0 %v1150
      %v1602 = vpop.f32.mrb[0].mxu0
      %v1603 = vadd.f32 %v1372, %v1602
      %v1604 = vpop.f32.mrb[0].mxu0
      %1605 = vmatprep.mubr.f32.mxu0 0.0
      %1606 = vmatmul.mubr.f32.gmra.mrb[0].mxu0 %v1153
      %v1607 = vpop.f32.mrb[0].mxu0
      %v1608 = vadd.f32 %v1377, %v1607
      %v1609 = vpop.f32.mrb[0].mxu0
      %1610 = vmatprep.mubr.f32.mxu0 0.0
      %1611 = vmatmul.mubr.f32.gmra.mrb[0].mxu0 %v1156
      %v1612 = vpop.f32.mrb[0].mxu0
      %v1613 = vadd.f32 %v1382, %v1612
      %v1614 = vpop.f32.mrb[0].mxu0
      %1615 = vmatprep.mubr.f32.mxu0 0.0
      %1616 = vmatmul.mubr.f32.gmra.mrb[0].mxu0 %v1159
      %v1617 = vpop.f32.mrb[0].mxu0
      %v1618 = vadd.f32 %v1387, %v1617
      %v1619 = vpop.f32.mrb[0].mxu0
      %1620 = vmatprep.mubr.f32.mxu0 0.0
      %1621 = vmatmul.mubr.f32.gmra.mrb[0].mxu0 %v1162
      %v1622 = vpop.f32.mrb[0].mxu0
      %v1623 = vadd.f32 %v1392, %v1622
      %v1624 = vpop.f32.mrb[0].mxu0
      %1625 = vmatprep.mubr.f32.mxu0 0.0
      %1626 = vmatmul.mubr.f32.gmra.mrb[0].mxu0 %v1165
      %v1627 = vpop.f32.mrb[0].mxu0
      %v1628 = vadd.f32 %v1397, %v1627
      %v1629 = vpop.f32.mrb[0].mxu0
      %1630 = vmatprep.mubr.f32.mxu0 0.0
      %1631 = vmatmul.mubr.f32.gmra.mrb[0].mxu0 %v1168
      %v1632 = vpop.f32.mrb[0].mxu0
      %v1633 = vadd.f32 %v1402, %v1632
      %v1634 = vpop.f32.mrb[0].mxu0
      %1635 = vdwg.mxu0
      %s1636 = scalar_lea.vmem %s3, 32
      %v1637 = vld [vmem:[%s1636] sm:$0xff]
      %v1638 = vld [vmem:[%s1636 + $0x8] sm:$0xf]
      %v1640 = vsel %vm1176, %v1638, 0
      %1642 = vmatprep.subr.mxu0 0.0
      %1643 = vmatpush1.msra.mxu0 %v1637
      %1644 = vmatprep.subr.mxu0 0.0
      %1645 = vmatpush1.msra.mxu0 %v1640
      %1646 = vmatprep.subr.mxu0 0.0
      %1647 = vmatpush1.msra.mxu0 0.0
      %1648 = vmatprep.subr.mxu0 0.0
      %1649 = vmatpush1.msra.mxu0 0.0
      %1650 = vmatprep.subr.mxu0 0.0
      %1651 = vmatpush1.msra.mxu0 0.0
      %1652 = vmatprep.subr.mxu0 0.0
      %1653 = vmatpush1.msra.mxu0 0.0
      %1654 = vmatprep.subr.mxu0 0.0
      %1655 = vmatpush1.msra.mxu0 0.0
      %1656 = vmatprep.subr.mxu0 0.0
      %1657 = vmatpush1.msra.mxu0 0.0
      %1658 = vmatprep.subr.mxu0 0.0
      %1659 = vmatpush1.msra.mxu0 0.0
      %1660 = vmatprep.subr.mxu0 0.0
      %1661 = vmatpush1.msra.mxu0 0.0
      %1662 = vmatprep.subr.mxu0 0.0
      %1663 = vmatpush1.msra.mxu0 0.0
      %1664 = vmatprep.subr.mxu0 0.0
      %1665 = vmatpush1.msra.mxu0 0.0
      %1666 = vmatprep.subr.mxu0 0.0
      %1667 = vmatpush1.msra.mxu0 0.0
      %1668 = vmatprep.subr.mxu0 0.0
      %1669 = vmatpush1.msra.mxu0 0.0
      %1670 = vmatprep.subr.mxu0 0.0
      %1671 = vmatpush1.msra.mxu0 0.0
      %1672 = vmatprep.subr.mxu0 0.0
      %1673 = vmatpush1.msra.mxu0 0.0
      %1674 = vmatprep.subr.mxu0 0.0
      %1675 = vmatpush1.msra.mxu0 0.0
      %1676 = vmatprep.subr.mxu0 0.0
      %1677 = vmatpush1.msra.mxu0 0.0
      %1678 = vmatprep.subr.mxu0 0.0
      %1679 = vmatpush1.msra.mxu0 0.0
      %1680 = vmatprep.subr.mxu0 0.0
      %1681 = vmatpush1.msra.mxu0 0.0
      %1682 = vmatprep.subr.mxu0 0.0
      %1683 = vmatpush1.msra.mxu0 0.0
      %1684 = vmatprep.subr.mxu0 0.0
      %1685 = vmatpush1.msra.mxu0 0.0
      %1686 = vmatprep.subr.mxu0 0.0
      %1687 = vmatpush1.msra.mxu0 0.0
      %1688 = vmatprep.subr.mxu0 0.0
      %1689 = vmatpush1.msra.mxu0 0.0
      %1690 = vmatprep.subr.mxu0 0.0
      %1691 = vmatpush1.msra.mxu0 0.0
      %1692 = vmatprep.subr.mxu0 0.0
      %1693 = vmatpush1.msra.mxu0 0.0
      %1694 = vmatprep.subr.mxu0 0.0
      %1695 = vmatpush1.msra.mxu0 0.0
      %1696 = vmatprep.subr.mxu0 0.0
      %1697 = vmatpush1.msra.mxu0 0.0
      %1698 = vmatprep.subr.mxu0 0.0
      %1699 = vmatpush1.msra.mxu0 0.0
      %1700 = vmatprep.subr.mxu0 0.0
      %1701 = vmatpush1.msra.mxu0 0.0
      %1702 = vmatprep.subr.mxu0 0.0
      %1703 = vmatpush1.msra.mxu0 0.0
      %1704 = vmatprep.subr.mxu0 0.0
      %1705 = vmatpush1.msra.mxu0 0.0
      %1706 = vmatprep.mubr.f32.mxu0 0.0
      %1707 = vmatmul.mubr.f32.gmra.mrb[0].mxu0 %v1087
      %v1708 = vpop.f32.mrb[0].mxu0
      %v1709 = vadd.f32 0.0, %v1708
      %v1710 = vpop.f32.mrb[0].mxu0
      %1711 = vmatprep.mubr.f32.mxu0 0.0
      %1712 = vmatmul.mubr.f32.gmra.mrb[0].mxu0 %v1090
      %v1713 = vpop.f32.mrb[0].mxu0
      %v1714 = vadd.f32 0.0, %v1713
      %v1715 = vpop.f32.mrb[0].mxu0
      %1716 = vmatprep.mubr.f32.mxu0 0.0
      %1717 = vmatmul.mubr.f32.gmra.mrb[0].mxu0 %v1093
      %v1718 = vpop.f32.mrb[0].mxu0
      %v1719 = vadd.f32 0.0, %v1718
      %v1720 = vpop.f32.mrb[0].mxu0
      %1721 = vmatprep.mubr.f32.mxu0 0.0
      %1722 = vmatmul.mubr.f32.gmra.mrb[0].mxu0 %v1096
      %v1723 = vpop.f32.mrb[0].mxu0
      %v1724 = vadd.f32 0.0, %v1723
      %v1725 = vpop.f32.mrb[0].mxu0
      %1726 = vmatprep.mubr.f32.mxu0 0.0
      %1727 = vmatmul.mubr.f32.gmra.mrb[0].mxu0 %v1099
      %v1728 = vpop.f32.mrb[0].mxu0
      %v1729 = vadd.f32 0.0, %v1728
      %v1730 = vpop.f32.mrb[0].mxu0
      %1731 = vmatprep.mubr.f32.mxu0 0.0
      %1732 = vmatmul.mubr.f32.gmra.mrb[0].mxu0 %v1102
      %v1733 = vpop.f32.mrb[0].mxu0
      %v1734 = vadd.f32 0.0, %v1733
      %v1735 = vpop.f32.mrb[0].mxu0
      %1736 = vmatprep.mubr.f32.mxu0 0.0
      %1737 = vmatmul.mubr.f32.gmra.mrb[0].mxu0 %v1105
      %v1738 = vpop.f32.mrb[0].mxu0
      %v1739 = vadd.f32 0.0, %v1738
      %v1740 = vpop.f32.mrb[0].mxu0
      %1741 = vmatprep.mubr.f32.mxu0 0.0
      %1742 = vmatmul.mubr.f32.gmra.mrb[0].mxu0 %v1108
      %v1743 = vpop.f32.mrb[0].mxu0
      %v1744 = vadd.f32 0.0, %v1743
      %v1745 = vpop.f32.mrb[0].mxu0
      %1746 = vmatprep.mubr.f32.mxu0 0.0
      %1747 = vmatmul.mubr.f32.gmra.mrb[0].mxu0 %v1111
      %v1748 = vpop.f32.mrb[0].mxu0
      %v1749 = vadd.f32 0.0, %v1748
      %v1750 = vpop.f32.mrb[0].mxu0
      %1751 = vmatprep.mubr.f32.mxu0 0.0
      %1752 = vmatmul.mubr.f32.gmra.mrb[0].mxu0 %v1114
      %v1753 = vpop.f32.mrb[0].mxu0
      %v1754 = vadd.f32 0.0, %v1753
      %v1755 = vpop.f32.mrb[0].mxu0
      %1756 = vmatprep.mubr.f32.mxu0 0.0
      %1757 = vmatmul.mubr.f32.gmra.mrb[0].mxu0 %v1117
      %v1758 = vpop.f32.mrb[0].mxu0
      %v1759 = vadd.f32 0.0, %v1758
      %v1760 = vpop.f32.mrb[0].mxu0
      %1761 = vmatprep.mubr.f32.mxu0 0.0
      %1762 = vmatmul.mubr.f32.gmra.mrb[0].mxu0 %v1120
      %v1763 = vpop.f32.mrb[0].mxu0
      %v1764 = vadd.f32 0.0, %v1763
      %v1765 = vpop.f32.mrb[0].mxu0
      %1766 = vmatprep.mubr.f32.mxu0 0.0
      %1767 = vmatmul.mubr.f32.gmra.mrb[0].mxu0 %v1123
      %v1768 = vpop.f32.mrb[0].mxu0
      %v1769 = vadd.f32 0.0, %v1768
      %v1770 = vpop.f32.mrb[0].mxu0
      %1771 = vmatprep.mubr.f32.mxu0 0.0
      %1772 = vmatmul.mubr.f32.gmra.mrb[0].mxu0 %v1126
      %v1773 = vpop.f32.mrb[0].mxu0
      %v1774 = vadd.f32 0.0, %v1773
      %v1775 = vpop.f32.mrb[0].mxu0
      %1776 = vmatprep.mubr.f32.mxu0 0.0
      %1777 = vmatmul.mubr.f32.gmra.mrb[0].mxu0 %v1129
      %v1778 = vpop.f32.mrb[0].mxu0
      %v1779 = vadd.f32 0.0, %v1778
      %v1780 = vpop.f32.mrb[0].mxu0
      %1781 = vmatprep.mubr.f32.mxu0 0.0
      %1782 = vmatmul.mubr.f32.gmra.mrb[0].mxu0 %v1132
      %v1783 = vpop.f32.mrb[0].mxu0
      %v1784 = vadd.f32 0.0, %v1783
      %v1785 = vpop.f32.mrb[0].mxu0
      %1786 = vmatprep.mubr.f32.mxu0 0.0
      %1787 = vmatmul.mubr.f32.gmra.mrb[0].mxu0 %v1135
      %v1788 = vpop.f32.mrb[0].mxu0
      %v1789 = vadd.f32 0.0, %v1788
      %v1790 = vpop.f32.mrb[0].mxu0
      %1791 = vmatprep.mubr.f32.mxu0 0.0
      %1792 = vmatmul.mubr.f32.gmra.mrb[0].mxu0 %v1138
      %v1793 = vpop.f32.mrb[0].mxu0
      %v1794 = vadd.f32 0.0, %v1793
      %v1795 = vpop.f32.mrb[0].mxu0
      %1796 = vmatprep.mubr.f32.mxu0 0.0
      %1797 = vmatmul.mubr.f32.gmra.mrb[0].mxu0 %v1141
      %v1798 = vpop.f32.mrb[0].mxu0
      %v1799 = vadd.f32 0.0, %v1798
      %v1800 = vpop.f32.mrb[0].mxu0
      %1801 = vmatprep.mubr.f32.mxu0 0.0
      %1802 = vmatmul.mubr.f32.gmra.mrb[0].mxu0 %v1144
      %v1803 = vpop.f32.mrb[0].mxu0
      %v1804 = vadd.f32 0.0, %v1803
      %v1805 = vpop.f32.mrb[0].mxu0
      %1806 = vmatprep.mubr.f32.mxu0 0.0
      %1807 = vmatmul.mubr.f32.gmra.mrb[0].mxu0 %v1147
      %v1808 = vpop.f32.mrb[0].mxu0
      %v1809 = vadd.f32 0.0, %v1808
      %v1810 = vpop.f32.mrb[0].mxu0
      %1811 = vmatprep.mubr.f32.mxu0 0.0
      %1812 = vmatmul.mubr.f32.gmra.mrb[0].mxu0 %v1150
      %v1813 = vpop.f32.mrb[0].mxu0
      %v1814 = vadd.f32 0.0, %v1813
      %v1815 = vpop.f32.mrb[0].mxu0
      %1816 = vmatprep.mubr.f32.mxu0 0.0
      %1817 = vmatmul.mubr.f32.gmra.mrb[0].mxu0 %v1153
      %v1818 = vpop.f32.mrb[0].mxu0
      %v1819 = vadd.f32 0.0, %v1818
      %v1820 = vpop.f32.mrb[0].mxu0
      %1821 = vmatprep.mubr.f32.mxu0 0.0
      %1822 = vmatmul.mubr.f32.gmra.mrb[0].mxu0 %v1156
      %v1823 = vpop.f32.mrb[0].mxu0
      %v1824 = vadd.f32 0.0, %v1823
      %v1825 = vpop.f32.mrb[0].mxu0
      %1826 = vmatprep.mubr.f32.mxu0 0.0
      %1827 = vmatmul.mubr.f32.gmra.mrb[0].mxu0 %v1159
      %v1828 = vpop.f32.mrb[0].mxu0
      %v1829 = vadd.f32 0.0, %v1828
      %v1830 = vpop.f32.mrb[0].mxu0
      %1831 = vmatprep.mubr.f32.mxu0 0.0
      %1832 = vmatmul.mubr.f32.gmra.mrb[0].mxu0 %v1162
      %v1833 = vpop.f32.mrb[0].mxu0
      %v1834 = vadd.f32 0.0, %v1833
      %v1835 = vpop.f32.mrb[0].mxu0
      %1836 = vmatprep.mubr.f32.mxu0 0.0
      %1837 = vmatmul.mubr.f32.gmra.mrb[0].mxu0 %v1165
      %v1838 = vpop.f32.mrb[0].mxu0
      %v1839 = vadd.f32 0.0, %v1838
      %v1840 = vpop.f32.mrb[0].mxu0
      %1841 = vmatprep.mubr.f32.mxu0 0.0
      %1842 = vmatmul.mubr.f32.gmra.mrb[0].mxu0 %v1168
      %v1843 = vpop.f32.mrb[0].mxu0
      %v1844 = vadd.f32 0.0, %v1843
      %v1845 = vpop.f32.mrb[0].mxu0
      %1846 = vmatprep.mubr.f32.mxu0 0.0
      %1847 = vmatmul.mubr.f32.gmra.mrb[0].mxu0 %v1171
      %v1848 = vpop.f32.mrb[0].mxu0
      %v1849 = vadd.f32 0.0, %v1848
      %v1850 = vpop.f32.mrb[0].mxu0
      %1851 = vmatprep.mubr.f32.mxu0 0.0
      %1852 = vmatmul.mubr.f32.gmra.mrb[0].mxu0 %v1174
      %v1853 = vpop.f32.mrb[0].mxu0
      %v1854 = vadd.f32 0.0, %v1853
      %v1855 = vpop.f32.mrb[0].mxu0
      %1856 = vmatprep.mubr.f32.mxu0 0.0
      %1857 = vmatmul.mubr.f32.gmra.mrb[0].mxu0 %v1406
      %v1858 = vpop.f32.mrb[0].mxu0
      %v1859 = vadd.f32 0.0, %v1858
      %v1860 = vpop.f32.mrb[0].mxu0
      %1861 = vmatprep.mubr.f32.mxu0 0.0
      %1862 = vmatmul.mubr.f32.gmra.mrb[0].mxu0 %v1406
      %v1863 = vpop.f32.mrb[0].mxu0
      %v1864 = vadd.f32 0.0, %v1863
      %v1865 = vpop.f32.mrb[0].mxu0
      %1866 = vdwg.mxu0
      %v1867 = vadd.f32 %v1478, %v1709
      %v1868 = vadd.f32 %v1483, %v1714
      %v1869 = vadd.f32 %v1488, %v1719
      %v1870 = vadd.f32 %v1493, %v1724
      %v1871 = vadd.f32 %v1498, %v1729
      %v1872 = vadd.f32 %v1503, %v1734
      %v1873 = vadd.f32 %v1508, %v1739
      %v1874 = vadd.f32 %v1513, %v1744
      %v1875 = vadd.f32 %v1518, %v1749
      %v1876 = vadd.f32 %v1523, %v1754
      %v1877 = vadd.f32 %v1528, %v1759
      %v1878 = vadd.f32 %v1533, %v1764
      %v1879 = vadd.f32 %v1538, %v1769
      %v1880 = vadd.f32 %v1543, %v1774
      %v1881 = vadd.f32 %v1548, %v1779
      %v1882 = vadd.f32 %v1553, %v1784
      %v1883 = vadd.f32 %v1558, %v1789
      %v1884 = vadd.f32 %v1563, %v1794
      %v1885 = vadd.f32 %v1568, %v1799
      %v1886 = vadd.f32 %v1573, %v1804
      %v1887 = vadd.f32 %v1578, %v1809
      %v1888 = vadd.f32 %v1583, %v1814
      %v1889 = vadd.f32 %v1588, %v1819
      %v1890 = vadd.f32 %v1593, %v1824
      %v1891 = vadd.f32 %v1598, %v1829
      %v1892 = vadd.f32 %v1603, %v1834
      %v1893 = vadd.f32 %v1608, %v1839
      %v1894 = vadd.f32 %v1613, %v1844
      %v1895 = vadd.f32 %v1618, %v1849
      %v1896 = vadd.f32 %v1623, %v1854
      %v1897 = vadd.f32 %v1628, %v1859
      %v1898 = vadd.f32 %v1633, %v1864
      %v1899 = vld [vmem:[%s4] sm:$0x1]
      %v1901 = vlaneseq
      %v1902 = vshrl.u32 %v1901, 7
      %v1903 = vsub.s32 0, %v1902
      %v1904 = vrot.slane %v1899, %v1903
      %v1906 = vmul.f32 %v1867, %v1904
      %v1907 = vmul.f32 %v1868, %v1904
      %v1908 = vmul.f32 %v1869, %v1904
      %v1909 = vmul.f32 %v1870, %v1904
      %v1910 = vmul.f32 %v1871, %v1904
      %v1911 = vmul.f32 %v1872, %v1904
      %v1912 = vmul.f32 %v1873, %v1904
      %v1913 = vmul.f32 %v1874, %v1904
      %v1914 = vmul.f32 %v1875, %v1904
      %v1915 = vmul.f32 %v1876, %v1904
      %v1916 = vmul.f32 %v1877, %v1904
      %v1917 = vmul.f32 %v1878, %v1904
      %v1918 = vmul.f32 %v1879, %v1904
      %v1919 = vmul.f32 %v1880, %v1904
      %v1920 = vmul.f32 %v1881, %v1904
      %v1921 = vmul.f32 %v1882, %v1904
      %v1922 = vmul.f32 %v1883, %v1904
      %v1923 = vmul.f32 %v1884, %v1904
      %v1924 = vmul.f32 %v1885, %v1904
      %v1925 = vmul.f32 %v1886, %v1904
      %v1926 = vmul.f32 %v1887, %v1904
      %v1927 = vmul.f32 %v1888, %v1904
      %v1928 = vmul.f32 %v1889, %v1904
      %v1929 = vmul.f32 %v1890, %v1904
      %v1930 = vmul.f32 %v1891, %v1904
      %v1931 = vmul.f32 %v1892, %v1904
      %v1932 = vmul.f32 %v1893, %v1904
      %v1933 = vmul.f32 %v1894, %v1904
      %v1934 = vmul.f32 %v1895, %v1904
      %v1935 = vmul.f32 %v1896, %v1904
      %v1936 = vmul.f32 %v1897, %v1904
      %v1937 = vmul.f32 %v1898, %v1904
      %v1938 = vld [vmem:[%s5] sm:$0x1]
      %v1940 = vlaneseq
      %v1941 = vshrl.u32 %v1940, 7
      %v1942 = vsub.s32 0, %v1941
      %v1943 = vrot.slane %v1938, %v1942
      %v1945 = vadd.f32 %v1906, %v1943
      %v1946 = vadd.f32 %v1907, %v1943
      %v1947 = vadd.f32 %v1908, %v1943
      %v1948 = vadd.f32 %v1909, %v1943
      %v1949 = vadd.f32 %v1910, %v1943
      %v1950 = vadd.f32 %v1911, %v1943
      %v1951 = vadd.f32 %v1912, %v1943
      %v1952 = vadd.f32 %v1913, %v1943
      %v1953 = vadd.f32 %v1914, %v1943
      %v1954 = vadd.f32 %v1915, %v1943
      %v1955 = vadd.f32 %v1916, %v1943
      %v1956 = vadd.f32 %v1917, %v1943
      %v1957 = vadd.f32 %v1918, %v1943
      %v1958 = vadd.f32 %v1919, %v1943
      %v1959 = vadd.f32 %v1920, %v1943
      %v1960 = vadd.f32 %v1921, %v1943
      %v1961 = vadd.f32 %v1922, %v1943
      %v1962 = vadd.f32 %v1923, %v1943
      %v1963 = vadd.f32 %v1924, %v1943
      %v1964 = vadd.f32 %v1925, %v1943
      %v1965 = vadd.f32 %v1926, %v1943
      %v1966 = vadd.f32 %v1927, %v1943
      %v1967 = vadd.f32 %v1928, %v1943
      %v1968 = vadd.f32 %v1929, %v1943
      %v1969 = vadd.f32 %v1930, %v1943
      %v1970 = vadd.f32 %v1931, %v1943
      %v1971 = vadd.f32 %v1932, %v1943
      %v1972 = vadd.f32 %v1933, %v1943
      %v1973 = vadd.f32 %v1934, %v1943
      %v1974 = vadd.f32 %v1935, %v1943
      %v1975 = vadd.f32 %v1936, %v1943
      %v1976 = vadd.f32 %v1937, %v1943
      %v1977 = vmax.f32 %v1945, 0.0
      %v1978 = vmax.f32 %v1946, 0.0
      %v1979 = vmax.f32 %v1947, 0.0
      %v1980 = vmax.f32 %v1948, 0.0
      %v1981 = vmax.f32 %v1949, 0.0
      %v1982 = vmax.f32 %v1950, 0.0
      %v1983 = vmax.f32 %v1951, 0.0
      %v1984 = vmax.f32 %v1952, 0.0
      %v1985 = vmax.f32 %v1953, 0.0
      %v1986 = vmax.f32 %v1954, 0.0
      %v1987 = vmax.f32 %v1955, 0.0
      %v1988 = vmax.f32 %v1956, 0.0
      %v1989 = vmax.f32 %v1957, 0.0
      %v1990 = vmax.f32 %v1958, 0.0
      %v1991 = vmax.f32 %v1959, 0.0
      %v1992 = vmax.f32 %v1960, 0.0
      %v1993 = vmax.f32 %v1961, 0.0
      %v1994 = vmax.f32 %v1962, 0.0
      %v1995 = vmax.f32 %v1963, 0.0
      %v1996 = vmax.f32 %v1964, 0.0
      %v1997 = vmax.f32 %v1965, 0.0
      %v1998 = vmax.f32 %v1966, 0.0
      %v1999 = vmax.f32 %v1967, 0.0
      %v2000 = vmax.f32 %v1968, 0.0
      %v2001 = vmax.f32 %v1969, 0.0
      %v2002 = vmax.f32 %v1970, 0.0
      %v2003 = vmax.f32 %v1971, 0.0
      %v2004 = vmax.f32 %v1972, 0.0
      %v2005 = vmax.f32 %v1973, 0.0
      %v2006 = vmax.f32 %v1974, 0.0
      %v2007 = vmax.f32 %v1975, 0.0
      %v2008 = vmax.f32 %v1976, 0.0
      %v2009 = vld [vmem:[%s7] sm:$0x1]
      %v2011 = vlaneseq
      %v2012 = vshrl.u32 %v2011, 7
      %v2013 = vsub.s32 0, %v2012
      %v2014 = vrot.slane %v2009, %v2013
      %v2016 = vadd.f32 %v306, %v2014
      %v2017 = vadd.f32 %v307, %v2014
      %v2018 = vadd.f32 %v308, %v2014
      %v2019 = vadd.f32 %v309, %v2014
      %v2020 = vadd.f32 %v310, %v2014
      %v2021 = vadd.f32 %v311, %v2014
      %v2022 = vadd.f32 %v312, %v2014
      %v2023 = vadd.f32 %v313, %v2014
      %v2024 = vadd.f32 %v314, %v2014
      %v2025 = vadd.f32 %v315, %v2014
      %v2026 = vadd.f32 %v316, %v2014
      %v2027 = vadd.f32 %v317, %v2014
      %v2028 = vadd.f32 %v318, %v2014
      %v2029 = vadd.f32 %v319, %v2014
      %v2030 = vadd.f32 %v320, %v2014
      %v2031 = vadd.f32 %v321, %v2014
      %v2032 = vadd.f32 %v322, %v2014
      %v2033 = vadd.f32 %v323, %v2014
      %v2034 = vadd.f32 %v324, %v2014
      %v2035 = vadd.f32 %v325, %v2014
      %v2036 = vadd.f32 %v326, %v2014
      %v2037 = vadd.f32 %v327, %v2014
      %v2038 = vadd.f32 %v328, %v2014
      %v2039 = vadd.f32 %v329, %v2014
      %v2040 = vadd.f32 %v330, %v2014
      %v2041 = vadd.f32 %v331, %v2014
      %v2042 = vadd.f32 %v332, %v2014
      %v2043 = vadd.f32 %v333, %v2014
      %v2044 = vadd.f32 %v334, %v2014
      %v2045 = vadd.f32 %v335, %v2014
      %v2046 = vadd.f32 %v336, %v2014
      %v2047 = vadd.f32 %v337, %v2014
      %v2080 = vrot.slane %v1977, 7
      %v2081 = vrot.slane %v1978, 7
      %v2082 = vsel %vm480, %v2080, %v2081
      %v2083 = vrot.slane %v1979, 7
      %v2084 = vrot.slane %v1980, 7
      %v2085 = vsel %vm480, %v2083, %v2084
      %v2086 = vrot.slane %v1981, 7
      %v2087 = vrot.slane %v1982, 7
      %v2088 = vsel %vm480, %v2086, %v2087
      %v2089 = vrot.slane %v1983, 7
      %v2090 = vrot.slane %v1984, 7
      %v2091 = vsel %vm480, %v2089, %v2090
      %v2092 = vrot.slane %v1985, 7
      %v2093 = vrot.slane %v1986, 7
      %v2094 = vsel %vm480, %v2092, %v2093
      %v2095 = vrot.slane %v1987, 7
      %v2096 = vrot.slane %v1988, 7
      %v2097 = vsel %vm480, %v2095, %v2096
      %v2098 = vrot.slane %v1989, 7
      %v2099 = vrot.slane %v1990, 7
      %v2100 = vsel %vm480, %v2098, %v2099
      %v2101 = vrot.slane %v1991, 7
      %v2102 = vrot.slane %v1992, 7
      %v2103 = vsel %vm480, %v2101, %v2102
      %v2104 = vrot.slane %v1993, 7
      %v2105 = vrot.slane %v1994, 7
      %v2106 = vsel %vm480, %v2104, %v2105
      %v2107 = vrot.slane %v1995, 7
      %v2108 = vrot.slane %v1996, 7
      %v2109 = vsel %vm480, %v2107, %v2108
      %v2110 = vrot.slane %v1997, 7
      %v2111 = vrot.slane %v1998, 7
      %v2112 = vsel %vm480, %v2110, %v2111
      %v2113 = vrot.slane %v1999, 7
      %v2114 = vrot.slane %v2000, 7
      %v2115 = vsel %vm480, %v2113, %v2114
      %v2116 = vrot.slane %v2001, 7
      %v2117 = vrot.slane %v2002, 7
      %v2118 = vsel %vm480, %v2116, %v2117
      %v2119 = vrot.slane %v2003, 7
      %v2120 = vrot.slane %v2004, 7
      %v2121 = vsel %vm480, %v2119, %v2120
      %v2122 = vrot.slane %v2005, 7
      %v2123 = vrot.slane %v2006, 7
      %v2124 = vsel %vm480, %v2122, %v2123
      %v2125 = vrot.slane %v2007, 7
      %v2126 = vrot.slane %v2008, 7
      %v2127 = vsel %vm480, %v2125, %v2126
      %v2176 = vsel %vm480, 0.0, %v2080
      %v2177 = vsel %vm480, 0.0, %v2083
      %v2178 = vsel %vm480, 0.0, %v2086
      %v2179 = vsel %vm480, 0.0, %v2089
      %v2180 = vsel %vm480, 0.0, %v2092
      %v2181 = vsel %vm480, 0.0, %v2095
      %v2182 = vsel %vm480, 0.0, %v2098
      %v2183 = vsel %vm480, 0.0, %v2101
      %v2184 = vsel %vm480, 0.0, %v2104
      %v2185 = vsel %vm480, 0.0, %v2107
      %v2186 = vsel %vm480, 0.0, %v2110
      %v2187 = vsel %vm480, 0.0, %v2113
      %v2188 = vsel %vm480, 0.0, %v2116
      %v2189 = vsel %vm480, 0.0, %v2119
      %v2190 = vsel %vm480, 0.0, %v2122
      %v2191 = vsel %vm480, 0.0, %v2125
      %v2192 = vsel %vm480, %v2081, 0.0
      %v2193 = vsel %vm480, %v2084, 0.0
      %v2194 = vsel %vm480, %v2087, 0.0
      %v2195 = vsel %vm480, %v2090, 0.0
      %v2196 = vsel %vm480, %v2093, 0.0
      %v2197 = vsel %vm480, %v2096, 0.0
      %v2198 = vsel %vm480, %v2099, 0.0
      %v2199 = vsel %vm480, %v2102, 0.0
      %v2200 = vsel %vm480, %v2105, 0.0
      %v2201 = vsel %vm480, %v2108, 0.0
      %v2202 = vsel %vm480, %v2111, 0.0
      %v2203 = vsel %vm480, %v2114, 0.0
      %v2204 = vsel %vm480, %v2117, 0.0
      %v2205 = vsel %vm480, %v2120, 0.0
      %v2206 = vsel %vm480, %v2123, 0.0
      %v2207 = vsel %vm480, %v2126, 0.0
      %v2238 = vrot.slane %v2176, 1
      %v2239 = vrot.slane %v2082, 1
      %v2240 = vsel %vm640, %v2238, %v2239
      %v2241 = vrot.slane %v2192, 1
      %v2242 = vsel %vm640, %v2239, %v2241
      %v2243 = vrot.slane %v2177, 1
      %v2244 = vrot.slane %v2085, 1
      %v2245 = vsel %vm640, %v2243, %v2244
      %v2246 = vrot.slane %v2193, 1
      %v2247 = vsel %vm640, %v2244, %v2246
      %v2248 = vrot.slane %v2178, 1
      %v2249 = vrot.slane %v2088, 1
      %v2250 = vsel %vm640, %v2248, %v2249
      %v2251 = vrot.slane %v2194, 1
      %v2252 = vsel %vm640, %v2249, %v2251
      %v2253 = vrot.slane %v2179, 1
      %v2254 = vrot.slane %v2091, 1
      %v2255 = vsel %vm640, %v2253, %v2254
      %v2256 = vrot.slane %v2195, 1
      %v2257 = vsel %vm640, %v2254, %v2256
      %v2258 = vrot.slane %v2180, 1
      %v2259 = vrot.slane %v2094, 1
      %v2260 = vsel %vm640, %v2258, %v2259
      %v2261 = vrot.slane %v2196, 1
      %v2262 = vsel %vm640, %v2259, %v2261
      %v2263 = vrot.slane %v2181, 1
      %v2264 = vrot.slane %v2097, 1
      %v2265 = vsel %vm640, %v2263, %v2264
      %v2266 = vrot.slane %v2197, 1
      %v2267 = vsel %vm640, %v2264, %v2266
      %v2268 = vrot.slane %v2182, 1
      %v2269 = vrot.slane %v2100, 1
      %v2270 = vsel %vm640, %v2268, %v2269
      %v2271 = vrot.slane %v2198, 1
      %v2272 = vsel %vm640, %v2269, %v2271
      %v2273 = vrot.slane %v2183, 1
      %v2274 = vrot.slane %v2103, 1
      %v2275 = vsel %vm640, %v2273, %v2274
      %v2276 = vrot.slane %v2199, 1
      %v2277 = vsel %vm640, %v2274, %v2276
      %v2278 = vrot.slane %v2184, 1
      %v2279 = vrot.slane %v2106, 1
      %v2280 = vsel %vm640, %v2278, %v2279
      %v2281 = vrot.slane %v2200, 1
      %v2282 = vsel %vm640, %v2279, %v2281
      %v2283 = vrot.slane %v2185, 1
      %v2284 = vrot.slane %v2109, 1
      %v2285 = vsel %vm640, %v2283, %v2284
      %v2286 = vrot.slane %v2201, 1
      %v2287 = vsel %vm640, %v2284, %v2286
      %v2288 = vrot.slane %v2186, 1
      %v2289 = vrot.slane %v2112, 1
      %v2290 = vsel %vm640, %v2288, %v2289
      %v2291 = vrot.slane %v2202, 1
      %v2292 = vsel %vm640, %v2289, %v2291
      %v2293 = vrot.slane %v2187, 1
      %v2294 = vrot.slane %v2115, 1
      %v2295 = vsel %vm640, %v2293, %v2294
      %v2296 = vrot.slane %v2203, 1
      %v2297 = vsel %vm640, %v2294, %v2296
      %v2298 = vrot.slane %v2188, 1
      %v2299 = vrot.slane %v2118, 1
      %v2300 = vsel %vm640, %v2298, %v2299
      %v2301 = vrot.slane %v2204, 1
      %v2302 = vsel %vm640, %v2299, %v2301
      %v2303 = vrot.slane %v2189, 1
      %v2304 = vrot.slane %v2121, 1
      %v2305 = vsel %vm640, %v2303, %v2304
      %v2306 = vrot.slane %v2205, 1
      %v2307 = vsel %vm640, %v2304, %v2306
      %v2308 = vrot.slane %v2190, 1
      %v2309 = vrot.slane %v2124, 1
      %v2310 = vsel %vm640, %v2308, %v2309
      %v2311 = vrot.slane %v2206, 1
      %v2312 = vsel %vm640, %v2309, %v2311
      %2313 = vrot.lane.b32.xlu0 %v2240, 4
      %v2314 = vpop.permute.xlu0 %2313
      %2315 = vrot.lane.b32.xlu0 %v2242, 4
      %v2316 = vpop.permute.xlu0 %2315
      %2317 = vrot.lane.b32.xlu0 %v2245, 4
      %v2318 = vpop.permute.xlu0 %2317
      %2319 = vrot.lane.b32.xlu0 %v2247, 4
      %v2320 = vpop.permute.xlu0 %2319
      %2321 = vrot.lane.b32.xlu0 %v2250, 4
      %v2322 = vpop.permute.xlu0 %2321
      %2323 = vrot.lane.b32.xlu0 %v2252, 4
      %v2324 = vpop.permute.xlu0 %2323
      %2325 = vrot.lane.b32.xlu0 %v2255, 4
      %v2326 = vpop.permute.xlu0 %2325
      %2327 = vrot.lane.b32.xlu0 %v2257, 4
      %v2328 = vpop.permute.xlu0 %2327
      %2329 = vrot.lane.b32.xlu0 %v2260, 4
      %v2330 = vpop.permute.xlu0 %2329
      %2331 = vrot.lane.b32.xlu0 %v2262, 4
      %v2332 = vpop.permute.xlu0 %2331
      %2333 = vrot.lane.b32.xlu0 %v2265, 4
      %v2334 = vpop.permute.xlu0 %2333
      %2335 = vrot.lane.b32.xlu0 %v2267, 4
      %v2336 = vpop.permute.xlu0 %2335
      %2337 = vrot.lane.b32.xlu0 %v2270, 4
      %v2338 = vpop.permute.xlu0 %2337
      %2339 = vrot.lane.b32.xlu0 %v2272, 4
      %v2340 = vpop.permute.xlu0 %2339
      %2341 = vrot.lane.b32.xlu0 %v2275, 4
      %v2342 = vpop.permute.xlu0 %2341
      %2343 = vrot.lane.b32.xlu0 %v2277, 4
      %v2344 = vpop.permute.xlu0 %2343
      %2345 = vrot.lane.b32.xlu0 %v2280, 4
      %v2346 = vpop.permute.xlu0 %2345
      %2347 = vrot.lane.b32.xlu0 %v2282, 4
      %v2348 = vpop.permute.xlu0 %2347
      %2349 = vrot.lane.b32.xlu0 %v2285, 4
      %v2350 = vpop.permute.xlu0 %2349
      %2351 = vrot.lane.b32.xlu0 %v2287, 4
      %v2352 = vpop.permute.xlu0 %2351
      %2353 = vrot.lane.b32.xlu0 %v2290, 4
      %v2354 = vpop.permute.xlu0 %2353
      %2355 = vrot.lane.b32.xlu0 %v2292, 4
      %v2356 = vpop.permute.xlu0 %2355
      %2357 = vrot.lane.b32.xlu0 %v2295, 4
      %v2358 = vpop.permute.xlu0 %2357
      %2359 = vrot.lane.b32.xlu0 %v2297, 4
      %v2360 = vpop.permute.xlu0 %2359
      %2361 = vrot.lane.b32.xlu0 %v2300, 4
      %v2362 = vpop.permute.xlu0 %2361
      %2363 = vrot.lane.b32.xlu0 %v2302, 4
      %v2364 = vpop.permute.xlu0 %2363
      %2365 = vrot.lane.b32.xlu0 %v2305, 4
      %v2366 = vpop.permute.xlu0 %2365
      %2367 = vrot.lane.b32.xlu0 %v2307, 4
      %v2368 = vpop.permute.xlu0 %2367
      %2369 = vrot.lane.b32.xlu0 %v2310, 4
      %v2370 = vpop.permute.xlu0 %2369
      %2371 = vrot.lane.b32.xlu0 %v2312, 4
      %v2372 = vpop.permute.xlu0 %2371
      %v2403 = vrot.slane %v2176, 2
      %v2404 = vrot.slane %v2082, 2
      %v2405 = vsel %vm811, %v2403, %v2404
      %v2406 = vrot.slane %v2192, 2
      %v2407 = vsel %vm811, %v2404, %v2406
      %v2408 = vrot.slane %v2177, 2
      %v2409 = vrot.slane %v2085, 2
      %v2410 = vsel %vm811, %v2408, %v2409
      %v2411 = vrot.slane %v2193, 2
      %v2412 = vsel %vm811, %v2409, %v2411
      %v2413 = vrot.slane %v2178, 2
      %v2414 = vrot.slane %v2088, 2
      %v2415 = vsel %vm811, %v2413, %v2414
      %v2416 = vrot.slane %v2194, 2
      %v2417 = vsel %vm811, %v2414, %v2416
      %v2418 = vrot.slane %v2179, 2
      %v2419 = vrot.slane %v2091, 2
      %v2420 = vsel %vm811, %v2418, %v2419
      %v2421 = vrot.slane %v2195, 2
      %v2422 = vsel %vm811, %v2419, %v2421
      %v2423 = vrot.slane %v2180, 2
      %v2424 = vrot.slane %v2094, 2
      %v2425 = vsel %vm811, %v2423, %v2424
      %v2426 = vrot.slane %v2196, 2
      %v2427 = vsel %vm811, %v2424, %v2426
      %v2428 = vrot.slane %v2181, 2
      %v2429 = vrot.slane %v2097, 2
      %v2430 = vsel %vm811, %v2428, %v2429
      %v2431 = vrot.slane %v2197, 2
      %v2432 = vsel %vm811, %v2429, %v2431
      %v2433 = vrot.slane %v2182, 2
      %v2434 = vrot.slane %v2100, 2
      %v2435 = vsel %vm811, %v2433, %v2434
      %v2436 = vrot.slane %v2198, 2
      %v2437 = vsel %vm811, %v2434, %v2436
      %v2438 = vrot.slane %v2183, 2
      %v2439 = vrot.slane %v2103, 2
      %v2440 = vsel %vm811, %v2438, %v2439
      %v2441 = vrot.slane %v2199, 2
      %v2442 = vsel %vm811, %v2439, %v2441
      %v2443 = vrot.slane %v2184, 2
      %v2444 = vrot.slane %v2106, 2
      %v2445 = vsel %vm811, %v2443, %v2444
      %v2446 = vrot.slane %v2200, 2
      %v2447 = vsel %vm811, %v2444, %v2446
      %v2448 = vrot.slane %v2185, 2
      %v2449 = vrot.slane %v2109, 2
      %v2450 = vsel %vm811, %v2448, %v2449
      %v2451 = vrot.slane %v2201, 2
      %v2452 = vsel %vm811, %v2449, %v2451
      %v2453 = vrot.slane %v2186, 2
      %v2454 = vrot.slane %v2112, 2
      %v2455 = vsel %vm811, %v2453, %v2454
      %v2456 = vrot.slane %v2202, 2
      %v2457 = vsel %vm811, %v2454, %v2456
      %v2458 = vrot.slane %v2187, 2
      %v2459 = vrot.slane %v2115, 2
      %v2460 = vsel %vm811, %v2458, %v2459
      %v2461 = vrot.slane %v2203, 2
      %v2462 = vsel %vm811, %v2459, %v2461
      %v2463 = vrot.slane %v2188, 2
      %v2464 = vrot.slane %v2118, 2
      %v2465 = vsel %vm811, %v2463, %v2464
      %v2466 = vrot.slane %v2204, 2
      %v2467 = vsel %vm811, %v2464, %v2466
      %v2468 = vrot.slane %v2189, 2
      %v2469 = vrot.slane %v2121, 2
      %v2470 = vsel %vm811, %v2468, %v2469
      %v2471 = vrot.slane %v2205, 2
      %v2472 = vsel %vm811, %v2469, %v2471
      %v2473 = vrot.slane %v2190, 2
      %v2474 = vrot.slane %v2124, 2
      %v2475 = vsel %vm811, %v2473, %v2474
      %v2476 = vrot.slane %v2206, 2
      %v2477 = vsel %vm811, %v2474, %v2476
      %2478 = vrot.lane.b32.xlu0 %v2405, 8
      %v2479 = vpop.permute.xlu0 %2478
      %2480 = vrot.lane.b32.xlu0 %v2407, 8
      %v2481 = vpop.permute.xlu0 %2480
      %2482 = vrot.lane.b32.xlu0 %v2410, 8
      %v2483 = vpop.permute.xlu0 %2482
      %2484 = vrot.lane.b32.xlu0 %v2412, 8
      %v2485 = vpop.permute.xlu0 %2484
      %2486 = vrot.lane.b32.xlu0 %v2415, 8
      %v2487 = vpop.permute.xlu0 %2486
      %2488 = vrot.lane.b32.xlu0 %v2417, 8
      %v2489 = vpop.permute.xlu0 %2488
      %2490 = vrot.lane.b32.xlu0 %v2420, 8
      %v2491 = vpop.permute.xlu0 %2490
      %2492 = vrot.lane.b32.xlu0 %v2422, 8
      %v2493 = vpop.permute.xlu0 %2492
      %2494 = vrot.lane.b32.xlu0 %v2425, 8
      %v2495 = vpop.permute.xlu0 %2494
      %2496 = vrot.lane.b32.xlu0 %v2427, 8
      %v2497 = vpop.permute.xlu0 %2496
      %2498 = vrot.lane.b32.xlu0 %v2430, 8
      %v2499 = vpop.permute.xlu0 %2498
      %2500 = vrot.lane.b32.xlu0 %v2432, 8
      %v2501 = vpop.permute.xlu0 %2500
      %2502 = vrot.lane.b32.xlu0 %v2435, 8
      %v2503 = vpop.permute.xlu0 %2502
      %2504 = vrot.lane.b32.xlu0 %v2437, 8
      %v2505 = vpop.permute.xlu0 %2504
      %2506 = vrot.lane.b32.xlu0 %v2440, 8
      %v2507 = vpop.permute.xlu0 %2506
      %2508 = vrot.lane.b32.xlu0 %v2442, 8
      %v2509 = vpop.permute.xlu0 %2508
      %2510 = vrot.lane.b32.xlu0 %v2445, 8
      %v2511 = vpop.permute.xlu0 %2510
      %2512 = vrot.lane.b32.xlu0 %v2447, 8
      %v2513 = vpop.permute.xlu0 %2512
      %2514 = vrot.lane.b32.xlu0 %v2450, 8
      %v2515 = vpop.permute.xlu0 %2514
      %2516 = vrot.lane.b32.xlu0 %v2452, 8
      %v2517 = vpop.permute.xlu0 %2516
      %2518 = vrot.lane.b32.xlu0 %v2455, 8
      %v2519 = vpop.permute.xlu0 %2518
      %2520 = vrot.lane.b32.xlu0 %v2457, 8
      %v2521 = vpop.permute.xlu0 %2520
      %2522 = vrot.lane.b32.xlu0 %v2460, 8
      %v2523 = vpop.permute.xlu0 %2522
      %2524 = vrot.lane.b32.xlu0 %v2462, 8
      %v2525 = vpop.permute.xlu0 %2524
      %2526 = vrot.lane.b32.xlu0 %v2465, 8
      %v2527 = vpop.permute.xlu0 %2526
      %2528 = vrot.lane.b32.xlu0 %v2467, 8
      %v2529 = vpop.permute.xlu0 %2528
      %2530 = vrot.lane.b32.xlu0 %v2470, 8
      %v2531 = vpop.permute.xlu0 %2530
      %2532 = vrot.lane.b32.xlu0 %v2472, 8
      %v2533 = vpop.permute.xlu0 %2532
      %2534 = vrot.lane.b32.xlu0 %v2475, 8
      %v2535 = vpop.permute.xlu0 %2534
      %2536 = vrot.lane.b32.xlu0 %v2477, 8
      %v2537 = vpop.permute.xlu0 %2536
      %v2568 = vsel %vm982, %v2176, %v2314
      %v2569 = vsel %vm982, %v2082, %v2316
      %v2570 = vsel %vm982, %v2177, %v2318
      %v2571 = vsel %vm982, %v2085, %v2320
      %v2572 = vsel %vm982, %v2178, %v2322
      %v2573 = vsel %vm982, %v2088, %v2324
      %v2574 = vsel %vm982, %v2179, %v2326
      %v2575 = vsel %vm982, %v2091, %v2328
      %v2576 = vsel %vm982, %v2180, %v2330
      %v2577 = vsel %vm982, %v2094, %v2332
      %v2578 = vsel %vm982, %v2181, %v2334
      %v2579 = vsel %vm982, %v2097, %v2336
      %v2580 = vsel %vm982, %v2182, %v2338
      %v2581 = vsel %vm982, %v2100, %v2340
      %v2582 = vsel %vm982, %v2183, %v2342
      %v2583 = vsel %vm982, %v2103, %v2344
      %v2584 = vsel %vm982, %v2184, %v2346
      %v2585 = vsel %vm982, %v2106, %v2348
      %v2586 = vsel %vm982, %v2185, %v2350
      %v2587 = vsel %vm982, %v2109, %v2352
      %v2588 = vsel %vm982, %v2186, %v2354
      %v2589 = vsel %vm982, %v2112, %v2356
      %v2590 = vsel %vm982, %v2187, %v2358
      %v2591 = vsel %vm982, %v2115, %v2360
      %v2592 = vsel %vm982, %v2188, %v2362
      %v2593 = vsel %vm982, %v2118, %v2364
      %v2594 = vsel %vm982, %v2189, %v2366
      %v2595 = vsel %vm982, %v2121, %v2368
      %v2596 = vsel %vm982, %v2190, %v2370
      %v2597 = vsel %vm982, %v2124, %v2372
      %v2598 = vsel %vm1014, %v2568, %v2479
      %v2599 = vsel %vm1014, %v2569, %v2481
      %v2600 = vsel %vm1014, %v2570, %v2483
      %v2601 = vsel %vm1014, %v2571, %v2485
      %v2602 = vsel %vm1014, %v2572, %v2487
      %v2603 = vsel %vm1014, %v2573, %v2489
      %v2604 = vsel %vm1014, %v2574, %v2491
      %v2605 = vsel %vm1014, %v2575, %v2493
      %v2606 = vsel %vm1014, %v2576, %v2495
      %v2607 = vsel %vm1014, %v2577, %v2497
      %v2608 = vsel %vm1014, %v2578, %v2499
      %v2609 = vsel %vm1014, %v2579, %v2501
      %v2610 = vsel %vm1014, %v2580, %v2503
      %v2611 = vsel %vm1014, %v2581, %v2505
      %v2612 = vsel %vm1014, %v2582, %v2507
      %v2613 = vsel %vm1014, %v2583, %v2509
      %v2614 = vsel %vm1014, %v2584, %v2511
      %v2615 = vsel %vm1014, %v2585, %v2513
      %v2616 = vsel %vm1014, %v2586, %v2515
      %v2617 = vsel %vm1014, %v2587, %v2517
      %v2618 = vsel %vm1014, %v2588, %v2519
      %v2619 = vsel %vm1014, %v2589, %v2521
      %v2620 = vsel %vm1014, %v2590, %v2523
      %v2621 = vsel %vm1014, %v2591, %v2525
      %v2622 = vsel %vm1014, %v2592, %v2527
      %v2623 = vsel %vm1014, %v2593, %v2529
      %v2624 = vsel %vm1014, %v2594, %v2531
      %v2625 = vsel %vm1014, %v2595, %v2533
      %v2626 = vsel %vm1014, %v2596, %v2535
      %v2627 = vsel %vm1014, %v2597, %v2537
      %v2628 = vld [vmem:[%s6] sm:$0xff]
      %v2629 = vld [vmem:[%s6 + $0x8] sm:$0xf]
      %v2631 = vsel %vm1079, %v2598, 0
      %v2634 = vsel %vm1079, %v2599, 0
      %v2637 = vsel %vm1079, %v2600, 0
      %v2640 = vsel %vm1079, %v2601, 0
      %v2643 = vsel %vm1079, %v2602, 0
      %v2646 = vsel %vm1079, %v2603, 0
      %v2649 = vsel %vm1079, %v2604, 0
      %v2652 = vsel %vm1079, %v2605, 0
      %v2655 = vsel %vm1079, %v2606, 0
      %v2658 = vsel %vm1079, %v2607, 0
      %v2661 = vsel %vm1079, %v2608, 0
      %v2664 = vsel %vm1079, %v2609, 0
      %v2667 = vsel %vm1079, %v2610, 0
      %v2670 = vsel %vm1079, %v2611, 0
      %v2673 = vsel %vm1079, %v2612, 0
      %v2676 = vsel %vm1079, %v2613, 0
      %v2679 = vsel %vm1079, %v2614, 0
      %v2682 = vsel %vm1079, %v2615, 0
      %v2685 = vsel %vm1079, %v2616, 0
      %v2688 = vsel %vm1079, %v2617, 0
      %v2691 = vsel %vm1079, %v2618, 0
      %v2694 = vsel %vm1079, %v2619, 0
      %v2697 = vsel %vm1079, %v2620, 0
      %v2700 = vsel %vm1079, %v2621, 0
      %v2703 = vsel %vm1079, %v2622, 0
      %v2706 = vsel %vm1079, %v2623, 0
      %v2709 = vsel %vm1079, %v2624, 0
      %v2712 = vsel %vm1079, %v2625, 0
      %v2715 = vsel %vm1079, %v2626, 0
      %v2718 = vsel %vm1079, %v2627, 0
      %v2721 = vsel %vm1176, %v2629, 0
      %2723 = vmatprep.subr.mxu0 0.0
      %2724 = vmatpush1.msra.mxu0 %v2628
      %2725 = vmatprep.subr.mxu0 0.0
      %2726 = vmatpush1.msra.mxu0 %v2721
      %2727 = vmatprep.subr.mxu0 0.0
      %2728 = vmatpush1.msra.mxu0 0.0
      %2729 = vmatprep.subr.mxu0 0.0
      %2730 = vmatpush1.msra.mxu0 0.0
      %2731 = vmatprep.subr.mxu0 0.0
      %2732 = vmatpush1.msra.mxu0 0.0
      %2733 = vmatprep.subr.mxu0 0.0
      %2734 = vmatpush1.msra.mxu0 0.0
      %2735 = vmatprep.subr.mxu0 0.0
      %2736 = vmatpush1.msra.mxu0 0.0
      %2737 = vmatprep.subr.mxu0 0.0
      %2738 = vmatpush1.msra.mxu0 0.0
      %2739 = vmatprep.subr.mxu0 0.0
      %2740 = vmatpush1.msra.mxu0 0.0
      %2741 = vmatprep.subr.mxu0 0.0
      %2742 = vmatpush1.msra.mxu0 0.0
      %2743 = vmatprep.subr.mxu0 0.0
      %2744 = vmatpush1.msra.mxu0 0.0
      %2745 = vmatprep.subr.mxu0 0.0
      %2746 = vmatpush1.msra.mxu0 0.0
      %2747 = vmatprep.subr.mxu0 0.0
      %2748 = vmatpush1.msra.mxu0 0.0
      %2749 = vmatprep.subr.mxu0 0.0
      %2750 = vmatpush1.msra.mxu0 0.0
      %2751 = vmatprep.subr.mxu0 0.0
      %2752 = vmatpush1.msra.mxu0 0.0
      %2753 = vmatprep.subr.mxu0 0.0
      %2754 = vmatpush1.msra.mxu0 0.0
      %2755 = vmatprep.subr.mxu0 0.0
      %2756 = vmatpush1.msra.mxu0 0.0
      %2757 = vmatprep.subr.mxu0 0.0
      %2758 = vmatpush1.msra.mxu0 0.0
      %2759 = vmatprep.subr.mxu0 0.0
      %2760 = vmatpush1.msra.mxu0 0.0
      %2761 = vmatprep.subr.mxu0 0.0
      %2762 = vmatpush1.msra.mxu0 0.0
      %2763 = vmatprep.subr.mxu0 0.0
      %2764 = vmatpush1.msra.mxu0 0.0
      %2765 = vmatprep.subr.mxu0 0.0
      %2766 = vmatpush1.msra.mxu0 0.0
      %2767 = vmatprep.subr.mxu0 0.0
      %2768 = vmatpush1.msra.mxu0 0.0
      %2769 = vmatprep.subr.mxu0 0.0
      %2770 = vmatpush1.msra.mxu0 0.0
      %2771 = vmatprep.subr.mxu0 0.0
      %2772 = vmatpush1.msra.mxu0 0.0
      %2773 = vmatprep.subr.mxu0 0.0
      %2774 = vmatpush1.msra.mxu0 0.0
      %2775 = vmatprep.subr.mxu0 0.0
      %2776 = vmatpush1.msra.mxu0 0.0
      %2777 = vmatprep.subr.mxu0 0.0
      %2778 = vmatpush1.msra.mxu0 0.0
      %2779 = vmatprep.subr.mxu0 0.0
      %2780 = vmatpush1.msra.mxu0 0.0
      %2781 = vmatprep.subr.mxu0 0.0
      %2782 = vmatpush1.msra.mxu0 0.0
      %2783 = vmatprep.subr.mxu0 0.0
      %2784 = vmatpush1.msra.mxu0 0.0
      %2785 = vmatprep.subr.mxu0 0.0
      %2786 = vmatpush1.msra.mxu0 0.0
      %2787 = vmatprep.mubr.f32.mxu0 0.0
      %2788 = vmatmul.mubr.f32.gmra.mrb[0].mxu0 %v1406
      %v2789 = vpop.f32.mrb[0].mxu0
      %v2790 = vadd.f32 0.0, %v2789
      %v2791 = vpop.f32.mrb[0].mxu0
      %2792 = vmatprep.mubr.f32.mxu0 0.0
      %2793 = vmatmul.mubr.f32.gmra.mrb[0].mxu0 %v1406
      %v2794 = vpop.f32.mrb[0].mxu0
      %v2795 = vadd.f32 0.0, %v2794
      %v2796 = vpop.f32.mrb[0].mxu0
      %2797 = vmatprep.mubr.f32.mxu0 0.0
      %2798 = vmatmul.mubr.f32.gmra.mrb[0].mxu0 %v2631
      %v2799 = vpop.f32.mrb[0].mxu0
      %v2800 = vadd.f32 0.0, %v2799
      %v2801 = vpop.f32.mrb[0].mxu0
      %2802 = vmatprep.mubr.f32.mxu0 0.0
      %2803 = vmatmul.mubr.f32.gmra.mrb[0].mxu0 %v2634
      %v2804 = vpop.f32.mrb[0].mxu0
      %v2805 = vadd.f32 0.0, %v2804
      %v2806 = vpop.f32.mrb[0].mxu0
      %2807 = vmatprep.mubr.f32.mxu0 0.0
      %2808 = vmatmul.mubr.f32.gmra.mrb[0].mxu0 %v2637
      %v2809 = vpop.f32.mrb[0].mxu0
      %v2810 = vadd.f32 0.0, %v2809
      %v2811 = vpop.f32.mrb[0].mxu0
      %2812 = vmatprep.mubr.f32.mxu0 0.0
      %2813 = vmatmul.mubr.f32.gmra.mrb[0].mxu0 %v2640
      %v2814 = vpop.f32.mrb[0].mxu0
      %v2815 = vadd.f32 0.0, %v2814
      %v2816 = vpop.f32.mrb[0].mxu0
      %2817 = vmatprep.mubr.f32.mxu0 0.0
      %2818 = vmatmul.mubr.f32.gmra.mrb[0].mxu0 %v2643
      %v2819 = vpop.f32.mrb[0].mxu0
      %v2820 = vadd.f32 0.0, %v2819
      %v2821 = vpop.f32.mrb[0].mxu0
      %2822 = vmatprep.mubr.f32.mxu0 0.0
      %2823 = vmatmul.mubr.f32.gmra.mrb[0].mxu0 %v2646
      %v2824 = vpop.f32.mrb[0].mxu0
      %v2825 = vadd.f32 0.0, %v2824
      %v2826 = vpop.f32.mrb[0].mxu0
      %2827 = vmatprep.mubr.f32.mxu0 0.0
      %2828 = vmatmul.mubr.f32.gmra.mrb[0].mxu0 %v2649
      %v2829 = vpop.f32.mrb[0].mxu0
      %v2830 = vadd.f32 0.0, %v2829
      %v2831 = vpop.f32.mrb[0].mxu0
      %2832 = vmatprep.mubr.f32.mxu0 0.0
      %2833 = vmatmul.mubr.f32.gmra.mrb[0].mxu0 %v2652
      %v2834 = vpop.f32.mrb[0].mxu0
      %v2835 = vadd.f32 0.0, %v2834
      %v2836 = vpop.f32.mrb[0].mxu0
      %2837 = vmatprep.mubr.f32.mxu0 0.0
      %2838 = vmatmul.mubr.f32.gmra.mrb[0].mxu0 %v2655
      %v2839 = vpop.f32.mrb[0].mxu0
      %v2840 = vadd.f32 0.0, %v2839
      %v2841 = vpop.f32.mrb[0].mxu0
      %2842 = vmatprep.mubr.f32.mxu0 0.0
      %2843 = vmatmul.mubr.f32.gmra.mrb[0].mxu0 %v2658
      %v2844 = vpop.f32.mrb[0].mxu0
      %v2845 = vadd.f32 0.0, %v2844
      %v2846 = vpop.f32.mrb[0].mxu0
      %2847 = vmatprep.mubr.f32.mxu0 0.0
      %2848 = vmatmul.mubr.f32.gmra.mrb[0].mxu0 %v2661
      %v2849 = vpop.f32.mrb[0].mxu0
      %v2850 = vadd.f32 0.0, %v2849
      %v2851 = vpop.f32.mrb[0].mxu0
      %2852 = vmatprep.mubr.f32.mxu0 0.0
      %2853 = vmatmul.mubr.f32.gmra.mrb[0].mxu0 %v2664
      %v2854 = vpop.f32.mrb[0].mxu0
      %v2855 = vadd.f32 0.0, %v2854
      %v2856 = vpop.f32.mrb[0].mxu0
      %2857 = vmatprep.mubr.f32.mxu0 0.0
      %2858 = vmatmul.mubr.f32.gmra.mrb[0].mxu0 %v2667
      %v2859 = vpop.f32.mrb[0].mxu0
      %v2860 = vadd.f32 0.0, %v2859
      %v2861 = vpop.f32.mrb[0].mxu0
      %2862 = vmatprep.mubr.f32.mxu0 0.0
      %2863 = vmatmul.mubr.f32.gmra.mrb[0].mxu0 %v2670
      %v2864 = vpop.f32.mrb[0].mxu0
      %v2865 = vadd.f32 0.0, %v2864
      %v2866 = vpop.f32.mrb[0].mxu0
      %2867 = vmatprep.mubr.f32.mxu0 0.0
      %2868 = vmatmul.mubr.f32.gmra.mrb[0].mxu0 %v2673
      %v2869 = vpop.f32.mrb[0].mxu0
      %v2870 = vadd.f32 0.0, %v2869
      %v2871 = vpop.f32.mrb[0].mxu0
      %2872 = vmatprep.mubr.f32.mxu0 0.0
      %2873 = vmatmul.mubr.f32.gmra.mrb[0].mxu0 %v2676
      %v2874 = vpop.f32.mrb[0].mxu0
      %v2875 = vadd.f32 0.0, %v2874
      %v2876 = vpop.f32.mrb[0].mxu0
      %2877 = vmatprep.mubr.f32.mxu0 0.0
      %2878 = vmatmul.mubr.f32.gmra.mrb[0].mxu0 %v2679
      %v2879 = vpop.f32.mrb[0].mxu0
      %v2880 = vadd.f32 0.0, %v2879
      %v2881 = vpop.f32.mrb[0].mxu0
      %2882 = vmatprep.mubr.f32.mxu0 0.0
      %2883 = vmatmul.mubr.f32.gmra.mrb[0].mxu0 %v2682
      %v2884 = vpop.f32.mrb[0].mxu0
      %v2885 = vadd.f32 0.0, %v2884
      %v2886 = vpop.f32.mrb[0].mxu0
      %2887 = vmatprep.mubr.f32.mxu0 0.0
      %2888 = vmatmul.mubr.f32.gmra.mrb[0].mxu0 %v2685
      %v2889 = vpop.f32.mrb[0].mxu0
      %v2890 = vadd.f32 0.0, %v2889
      %v2891 = vpop.f32.mrb[0].mxu0
      %2892 = vmatprep.mubr.f32.mxu0 0.0
      %2893 = vmatmul.mubr.f32.gmra.mrb[0].mxu0 %v2688
      %v2894 = vpop.f32.mrb[0].mxu0
      %v2895 = vadd.f32 0.0, %v2894
      %v2896 = vpop.f32.mrb[0].mxu0
      %2897 = vmatprep.mubr.f32.mxu0 0.0
      %2898 = vmatmul.mubr.f32.gmra.mrb[0].mxu0 %v2691
      %v2899 = vpop.f32.mrb[0].mxu0
      %v2900 = vadd.f32 0.0, %v2899
      %v2901 = vpop.f32.mrb[0].mxu0
      %2902 = vmatprep.mubr.f32.mxu0 0.0
      %2903 = vmatmul.mubr.f32.gmra.mrb[0].mxu0 %v2694
      %v2904 = vpop.f32.mrb[0].mxu0
      %v2905 = vadd.f32 0.0, %v2904
      %v2906 = vpop.f32.mrb[0].mxu0
      %2907 = vmatprep.mubr.f32.mxu0 0.0
      %2908 = vmatmul.mubr.f32.gmra.mrb[0].mxu0 %v2697
      %v2909 = vpop.f32.mrb[0].mxu0
      %v2910 = vadd.f32 0.0, %v2909
      %v2911 = vpop.f32.mrb[0].mxu0
      %2912 = vmatprep.mubr.f32.mxu0 0.0
      %2913 = vmatmul.mubr.f32.gmra.mrb[0].mxu0 %v2700
      %v2914 = vpop.f32.mrb[0].mxu0
      %v2915 = vadd.f32 0.0, %v2914
      %v2916 = vpop.f32.mrb[0].mxu0
      %2917 = vmatprep.mubr.f32.mxu0 0.0
      %2918 = vmatmul.mubr.f32.gmra.mrb[0].mxu0 %v2703
      %v2919 = vpop.f32.mrb[0].mxu0
      %v2920 = vadd.f32 0.0, %v2919
      %v2921 = vpop.f32.mrb[0].mxu0
      %2922 = vmatprep.mubr.f32.mxu0 0.0
      %2923 = vmatmul.mubr.f32.gmra.mrb[0].mxu0 %v2706
      %v2924 = vpop.f32.mrb[0].mxu0
      %v2925 = vadd.f32 0.0, %v2924
      %v2926 = vpop.f32.mrb[0].mxu0
      %2927 = vmatprep.mubr.f32.mxu0 0.0
      %2928 = vmatmul.mubr.f32.gmra.mrb[0].mxu0 %v2709
      %v2929 = vpop.f32.mrb[0].mxu0
      %v2930 = vadd.f32 0.0, %v2929
      %v2931 = vpop.f32.mrb[0].mxu0
      %2932 = vmatprep.mubr.f32.mxu0 0.0
      %2933 = vmatmul.mubr.f32.gmra.mrb[0].mxu0 %v2712
      %v2934 = vpop.f32.mrb[0].mxu0
      %v2935 = vadd.f32 0.0, %v2934
      %v2936 = vpop.f32.mrb[0].mxu0
      %2937 = vmatprep.mubr.f32.mxu0 0.0
      %2938 = vmatmul.mubr.f32.gmra.mrb[0].mxu0 %v2715
      %v2939 = vpop.f32.mrb[0].mxu0
      %v2940 = vadd.f32 0.0, %v2939
      %v2941 = vpop.f32.mrb[0].mxu0
      %2942 = vmatprep.mubr.f32.mxu0 0.0
      %2943 = vmatmul.mubr.f32.gmra.mrb[0].mxu0 %v2718
      %v2944 = vpop.f32.mrb[0].mxu0
      %v2945 = vadd.f32 0.0, %v2944
      %v2946 = vpop.f32.mrb[0].mxu0
      %2947 = vdwg.mxu0
      %v2948 = vadd.f32 %v2016, %v2790
      %v2949 = vadd.f32 %v2017, %v2795
      %v2950 = vadd.f32 %v2018, %v2800
      %v2951 = vadd.f32 %v2019, %v2805
      %v2952 = vadd.f32 %v2020, %v2810
      %v2953 = vadd.f32 %v2021, %v2815
      %v2954 = vadd.f32 %v2022, %v2820
      %v2955 = vadd.f32 %v2023, %v2825
      %v2956 = vadd.f32 %v2024, %v2830
      %v2957 = vadd.f32 %v2025, %v2835
      %v2958 = vadd.f32 %v2026, %v2840
      %v2959 = vadd.f32 %v2027, %v2845
      %v2960 = vadd.f32 %v2028, %v2850
      %v2961 = vadd.f32 %v2029, %v2855
      %v2962 = vadd.f32 %v2030, %v2860
      %v2963 = vadd.f32 %v2031, %v2865
      %v2964 = vadd.f32 %v2032, %v2870
      %v2965 = vadd.f32 %v2033, %v2875
      %v2966 = vadd.f32 %v2034, %v2880
      %v2967 = vadd.f32 %v2035, %v2885
      %v2968 = vadd.f32 %v2036, %v2890
      %v2969 = vadd.f32 %v2037, %v2895
      %v2970 = vadd.f32 %v2038, %v2900
      %v2971 = vadd.f32 %v2039, %v2905
      %v2972 = vadd.f32 %v2040, %v2910
      %v2973 = vadd.f32 %v2041, %v2915
      %v2974 = vadd.f32 %v2042, %v2920
      %v2975 = vadd.f32 %v2043, %v2925
      %v2976 = vadd.f32 %v2044, %v2930
      %v2977 = vadd.f32 %v2045, %v2935
      %v2978 = vadd.f32 %v2046, %v2940
      %v2979 = vadd.f32 %v2047, %v2945
      %v2982 = vrot.slane %v2191, 1
      %v2983 = vrot.slane %v2127, 1
      %v2984 = vsel %vm640, %v2982, %v2983
      %v2985 = vrot.slane %v2207, 1
      %v2986 = vsel %vm640, %v2983, %v2985
      %2987 = vrot.lane.b32.xlu0 %v2984, 4
      %v2988 = vpop.permute.xlu0 %2987
      %2989 = vrot.lane.b32.xlu0 %v2986, 4
      %v2990 = vpop.permute.xlu0 %2989
      %v2993 = vrot.slane %v2191, 2
      %v2994 = vrot.slane %v2127, 2
      %v2995 = vsel %vm811, %v2993, %v2994
      %v2996 = vrot.slane %v2207, 2
      %v2997 = vsel %vm811, %v2994, %v2996
      %2998 = vrot.lane.b32.xlu0 %v2995, 8
      %v2999 = vpop.permute.xlu0 %2998
      %3000 = vrot.lane.b32.xlu0 %v2997, 8
      %v3001 = vpop.permute.xlu0 %3000
      %v3004 = vsel %vm982, %v2191, %v2988
      %v3005 = vsel %vm982, %v2127, %v2990
      %v3006 = vsel %vm1014, %v3004, %v2999
      %v3007 = vsel %vm1014, %v3005, %v3001
      %s3008 = scalar_lea.vmem %s6, 16
      %v3009 = vld [vmem:[%s3008] sm:$0xff]
      %v3010 = vld [vmem:[%s3008 + $0x8] sm:$0xf]
      %v3012 = vsel %vm1079, %v3006, 0
      %v3015 = vsel %vm1079, %v3007, 0
      %v3018 = vsel %vm1176, %v3010, 0
      %3020 = vmatprep.subr.mxu0 0.0
      %3021 = vmatpush1.msra.mxu0 %v3009
      %3022 = vmatprep.subr.mxu0 0.0
      %3023 = vmatpush1.msra.mxu0 %v3018
      %3024 = vmatprep.subr.mxu0 0.0
      %3025 = vmatpush1.msra.mxu0 0.0
      %3026 = vmatprep.subr.mxu0 0.0
      %3027 = vmatpush1.msra.mxu0 0.0
      %3028 = vmatprep.subr.mxu0 0.0
      %3029 = vmatpush1.msra.mxu0 0.0
      %3030 = vmatprep.subr.mxu0 0.0
      %3031 = vmatpush1.msra.mxu0 0.0
      %3032 = vmatprep.subr.mxu0 0.0
      %3033 = vmatpush1.msra.mxu0 0.0
      %3034 = vmatprep.subr.mxu0 0.0
      %3035 = vmatpush1.msra.mxu0 0.0
      %3036 = vmatprep.subr.mxu0 0.0
      %3037 = vmatpush1.msra.mxu0 0.0
      %3038 = vmatprep.subr.mxu0 0.0
      %3039 = vmatpush1.msra.mxu0 0.0
      %3040 = vmatprep.subr.mxu0 0.0
      %3041 = vmatpush1.msra.mxu0 0.0
      %3042 = vmatprep.subr.mxu0 0.0
      %3043 = vmatpush1.msra.mxu0 0.0
      %3044 = vmatprep.subr.mxu0 0.0
      %3045 = vmatpush1.msra.mxu0 0.0
      %3046 = vmatprep.subr.mxu0 0.0
      %3047 = vmatpush1.msra.mxu0 0.0
      %3048 = vmatprep.subr.mxu0 0.0
      %3049 = vmatpush1.msra.mxu0 0.0
      %3050 = vmatprep.subr.mxu0 0.0
      %3051 = vmatpush1.msra.mxu0 0.0
      %3052 = vmatprep.subr.mxu0 0.0
      %3053 = vmatpush1.msra.mxu0 0.0
      %3054 = vmatprep.subr.mxu0 0.0
      %3055 = vmatpush1.msra.mxu0 0.0
      %3056 = vmatprep.subr.mxu0 0.0
      %3057 = vmatpush1.msra.mxu0 0.0
      %3058 = vmatprep.subr.mxu0 0.0
      %3059 = vmatpush1.msra.mxu0 0.0
      %3060 = vmatprep.subr.mxu0 0.0
      %3061 = vmatpush1.msra.mxu0 0.0
      %3062 = vmatprep.subr.mxu0 0.0
      %3063 = vmatpush1.msra.mxu0 0.0
      %3064 = vmatprep.subr.mxu0 0.0
      %3065 = vmatpush1.msra.mxu0 0.0
      %3066 = vmatprep.subr.mxu0 0.0
      %3067 = vmatpush1.msra.mxu0 0.0
      %3068 = vmatprep.subr.mxu0 0.0
      %3069 = vmatpush1.msra.mxu0 0.0
      %3070 = vmatprep.subr.mxu0 0.0
      %3071 = vmatpush1.msra.mxu0 0.0
      %3072 = vmatprep.subr.mxu0 0.0
      %3073 = vmatpush1.msra.mxu0 0.0
      %3074 = vmatprep.subr.mxu0 0.0
      %3075 = vmatpush1.msra.mxu0 0.0
      %3076 = vmatprep.subr.mxu0 0.0
      %3077 = vmatpush1.msra.mxu0 0.0
      %3078 = vmatprep.subr.mxu0 0.0
      %3079 = vmatpush1.msra.mxu0 0.0
      %3080 = vmatprep.subr.mxu0 0.0
      %3081 = vmatpush1.msra.mxu0 0.0
      %3082 = vmatprep.subr.mxu0 0.0
      %3083 = vmatpush1.msra.mxu0 0.0
      %3084 = vmatprep.mubr.f32.mxu0 0.0
      %3085 = vmatmul.mubr.f32.gmra.mrb[0].mxu0 %v2631
      %v3086 = vpop.f32.mrb[0].mxu0
      %v3087 = vadd.f32 0.0, %v3086
      %v3088 = vpop.f32.mrb[0].mxu0
      %3089 = vmatprep.mubr.f32.mxu0 0.0
      %3090 = vmatmul.mubr.f32.gmra.mrb[0].mxu0 %v2634
      %v3091 = vpop.f32.mrb[0].mxu0
      %v3092 = vadd.f32 0.0, %v3091
      %v3093 = vpop.f32.mrb[0].mxu0
      %3094 = vmatprep.mubr.f32.mxu0 0.0
      %3095 = vmatmul.mubr.f32.gmra.mrb[0].mxu0 %v2637
      %v3096 = vpop.f32.mrb[0].mxu0
      %v3097 = vadd.f32 0.0, %v3096
      %v3098 = vpop.f32.mrb[0].mxu0
      %3099 = vmatprep.mubr.f32.mxu0 0.0
      %3100 = vmatmul.mubr.f32.gmra.mrb[0].mxu0 %v2640
      %v3101 = vpop.f32.mrb[0].mxu0
      %v3102 = vadd.f32 0.0, %v3101
      %v3103 = vpop.f32.mrb[0].mxu0
      %3104 = vmatprep.mubr.f32.mxu0 0.0
      %3105 = vmatmul.mubr.f32.gmra.mrb[0].mxu0 %v2643
      %v3106 = vpop.f32.mrb[0].mxu0
      %v3107 = vadd.f32 0.0, %v3106
      %v3108 = vpop.f32.mrb[0].mxu0
      %3109 = vmatprep.mubr.f32.mxu0 0.0
      %3110 = vmatmul.mubr.f32.gmra.mrb[0].mxu0 %v2646
      %v3111 = vpop.f32.mrb[0].mxu0
      %v3112 = vadd.f32 0.0, %v3111
      %v3113 = vpop.f32.mrb[0].mxu0
      %3114 = vmatprep.mubr.f32.mxu0 0.0
      %3115 = vmatmul.mubr.f32.gmra.mrb[0].mxu0 %v2649
      %v3116 = vpop.f32.mrb[0].mxu0
      %v3117 = vadd.f32 0.0, %v3116
      %v3118 = vpop.f32.mrb[0].mxu0
      %3119 = vmatprep.mubr.f32.mxu0 0.0
      %3120 = vmatmul.mubr.f32.gmra.mrb[0].mxu0 %v2652
      %v3121 = vpop.f32.mrb[0].mxu0
      %v3122 = vadd.f32 0.0, %v3121
      %v3123 = vpop.f32.mrb[0].mxu0
      %3124 = vmatprep.mubr.f32.mxu0 0.0
      %3125 = vmatmul.mubr.f32.gmra.mrb[0].mxu0 %v2655
      %v3126 = vpop.f32.mrb[0].mxu0
      %v3127 = vadd.f32 0.0, %v3126
      %v3128 = vpop.f32.mrb[0].mxu0
      %3129 = vmatprep.mubr.f32.mxu0 0.0
      %3130 = vmatmul.mubr.f32.gmra.mrb[0].mxu0 %v2658
      %v3131 = vpop.f32.mrb[0].mxu0
      %v3132 = vadd.f32 0.0, %v3131
      %v3133 = vpop.f32.mrb[0].mxu0
      %3134 = vmatprep.mubr.f32.mxu0 0.0
      %3135 = vmatmul.mubr.f32.gmra.mrb[0].mxu0 %v2661
      %v3136 = vpop.f32.mrb[0].mxu0
      %v3137 = vadd.f32 0.0, %v3136
      %v3138 = vpop.f32.mrb[0].mxu0
      %3139 = vmatprep.mubr.f32.mxu0 0.0
      %3140 = vmatmul.mubr.f32.gmra.mrb[0].mxu0 %v2664
      %v3141 = vpop.f32.mrb[0].mxu0
      %v3142 = vadd.f32 0.0, %v3141
      %v3143 = vpop.f32.mrb[0].mxu0
      %3144 = vmatprep.mubr.f32.mxu0 0.0
      %3145 = vmatmul.mubr.f32.gmra.mrb[0].mxu0 %v2667
      %v3146 = vpop.f32.mrb[0].mxu0
      %v3147 = vadd.f32 0.0, %v3146
      %v3148 = vpop.f32.mrb[0].mxu0
      %3149 = vmatprep.mubr.f32.mxu0 0.0
      %3150 = vmatmul.mubr.f32.gmra.mrb[0].mxu0 %v2670
      %v3151 = vpop.f32.mrb[0].mxu0
      %v3152 = vadd.f32 0.0, %v3151
      %v3153 = vpop.f32.mrb[0].mxu0
      %3154 = vmatprep.mubr.f32.mxu0 0.0
      %3155 = vmatmul.mubr.f32.gmra.mrb[0].mxu0 %v2673
      %v3156 = vpop.f32.mrb[0].mxu0
      %v3157 = vadd.f32 0.0, %v3156
      %v3158 = vpop.f32.mrb[0].mxu0
      %3159 = vmatprep.mubr.f32.mxu0 0.0
      %3160 = vmatmul.mubr.f32.gmra.mrb[0].mxu0 %v2676
      %v3161 = vpop.f32.mrb[0].mxu0
      %v3162 = vadd.f32 0.0, %v3161
      %v3163 = vpop.f32.mrb[0].mxu0
      %3164 = vmatprep.mubr.f32.mxu0 0.0
      %3165 = vmatmul.mubr.f32.gmra.mrb[0].mxu0 %v2679
      %v3166 = vpop.f32.mrb[0].mxu0
      %v3167 = vadd.f32 0.0, %v3166
      %v3168 = vpop.f32.mrb[0].mxu0
      %3169 = vmatprep.mubr.f32.mxu0 0.0
      %3170 = vmatmul.mubr.f32.gmra.mrb[0].mxu0 %v2682
      %v3171 = vpop.f32.mrb[0].mxu0
      %v3172 = vadd.f32 0.0, %v3171
      %v3173 = vpop.f32.mrb[0].mxu0
      %3174 = vmatprep.mubr.f32.mxu0 0.0
      %3175 = vmatmul.mubr.f32.gmra.mrb[0].mxu0 %v2685
      %v3176 = vpop.f32.mrb[0].mxu0
      %v3177 = vadd.f32 0.0, %v3176
      %v3178 = vpop.f32.mrb[0].mxu0
      %3179 = vmatprep.mubr.f32.mxu0 0.0
      %3180 = vmatmul.mubr.f32.gmra.mrb[0].mxu0 %v2688
      %v3181 = vpop.f32.mrb[0].mxu0
      %v3182 = vadd.f32 0.0, %v3181
      %v3183 = vpop.f32.mrb[0].mxu0
      %3184 = vmatprep.mubr.f32.mxu0 0.0
      %3185 = vmatmul.mubr.f32.gmra.mrb[0].mxu0 %v2691
      %v3186 = vpop.f32.mrb[0].mxu0
      %v3187 = vadd.f32 0.0, %v3186
      %v3188 = vpop.f32.mrb[0].mxu0
      %3189 = vmatprep.mubr.f32.mxu0 0.0
      %3190 = vmatmul.mubr.f32.gmra.mrb[0].mxu0 %v2694
      %v3191 = vpop.f32.mrb[0].mxu0
      %v3192 = vadd.f32 0.0, %v3191
      %v3193 = vpop.f32.mrb[0].mxu0
      %3194 = vmatprep.mubr.f32.mxu0 0.0
      %3195 = vmatmul.mubr.f32.gmra.mrb[0].mxu0 %v2697
      %v3196 = vpop.f32.mrb[0].mxu0
      %v3197 = vadd.f32 0.0, %v3196
      %v3198 = vpop.f32.mrb[0].mxu0
      %3199 = vmatprep.mubr.f32.mxu0 0.0
      %3200 = vmatmul.mubr.f32.gmra.mrb[0].mxu0 %v2700
      %v3201 = vpop.f32.mrb[0].mxu0
      %v3202 = vadd.f32 0.0, %v3201
      %v3203 = vpop.f32.mrb[0].mxu0
      %3204 = vmatprep.mubr.f32.mxu0 0.0
      %3205 = vmatmul.mubr.f32.gmra.mrb[0].mxu0 %v2703
      %v3206 = vpop.f32.mrb[0].mxu0
      %v3207 = vadd.f32 0.0, %v3206
      %v3208 = vpop.f32.mrb[0].mxu0
      %3209 = vmatprep.mubr.f32.mxu0 0.0
      %3210 = vmatmul.mubr.f32.gmra.mrb[0].mxu0 %v2706
      %v3211 = vpop.f32.mrb[0].mxu0
      %v3212 = vadd.f32 0.0, %v3211
      %v3213 = vpop.f32.mrb[0].mxu0
      %3214 = vmatprep.mubr.f32.mxu0 0.0
      %3215 = vmatmul.mubr.f32.gmra.mrb[0].mxu0 %v2709
      %v3216 = vpop.f32.mrb[0].mxu0
      %v3217 = vadd.f32 0.0, %v3216
      %v3218 = vpop.f32.mrb[0].mxu0
      %3219 = vmatprep.mubr.f32.mxu0 0.0
      %3220 = vmatmul.mubr.f32.gmra.mrb[0].mxu0 %v2712
      %v3221 = vpop.f32.mrb[0].mxu0
      %v3222 = vadd.f32 0.0, %v3221
      %v3223 = vpop.f32.mrb[0].mxu0
      %3224 = vmatprep.mubr.f32.mxu0 0.0
      %3225 = vmatmul.mubr.f32.gmra.mrb[0].mxu0 %v2715
      %v3226 = vpop.f32.mrb[0].mxu0
      %v3227 = vadd.f32 0.0, %v3226
      %v3228 = vpop.f32.mrb[0].mxu0
      %3229 = vmatprep.mubr.f32.mxu0 0.0
      %3230 = vmatmul.mubr.f32.gmra.mrb[0].mxu0 %v2718
      %v3231 = vpop.f32.mrb[0].mxu0
      %v3232 = vadd.f32 0.0, %v3231
      %v3233 = vpop.f32.mrb[0].mxu0
      %3234 = vmatprep.mubr.f32.mxu0 0.0
      %3235 = vmatmul.mubr.f32.gmra.mrb[0].mxu0 %v3012
      %v3236 = vpop.f32.mrb[0].mxu0
      %v3237 = vadd.f32 0.0, %v3236
      %v3238 = vpop.f32.mrb[0].mxu0
      %3239 = vmatprep.mubr.f32.mxu0 0.0
      %3240 = vmatmul.mubr.f32.gmra.mrb[0].mxu0 %v3015
      %v3241 = vpop.f32.mrb[0].mxu0
      %v3242 = vadd.f32 0.0, %v3241
      %v3243 = vpop.f32.mrb[0].mxu0
      %3244 = vdwg.mxu0
      %v3245 = vadd.f32 %v2948, %v3087
      %v3246 = vadd.f32 %v2949, %v3092
      %v3247 = vadd.f32 %v2950, %v3097
      %v3248 = vadd.f32 %v2951, %v3102
      %v3249 = vadd.f32 %v2952, %v3107
      %v3250 = vadd.f32 %v2953, %v3112
      %v3251 = vadd.f32 %v2954, %v3117
      %v3252 = vadd.f32 %v2955, %v3122
      %v3253 = vadd.f32 %v2956, %v3127
      %v3254 = vadd.f32 %v2957, %v3132
      %v3255 = vadd.f32 %v2958, %v3137
      %v3256 = vadd.f32 %v2959, %v3142
      %v3257 = vadd.f32 %v2960, %v3147
      %v3258 = vadd.f32 %v2961, %v3152
      %v3259 = vadd.f32 %v2962, %v3157
      %v3260 = vadd.f32 %v2963, %v3162
      %v3261 = vadd.f32 %v2964, %v3167
      %v3262 = vadd.f32 %v2965, %v3172
      %v3263 = vadd.f32 %v2966, %v3177
      %v3264 = vadd.f32 %v2967, %v3182
      %v3265 = vadd.f32 %v2968, %v3187
      %v3266 = vadd.f32 %v2969, %v3192
      %v3267 = vadd.f32 %v2970, %v3197
      %v3268 = vadd.f32 %v2971, %v3202
      %v3269 = vadd.f32 %v2972, %v3207
      %v3270 = vadd.f32 %v2973, %v3212
      %v3271 = vadd.f32 %v2974, %v3217
      %v3272 = vadd.f32 %v2975, %v3222
      %v3273 = vadd.f32 %v2976, %v3227
      %v3274 = vadd.f32 %v2977, %v3232
      %v3275 = vadd.f32 %v2978, %v3237
      %v3276 = vadd.f32 %v2979, %v3242
      %s3277 = scalar_lea.vmem %s6, 32
      %v3278 = vld [vmem:[%s3277] sm:$0xff]
      %v3279 = vld [vmem:[%s3277 + $0x8] sm:$0xf]
      %v3281 = vsel %vm1176, %v3279, 0
      %3283 = vmatprep.subr.mxu0 0.0
      %3284 = vmatpush1.msra.mxu0 %v3278
      %3285 = vmatprep.subr.mxu0 0.0
      %3286 = vmatpush1.msra.mxu0 %v3281
      %3287 = vmatprep.subr.mxu0 0.0
      %3288 = vmatpush1.msra.mxu0 0.0
      %3289 = vmatprep.subr.mxu0 0.0
      %3290 = vmatpush1.msra.mxu0 0.0
      %3291 = vmatprep.subr.mxu0 0.0
      %3292 = vmatpush1.msra.mxu0 0.0
      %3293 = vmatprep.subr.mxu0 0.0
      %3294 = vmatpush1.msra.mxu0 0.0
      %3295 = vmatprep.subr.mxu0 0.0
      %3296 = vmatpush1.msra.mxu0 0.0
      %3297 = vmatprep.subr.mxu0 0.0
      %3298 = vmatpush1.msra.mxu0 0.0
      %3299 = vmatprep.subr.mxu0 0.0
      %3300 = vmatpush1.msra.mxu0 0.0
      %3301 = vmatprep.subr.mxu0 0.0
      %3302 = vmatpush1.msra.mxu0 0.0
      %3303 = vmatprep.subr.mxu0 0.0
      %3304 = vmatpush1.msra.mxu0 0.0
      %3305 = vmatprep.subr.mxu0 0.0
      %3306 = vmatpush1.msra.mxu0 0.0
      %3307 = vmatprep.subr.mxu0 0.0
      %3308 = vmatpush1.msra.mxu0 0.0
      %3309 = vmatprep.subr.mxu0 0.0
      %3310 = vmatpush1.msra.mxu0 0.0
      %3311 = vmatprep.subr.mxu0 0.0
      %3312 = vmatpush1.msra.mxu0 0.0
      %3313 = vmatprep.subr.mxu0 0.0
      %3314 = vmatpush1.msra.mxu0 0.0
      %3315 = vmatprep.subr.mxu0 0.0
      %3316 = vmatpush1.msra.mxu0 0.0
      %3317 = vmatprep.subr.mxu0 0.0
      %3318 = vmatpush1.msra.mxu0 0.0
      %3319 = vmatprep.subr.mxu0 0.0
      %3320 = vmatpush1.msra.mxu0 0.0
      %3321 = vmatprep.subr.mxu0 0.0
      %3322 = vmatpush1.msra.mxu0 0.0
      %3323 = vmatprep.subr.mxu0 0.0
      %3324 = vmatpush1.msra.mxu0 0.0
      %3325 = vmatprep.subr.mxu0 0.0
      %3326 = vmatpush1.msra.mxu0 0.0
      %3327 = vmatprep.subr.mxu0 0.0
      %3328 = vmatpush1.msra.mxu0 0.0
      %3329 = vmatprep.subr.mxu0 0.0
      %3330 = vmatpush1.msra.mxu0 0.0
      %3331 = vmatprep.subr.mxu0 0.0
      %3332 = vmatpush1.msra.mxu0 0.0
      %3333 = vmatprep.subr.mxu0 0.0
      %3334 = vmatpush1.msra.mxu0 0.0
      %3335 = vmatprep.subr.mxu0 0.0
      %3336 = vmatpush1.msra.mxu0 0.0
      %3337 = vmatprep.subr.mxu0 0.0
      %3338 = vmatpush1.msra.mxu0 0.0
      %3339 = vmatprep.subr.mxu0 0.0
      %3340 = vmatpush1.msra.mxu0 0.0
      %3341 = vmatprep.subr.mxu0 0.0
      %3342 = vmatpush1.msra.mxu0 0.0
      %3343 = vmatprep.subr.mxu0 0.0
      %3344 = vmatpush1.msra.mxu0 0.0
      %3345 = vmatprep.subr.mxu0 0.0
      %3346 = vmatpush1.msra.mxu0 0.0
      %3347 = vmatprep.mubr.f32.mxu0 0.0
      %3348 = vmatmul.mubr.f32.gmra.mrb[0].mxu0 %v2637
      %v3349 = vpop.f32.mrb[0].mxu0
      %v3350 = vadd.f32 0.0, %v3349
      %v3351 = vpop.f32.mrb[0].mxu0
      %3352 = vmatprep.mubr.f32.mxu0 0.0
      %3353 = vmatmul.mubr.f32.gmra.mrb[0].mxu0 %v2640
      %v3354 = vpop.f32.mrb[0].mxu0
      %v3355 = vadd.f32 0.0, %v3354
      %v3356 = vpop.f32.mrb[0].mxu0
      %3357 = vmatprep.mubr.f32.mxu0 0.0
      %3358 = vmatmul.mubr.f32.gmra.mrb[0].mxu0 %v2643
      %v3359 = vpop.f32.mrb[0].mxu0
      %v3360 = vadd.f32 0.0, %v3359
      %v3361 = vpop.f32.mrb[0].mxu0
      %3362 = vmatprep.mubr.f32.mxu0 0.0
      %3363 = vmatmul.mubr.f32.gmra.mrb[0].mxu0 %v2646
      %v3364 = vpop.f32.mrb[0].mxu0
      %v3365 = vadd.f32 0.0, %v3364
      %v3366 = vpop.f32.mrb[0].mxu0
      %3367 = vmatprep.mubr.f32.mxu0 0.0
      %3368 = vmatmul.mubr.f32.gmra.mrb[0].mxu0 %v2649
      %v3369 = vpop.f32.mrb[0].mxu0
      %v3370 = vadd.f32 0.0, %v3369
      %v3371 = vpop.f32.mrb[0].mxu0
      %3372 = vmatprep.mubr.f32.mxu0 0.0
      %3373 = vmatmul.mubr.f32.gmra.mrb[0].mxu0 %v2652
      %v3374 = vpop.f32.mrb[0].mxu0
      %v3375 = vadd.f32 0.0, %v3374
      %v3376 = vpop.f32.mrb[0].mxu0
      %3377 = vmatprep.mubr.f32.mxu0 0.0
      %3378 = vmatmul.mubr.f32.gmra.mrb[0].mxu0 %v2655
      %v3379 = vpop.f32.mrb[0].mxu0
      %v3380 = vadd.f32 0.0, %v3379
      %v3381 = vpop.f32.mrb[0].mxu0
      %3382 = vmatprep.mubr.f32.mxu0 0.0
      %3383 = vmatmul.mubr.f32.gmra.mrb[0].mxu0 %v2658
      %v3384 = vpop.f32.mrb[0].mxu0
      %v3385 = vadd.f32 0.0, %v3384
      %v3386 = vpop.f32.mrb[0].mxu0
      %3387 = vmatprep.mubr.f32.mxu0 0.0
      %3388 = vmatmul.mubr.f32.gmra.mrb[0].mxu0 %v2661
      %v3389 = vpop.f32.mrb[0].mxu0
      %v3390 = vadd.f32 0.0, %v3389
      %v3391 = vpop.f32.mrb[0].mxu0
      %3392 = vmatprep.mubr.f32.mxu0 0.0
      %3393 = vmatmul.mubr.f32.gmra.mrb[0].mxu0 %v2664
      %v3394 = vpop.f32.mrb[0].mxu0
      %v3395 = vadd.f32 0.0, %v3394
      %v3396 = vpop.f32.mrb[0].mxu0
      %3397 = vmatprep.mubr.f32.mxu0 0.0
      %3398 = vmatmul.mubr.f32.gmra.mrb[0].mxu0 %v2667
      %v3399 = vpop.f32.mrb[0].mxu0
      %v3400 = vadd.f32 0.0, %v3399
      %v3401 = vpop.f32.mrb[0].mxu0
      %3402 = vmatprep.mubr.f32.mxu0 0.0
      %3403 = vmatmul.mubr.f32.gmra.mrb[0].mxu0 %v2670
      %v3404 = vpop.f32.mrb[0].mxu0
      %v3405 = vadd.f32 0.0, %v3404
      %v3406 = vpop.f32.mrb[0].mxu0
      %3407 = vmatprep.mubr.f32.mxu0 0.0
      %3408 = vmatmul.mubr.f32.gmra.mrb[0].mxu0 %v2673
      %v3409 = vpop.f32.mrb[0].mxu0
      %v3410 = vadd.f32 0.0, %v3409
      %v3411 = vpop.f32.mrb[0].mxu0
      %3412 = vmatprep.mubr.f32.mxu0 0.0
      %3413 = vmatmul.mubr.f32.gmra.mrb[0].mxu0 %v2676
      %v3414 = vpop.f32.mrb[0].mxu0
      %v3415 = vadd.f32 0.0, %v3414
      %v3416 = vpop.f32.mrb[0].mxu0
      %3417 = vmatprep.mubr.f32.mxu0 0.0
      %3418 = vmatmul.mubr.f32.gmra.mrb[0].mxu0 %v2679
      %v3419 = vpop.f32.mrb[0].mxu0
      %v3420 = vadd.f32 0.0, %v3419
      %v3421 = vpop.f32.mrb[0].mxu0
      %3422 = vmatprep.mubr.f32.mxu0 0.0
      %3423 = vmatmul.mubr.f32.gmra.mrb[0].mxu0 %v2682
      %v3424 = vpop.f32.mrb[0].mxu0
      %v3425 = vadd.f32 0.0, %v3424
      %v3426 = vpop.f32.mrb[0].mxu0
      %3427 = vmatprep.mubr.f32.mxu0 0.0
      %3428 = vmatmul.mubr.f32.gmra.mrb[0].mxu0 %v2685
      %v3429 = vpop.f32.mrb[0].mxu0
      %v3430 = vadd.f32 0.0, %v3429
      %v3431 = vpop.f32.mrb[0].mxu0
      %3432 = vmatprep.mubr.f32.mxu0 0.0
      %3433 = vmatmul.mubr.f32.gmra.mrb[0].mxu0 %v2688
      %v3434 = vpop.f32.mrb[0].mxu0
      %v3435 = vadd.f32 0.0, %v3434
      %v3436 = vpop.f32.mrb[0].mxu0
      %3437 = vmatprep.mubr.f32.mxu0 0.0
      %3438 = vmatmul.mubr.f32.gmra.mrb[0].mxu0 %v2691
      %v3439 = vpop.f32.mrb[0].mxu0
      %v3440 = vadd.f32 0.0, %v3439
      %v3441 = vpop.f32.mrb[0].mxu0
      %3442 = vmatprep.mubr.f32.mxu0 0.0
      %3443 = vmatmul.mubr.f32.gmra.mrb[0].mxu0 %v2694
      %v3444 = vpop.f32.mrb[0].mxu0
      %v3445 = vadd.f32 0.0, %v3444
      %v3446 = vpop.f32.mrb[0].mxu0
      %3447 = vmatprep.mubr.f32.mxu0 0.0
      %3448 = vmatmul.mubr.f32.gmra.mrb[0].mxu0 %v2697
      %v3449 = vpop.f32.mrb[0].mxu0
      %v3450 = vadd.f32 0.0, %v3449
      %v3451 = vpop.f32.mrb[0].mxu0
      %3452 = vmatprep.mubr.f32.mxu0 0.0
      %3453 = vmatmul.mubr.f32.gmra.mrb[0].mxu0 %v2700
      %v3454 = vpop.f32.mrb[0].mxu0
      %v3455 = vadd.f32 0.0, %v3454
      %v3456 = vpop.f32.mrb[0].mxu0
      %3457 = vmatprep.mubr.f32.mxu0 0.0
      %3458 = vmatmul.mubr.f32.gmra.mrb[0].mxu0 %v2703
      %v3459 = vpop.f32.mrb[0].mxu0
      %v3460 = vadd.f32 0.0, %v3459
      %v3461 = vpop.f32.mrb[0].mxu0
      %3462 = vmatprep.mubr.f32.mxu0 0.0
      %3463 = vmatmul.mubr.f32.gmra.mrb[0].mxu0 %v2706
      %v3464 = vpop.f32.mrb[0].mxu0
      %v3465 = vadd.f32 0.0, %v3464
      %v3466 = vpop.f32.mrb[0].mxu0
      %3467 = vmatprep.mubr.f32.mxu0 0.0
      %3468 = vmatmul.mubr.f32.gmra.mrb[0].mxu0 %v2709
      %v3469 = vpop.f32.mrb[0].mxu0
      %v3470 = vadd.f32 0.0, %v3469
      %v3471 = vpop.f32.mrb[0].mxu0
      %3472 = vmatprep.mubr.f32.mxu0 0.0
      %3473 = vmatmul.mubr.f32.gmra.mrb[0].mxu0 %v2712
      %v3474 = vpop.f32.mrb[0].mxu0
      %v3475 = vadd.f32 0.0, %v3474
      %v3476 = vpop.f32.mrb[0].mxu0
      %3477 = vmatprep.mubr.f32.mxu0 0.0
      %3478 = vmatmul.mubr.f32.gmra.mrb[0].mxu0 %v2715
      %v3479 = vpop.f32.mrb[0].mxu0
      %v3480 = vadd.f32 0.0, %v3479
      %v3481 = vpop.f32.mrb[0].mxu0
      %3482 = vmatprep.mubr.f32.mxu0 0.0
      %3483 = vmatmul.mubr.f32.gmra.mrb[0].mxu0 %v2718
      %v3484 = vpop.f32.mrb[0].mxu0
      %v3485 = vadd.f32 0.0, %v3484
      %v3486 = vpop.f32.mrb[0].mxu0
      %3487 = vmatprep.mubr.f32.mxu0 0.0
      %3488 = vmatmul.mubr.f32.gmra.mrb[0].mxu0 %v3012
      %v3489 = vpop.f32.mrb[0].mxu0
      %v3490 = vadd.f32 0.0, %v3489
      %v3491 = vpop.f32.mrb[0].mxu0
      %3492 = vmatprep.mubr.f32.mxu0 0.0
      %3493 = vmatmul.mubr.f32.gmra.mrb[0].mxu0 %v3015
      %v3494 = vpop.f32.mrb[0].mxu0
      %v3495 = vadd.f32 0.0, %v3494
      %v3496 = vpop.f32.mrb[0].mxu0
      %3497 = vmatprep.mubr.f32.mxu0 0.0
      %3498 = vmatmul.mubr.f32.gmra.mrb[0].mxu0 %v1406
      %v3499 = vpop.f32.mrb[0].mxu0
      %v3500 = vadd.f32 0.0, %v3499
      %v3501 = vpop.f32.mrb[0].mxu0
      %3502 = vmatprep.mubr.f32.mxu0 0.0
      %3503 = vmatmul.mubr.f32.gmra.mrb[0].mxu0 %v1406
      %v3504 = vpop.f32.mrb[0].mxu0
      %v3505 = vadd.f32 0.0, %v3504
      %v3506 = vpop.f32.mrb[0].mxu0
      %3507 = vdwg.mxu0
      %v3508 = vadd.f32 %v3245, %v3350
      %v3509 = vadd.f32 %v3246, %v3355
      %v3510 = vadd.f32 %v3247, %v3360
      %v3511 = vadd.f32 %v3248, %v3365
      %v3512 = vadd.f32 %v3249, %v3370
      %v3513 = vadd.f32 %v3250, %v3375
      %v3514 = vadd.f32 %v3251, %v3380
      %v3515 = vadd.f32 %v3252, %v3385
      %v3516 = vadd.f32 %v3253, %v3390
      %v3517 = vadd.f32 %v3254, %v3395
      %v3518 = vadd.f32 %v3255, %v3400
      %v3519 = vadd.f32 %v3256, %v3405
      %v3520 = vadd.f32 %v3257, %v3410
      %v3521 = vadd.f32 %v3258, %v3415
      %v3522 = vadd.f32 %v3259, %v3420
      %v3523 = vadd.f32 %v3260, %v3425
      %v3524 = vadd.f32 %v3261, %v3430
      %v3525 = vadd.f32 %v3262, %v3435
      %v3526 = vadd.f32 %v3263, %v3440
      %v3527 = vadd.f32 %v3264, %v3445
      %v3528 = vadd.f32 %v3265, %v3450
      %v3529 = vadd.f32 %v3266, %v3455
      %v3530 = vadd.f32 %v3267, %v3460
      %v3531 = vadd.f32 %v3268, %v3465
      %v3532 = vadd.f32 %v3269, %v3470
      %v3533 = vadd.f32 %v3270, %v3475
      %v3534 = vadd.f32 %v3271, %v3480
      %v3535 = vadd.f32 %v3272, %v3485
      %v3536 = vadd.f32 %v3273, %v3490
      %v3537 = vadd.f32 %v3274, %v3495
      %v3538 = vadd.f32 %v3275, %v3500
      %v3539 = vadd.f32 %v3276, %v3505
      %3540 = vst.msk [vmem:[%s305] sm:$0xff] %vm982, %v3508
      %3541 = vst.msk [vmem:[%s305 + $0x8] sm:$0xff] %vm982, %v3509
      %3542 = vst.msk [vmem:[%s305 + $0x10] sm:$0xff] %vm982, %v3510
      %3543 = vst.msk [vmem:[%s305 + $0x18] sm:$0xff] %vm982, %v3511
      %3544 = vst.msk [vmem:[%s305 + $0x20] sm:$0xff] %vm982, %v3512
      %3545 = vst.msk [vmem:[%s305 + $0x28] sm:$0xff] %vm982, %v3513
      %3546 = vst.msk [vmem:[%s305 + $0x30] sm:$0xff] %vm982, %v3514
      %3547 = vst.msk [vmem:[%s305 + $0x38] sm:$0xff] %vm982, %v3515
      %3548 = vst.msk [vmem:[%s305 + $0x40] sm:$0xff] %vm982, %v3516
      %3549 = vst.msk [vmem:[%s305 + $0x48] sm:$0xff] %vm982, %v3517
      %3550 = vst.msk [vmem:[%s305 + $0x50] sm:$0xff] %vm982, %v3518
      %3551 = vst.msk [vmem:[%s305 + $0x58] sm:$0xff] %vm982, %v3519
      %3552 = vst.msk [vmem:[%s305 + $0x60] sm:$0xff] %vm982, %v3520
      %3553 = vst.msk [vmem:[%s305 + $0x68] sm:$0xff] %vm982, %v3521
      %3554 = vst.msk [vmem:[%s305 + $0x70] sm:$0xff] %vm982, %v3522
      %3555 = vst.msk [vmem:[%s305 + $0x78] sm:$0xff] %vm982, %v3523
      %3556 = vst.msk [vmem:[%s305 + $0x80] sm:$0xff] %vm982, %v3524
      %3557 = vst.msk [vmem:[%s305 + $0x88] sm:$0xff] %vm982, %v3525
      %3558 = vst.msk [vmem:[%s305 + $0x90] sm:$0xff] %vm982, %v3526
      %3559 = vst.msk [vmem:[%s305 + $0x98] sm:$0xff] %vm982, %v3527
      %3560 = vst.msk [vmem:[%s305 + $0xa0] sm:$0xff] %vm982, %v3528
      %3561 = vst.msk [vmem:[%s305 + $0xa8] sm:$0xff] %vm982, %v3529
      %3562 = vst.msk [vmem:[%s305 + $0xb0] sm:$0xff] %vm982, %v3530
      %3563 = vst.msk [vmem:[%s305 + $0xb8] sm:$0xff] %vm982, %v3531
      %3564 = vst.msk [vmem:[%s305 + $0xc0] sm:$0xff] %vm982, %v3532
      %3565 = vst.msk [vmem:[%s305 + $0xc8] sm:$0xff] %vm982, %v3533
      %3566 = vst.msk [vmem:[%s305 + $0xd0] sm:$0xff] %vm982, %v3534
      %3567 = vst.msk [vmem:[%s305 + $0xd8] sm:$0xff] %vm982, %v3535
      %3568 = vst.msk [vmem:[%s305 + $0xe0] sm:$0xff] %vm982, %v3536
      %3569 = vst.msk [vmem:[%s305 + $0xe8] sm:$0xff] %vm982, %v3537
      %3570 = vst.msk [vmem:[%s305 + $0xf0] sm:$0xff] %vm982, %v3538
      %3571 = vst.msk [vmem:[%s305 + $0xf8] sm:$0xff] %vm982, %v3539
      %p3572 = scmp.lt.s32.totalorder %s19, 1
      %s3573 = scalar_select %p3572, %s19, 1
      %s3574 = smul.addr %s3573, 32
      %s3575 = smul.addr %s3574, 8
      %s3576 = scalar_lea.vmem %s8, %s3575
      // Predicated region
      $region53: #{tpu_custom_call.1} parent=51 // pred_check
        %p3577 = pneg %p210
      $region54: #{tpu_custom_call.1} parent=51 // pred_check_branch
        %3579 = sbr.rel (%p3577) target = $region56
      $region55: #{tpu_custom_call.1} parent=51 // pred_region
        _
      $region56: #{tpu_custom_call.1} parent=51 // pred_fallthru
        _
    $region52: #{tpu_custom_call.1} parent=5 // pred_fallthru
      _
    %p3580 = scmp.le.s32.totalorder 2, %s14
    // Predicated region
    $region57: #{tpu_custom_call.1} parent=5 // pred_check
      %p3581 = pneg %p3580
    $region58: #{tpu_custom_call.1} parent=5 // pred_check_branch
      %3583 = sbr.rel (%p3581) target = $region60
    $region59: #{tpu_custom_call.1} parent=5 // pred_region
      %s3584 = ssub.s32 %s14, 2
      // Predicated region
      $region61: #{tpu_custom_call.1} parent=59 // pred_check
        %p3585 = pneg %p216
      $region62: #{tpu_custom_call.1} parent=59 // pred_check_branch
        %3587 = sbr.rel (%p3585) target = $region64
      $region63: #{tpu_custom_call.1} parent=59 // pred_region
        %p3588 = scmp.lt.s32.totalorder %s20, 1
        %s3589 = scalar_select %p3588, %s20, 1
        %s3590 = smul.addr %s3589, 32
        %s3591 = smul.addr %s3590, 8
        %s3592 = scalar_lea.vmem %s8, %s3591
      $region64: #{tpu_custom_call.1} parent=59 // pred_fallthru
        _
    $region60: #{tpu_custom_call.1} parent=5 // pred_fallthru
      _
  $region6: #{tpu_custom_call.1} parent=0 // loop_footer
    %s18 = sadd.s32 1, %s14
  $region7: #{tpu_custom_call.1} parent=0 // loop_footer_branch
    %13 = sbr.rel target = $region3
  $region8: #{tpu_custom_call.1} parent=0 // loop_exit
    _

</llo_original>
